<compile_context>
chip_gen: v5e
topology: v5e:2x2
jax: 0.10.0
libtpu: 0.0.40
codegen_flags: <defaults>
</compile_context>

<pallas_src>
import jax
import jax.numpy as jnp
from jax.experimental import pallas as pl
from jax.experimental.pallas import tpu as pltpu


# Fixed conv config from the PyTorch module: Conv2d(3, 32, 3, stride=2, padding=1).
_KH = _KW = 3
_STRIDE = 2
_PAD = 1


def _round_up(x, m):
    return (x + m - 1) // m * m


def _conv_tanh_kernel(wa_ref, wb_ref, b_ref, ua_ref, ub_ref, o_ref):
    # wa_ref: (Cout, 2*3*Cin) bf16   wb_ref: (Cout, 3*Cin) bf16   b_ref: (Cout, 1) f32
    # ua_ref: (2*3*Cin, TM)  bf16    ub_ref: (3*Cin, TM)  bf16    o_ref: (Cout, TM) f32
    acc = jnp.dot(wa_ref[...], ua_ref[...], preferred_element_type=jnp.float32)
    acc = acc + jnp.dot(wb_ref[...], ub_ref[...], preferred_element_type=jnp.float32)
    acc = acc + b_ref[...]                         # (Cout, 1) broadcasts over lanes
    o_ref[...] = jnp.tanh(acc).astype(o_ref.dtype)


def _build_operands(img, oh, ow):
    """img: (Cin, H, W) f32 -> (ua (2*3*Cin, OH*OW), ub (3*Cin, OH*OW)) bf16.

    ua[i*3*Cin + j*Cin + ci, oy*OW + ox] = xpad[ci, 2*oy + i, 2*ox + j]  (i in {0,1})
    ub[          j*Cin + ci, oy*OW + ox] = xpad[ci, 2*oy + 2, 2*ox + j]
    """
    cin, h, w = img.shape
    hp = h + 2 * _PAD
    row_extra = hp % 2                              # make padded row count even
    xpb = jnp.pad(img.astype(jnp.bfloat16),
                  ((0, 0), (_PAD, _PAD + row_extra), (_PAD, _PAD)))
    # Column taps: colt[j, ci, r, b] = xpad[ci, r, 2*b + j]
    colt = jnp.stack([xpb[:, :, j:j + 2 * ow:2] for j in range(_KW)], axis=0)
    # Row-phase split: colt5[j, ci, a, rp, b] = xpad[ci, 2*a + rp, 2*b + j]
    colt5 = colt.reshape(_KW, cin, (hp + row_extra) // 2, 2, ow)
    # Kernel rows i in {0, 1}: K-order (i, j, ci), M flattened as oy*OW + ox.
    ua = colt5[:, :, :oh, :, :].transpose(3, 0, 1, 2, 4).reshape(2 * _KW * cin, oh * ow)
    # Kernel row i = 2: input row 2*oy + 2 -> a = oy + 1, rp = 0.
    ub = colt5[:, :, 1:oh + 1, 0, :].reshape(_KW * cin, oh * ow)
    return ua, ub


def conv2d_tanh(x_nchw, weight, bias):
    """Forward of ModelTanh: tanh(conv2d(x, weight, bias; k=3, s=2, p=1)).

    x_nchw: (N, Cin, H, W) f32; weight: (Cout, Cin, 3, 3) f32; bias: (Cout,) f32.
    Matmul operands run in bf16 with f32 accumulation; output is f32.
    """
    n, cin, h, w = x_nchw.shape
    cout = weight.shape[0]
    oh = (h + 2 * _PAD - _KH) // _STRIDE + 1
    ow = (w + 2 * _PAD - _KW) // _STRIDE + 1
    m = oh * ow

    ka = 2 * _KW * cin                               # K of matmul A (rows i = 0, 1)
    kb = _KW * cin                                   # K of matmul B (row  i = 2)
    wa = weight[:, :, 0:2, :].transpose(0, 2, 3, 1).reshape(cout, ka).astype(jnp.bfloat16)
    wb = weight[:, :, 2, :].transpose(0, 2, 1).reshape(cout, kb).astype(jnp.bfloat16)
    b_mat = bias.astype(jnp.float32).reshape(cout, 1)

    # Two large M tiles: low fixed per-step overhead, still >= 2 "parallel"
    # steps so v7x megacore can shard the M axis across both TensorCores.
    n_steps = 2
    tm = _round_up(-(-m // n_steps), 128)
    m_pad = n_steps * tm

    grid_call = pl.pallas_call(
        _conv_tanh_kernel,
        out_shape=jax.ShapeDtypeStruct((cout, m_pad), jnp.float32),
        grid=(n_steps,),
        in_specs=[
            pl.BlockSpec((cout, ka), lambda s: (0, 0)),   # wa   (resident)
            pl.BlockSpec((cout, kb), lambda s: (0, 0)),   # wb   (resident)
            pl.BlockSpec((cout, 1), lambda s: (0, 0)),    # bias (resident)
            pl.BlockSpec((ka, tm), lambda s: (0, s)),     # ua tile (pipelined)
            pl.BlockSpec((kb, tm), lambda s: (0, s)),     # ub tile (pipelined)
        ],
        out_specs=pl.BlockSpec((cout, tm), lambda s: (0, s)),
        compiler_params=pltpu.CompilerParams(
            dimension_semantics=("parallel",)),
        cost_estimate=pl.CostEstimate(
            flops=2 * m_pad * (ka + kb) * cout,
            transcendentals=m_pad * cout,
            bytes_accessed=(ka + kb) * m_pad * 2 + cout * (ka + kb) * 2
                           + cout * 4 + cout * m_pad * 4),
    )

    outs = []
    for bi in range(n):
        ua, ub = _build_operands(x_nchw[bi], oh, ow)
        if m_pad != m:
            ua = jnp.pad(ua, ((0, 0), (0, m_pad - m)))
            ub = jnp.pad(ub, ((0, 0), (0, m_pad - m)))
        out_flat = grid_call(wa, wb, b_mat, ua, ub)      # (Cout, Mpad) f32
        outs.append(out_flat[:, :m].reshape(cout, oh, ow))
    # N == 1: pure reshape -> (1, Cout, OH, OW); no NCHW transpose materialized.
    return outs[0][None] if n == 1 else jnp.stack(outs, axis=0)


if __name__ == "__main__":
    key = jax.random.PRNGKey(0)
    kx, kw_, kb_ = jax.random.split(key, 3)

    # Shapes from the module spec: x0 = torch.randn(1, 3, 128, 128).
    N, CIN, H, W = 1, 3, 128, 128
    COUT = 32

    x = jax.random.normal(kx, (N, CIN, H, W), dtype=jnp.float32)
    # Deterministic PyTorch-style uniform init.
    fan_in = CIN * _KH * _KW
    bound = 1.0 / (fan_in ** 0.5)
    weight = jax.random.uniform(kw_, (COUT, CIN, _KH, _KW), jnp.float32, -bound, bound)
    bias = jax.random.uniform(kb_, (COUT,), jnp.float32, -bound, bound)

    fwd = jax.jit(conv2d_tanh)
    out = jax.block_until_ready(fwd(x, weight, bias))
    assert out.shape == (N, COUT, H // 2, W // 2), out.shape

    # Reference: XLA conv + bias + tanh on bf16-quantized operands (the kernel
    # intentionally runs its matmuls in bf16 with f32 accumulation).
    xq = x.astype(jnp.bfloat16).astype(jnp.float32)
    wq = weight.astype(jnp.bfloat16).astype(jnp.float32)
    ref = jax.lax.conv_general_dilated(
        xq, wq, window_strides=(2, 2), padding=((1, 1), (1, 1)),
        dimension_numbers=("NCHW", "OIHW", "NCHW"))
    ref = jnp.tanh(ref + bias.reshape(1, COUT, 1, 1))
    err = float(jnp.max(jnp.abs(out - ref)))
    assert err < 2e-3, err

    print("KERNEL_OK")
</pallas_src>

<mosaic_0001>
module attributes {stable_mosaic.version = 11 : i64} {
  func.func @_conv_tanh_kernel(%arg0: i32, %arg1: memref<32x18xbf16, #tpu.memory_space<vmem>>, %arg2: memref<32x9xbf16, #tpu.memory_space<vmem>>, %arg3: memref<32x1xf32, #tpu.memory_space<vmem>>, %arg4: memref<18x2048xbf16, #tpu.memory_space<vmem>>, %arg5: memref<9x2048xbf16, #tpu.memory_space<vmem>>, %arg6: memref<32x2048xf32, #tpu.memory_space<vmem>>) attributes {dimension_semantics = [#tpu.dimension_semantics<parallel>], iteration_bounds = array<i64: 2>, scalar_prefetch = 0 : i64, scratch_operands = 0 : i64, tpu.core_type = #tpu.core_type<tc>, window_params = [{pipeline_mode = #tpu.pipeline_mode<synchronous>, transform_indices = @transform_0, window_bounds = array<i64: 32, 18>}, {pipeline_mode = #tpu.pipeline_mode<synchronous>, transform_indices = @transform_1, window_bounds = array<i64: 32, 9>}, {pipeline_mode = #tpu.pipeline_mode<synchronous>, transform_indices = @transform_2, window_bounds = array<i64: 32, 1>}, {transform_indices = @transform_3, window_bounds = array<i64: 18, 2048>}, {transform_indices = @transform_4, window_bounds = array<i64: 9, 2048>}, {transform_indices = @transform_5, window_bounds = array<i64: 32, 2048>}]} {
    %c0 = arith.constant 0 : index
    %c0_0 = arith.constant 0 : index
    %0 = vector.load %arg1[%c0, %c0_0] : memref<32x18xbf16, #tpu.memory_space<vmem>>, vector<32x18xbf16>
    %c0_1 = arith.constant 0 : index
    %c0_2 = arith.constant 0 : index
    %1 = vector.load %arg4[%c0_1, %c0_2] : memref<18x2048xbf16, #tpu.memory_space<vmem>>, vector<18x2048xbf16>
    %cst = arith.constant dense<0.000000e+00> : vector<32x2048xf32>
    %2 = tpu.matmul %0, %1, %cst {dimension_numbers = #tpu.dot_dimension_numbers<[1], [0], [0], [1], [0, 0, 1, 1], [], []>} : vector<32x18xbf16>, vector<18x2048xbf16>, vector<32x2048xf32> -> vector<32x2048xf32>
    %c0_3 = arith.constant 0 : index
    %c0_4 = arith.constant 0 : index
    %3 = vector.load %arg2[%c0_3, %c0_4] : memref<32x9xbf16, #tpu.memory_space<vmem>>, vector<32x9xbf16>
    %c0_5 = arith.constant 0 : index
    %c0_6 = arith.constant 0 : index
    %4 = vector.load %arg5[%c0_5, %c0_6] : memref<9x2048xbf16, #tpu.memory_space<vmem>>, vector<9x2048xbf16>
    %cst_7 = arith.constant dense<0.000000e+00> : vector<32x2048xf32>
    %5 = tpu.matmul %3, %4, %cst_7 {dimension_numbers = #tpu.dot_dimension_numbers<[1], [0], [0], [1], [0, 0, 1, 1], [], []>} : vector<32x9xbf16>, vector<9x2048xbf16>, vector<32x2048xf32> -> vector<32x2048xf32>
    %6 = arith.addf %2, %5 : vector<32x2048xf32>
    %c0_8 = arith.constant 0 : index
    %c0_9 = arith.constant 0 : index
    %7 = vector.load %arg3[%c0_8, %c0_9] : memref<32x1xf32, #tpu.memory_space<vmem>>, vector<32x1xf32>
    %8 = vector.broadcast %7 : vector<32x1xf32> to vector<32x2048xf32>
    %9 = arith.addf %6, %8 : vector<32x2048xf32>
    %10 = math.tanh %9 : vector<32x2048xf32>
    %c0_10 = arith.constant 0 : index
    %c0_11 = arith.constant 0 : index
    %11 = vector.load %arg6[%c0_10, %c0_11] : memref<32x2048xf32, #tpu.memory_space<vmem>>, vector<32x2048xf32>
    tpu.vector_store %arg6[%c0_10, %c0_11], %10 {strides = array<i32>} : memref<32x2048xf32, #tpu.memory_space<vmem>>, vector<32x2048xf32>,
    return
  }
  func.func @transform_0(%arg0: i32) -> (i32, i32) {
    %c0_i32 = arith.constant 0 : i32
    %c0_i32_0 = arith.constant 0 : i32
    %c0_i32_1 = arith.constant 0 : i32
    return %c0_i32, %c0_i32_0 : i32, i32
  }
  func.func @transform_1(%arg0: i32) -> (i32, i32) {
    %c0_i32 = arith.constant 0 : i32
    %c0_i32_0 = arith.constant 0 : i32
    %c0_i32_1 = arith.constant 0 : i32
    return %c0_i32, %c0_i32_0 : i32, i32
  }
  func.func @transform_2(%arg0: i32) -> (i32, i32) {
    %c0_i32 = arith.constant 0 : i32
    %c0_i32_0 = arith.constant 0 : i32
    %c0_i32_1 = arith.constant 0 : i32
    return %c0_i32, %c0_i32_0 : i32, i32
  }
  func.func @transform_3(%arg0: i32) -> (i32, i32) {
    %c0_i32 = arith.constant 0 : i32
    %c0_i32_0 = arith.constant 0 : i32
    return %c0_i32, %arg0 : i32, i32
  }
  func.func @transform_4(%arg0: i32) -> (i32, i32) {
    %c0_i32 = arith.constant 0 : i32
    %c0_i32_0 = arith.constant 0 : i32
    return %c0_i32, %arg0 : i32, i32
  }
  func.func @transform_5(%arg0: i32) -> (i32, i32) {
    %c0_i32 = arith.constant 0 : i32
    %c0_i32_0 = arith.constant 0 : i32
    return %c0_i32, %arg0 : i32, i32
  }
}

</mosaic_0001>

<llo_original>
// kernel: squeeze.5
$region0: #{squeeze.5}
  %s0 = inlined_call_operand.vmem [shape: bf16[3,3,64,64], index: 0, kind: input, shape index: {}]
  %s1 = inlined_call_operand.vmem [shape: bf16[9,4096], index: 1, kind: output, shape index: {}]
  $region1: #{squeeze.5} parent=0
    #allocation0 [shape = 'u8[262144]{0}', space=vmem, size = 0x40000, scoped, tag = 'scoped mem for output reshape']
    #allocation1 [shape = 'u8[294912]{0}', space=vmem, size = 0x48000, scoped, tag = 'scoped mem for input reshape']
    %s3 = ssub.s32 256, 1
    %s4 = scalar_lea.vmem %s0, 284
    %s5 = sshrl.u32 %s3, 1
    %s6 = sor.u32 %s3, %s5
    %s7 = sand.u32 %s6, 85
    %s8 = sshrl.u32 %s7, 1
    %s9 = sor.u32 %s7, %s8
    %s10 = sand.u32 51, %s9
    %s11 = sshrl.u32 %s10, 2
    %s12 = sor.u32 %s10, %s11
    %s13 = sand.u32 15, %s12
    %v14 = vld [vmem:[%s4] sm:%s13]
    %v15 = vunpack.c.l.bf16 %v14
    %v16 = vunpack.c.h.bf16 %v14
    %s17 = scalar_lea.vmem [#allocation1], 568
    %18 = vst [vmem:[%s17] sm:%s3] %v15
    %s19 = scalar_lea.vmem %s0, 280
    %s20 = sshrl.u32 %s3, 1
    %s21 = sor.u32 %s3, %s20
    %s22 = sand.u32 %s21, 85
    %s23 = sshrl.u32 %s22, 1
    %s24 = sor.u32 %s22, %s23
    %s25 = sand.u32 51, %s24
    %s26 = sshrl.u32 %s25, 2
    %s27 = sor.u32 %s25, %s26
    %s28 = sand.u32 15, %s27
    %v29 = vld [vmem:[%s19] sm:%s28]
    %v30 = vunpack.c.l.bf16 %v29
    %v31 = vunpack.c.h.bf16 %v29
    %s32 = scalar_lea.vmem [#allocation1], 560
    %33 = vst [vmem:[%s32] sm:%s3] %v30
    %s34 = scalar_lea.vmem %s0, 276
    %s35 = sshrl.u32 %s3, 1
    %s36 = sor.u32 %s3, %s35
    %s37 = sand.u32 %s36, 85
    %s38 = sshrl.u32 %s37, 1
    %s39 = sor.u32 %s37, %s38
    %s40 = sand.u32 51, %s39
    %s41 = sshrl.u32 %s40, 2
    %s42 = sor.u32 %s40, %s41
    %s43 = sand.u32 15, %s42
    %v44 = vld [vmem:[%s34] sm:%s43]
    %v45 = vunpack.c.l.bf16 %v44
    %v46 = vunpack.c.h.bf16 %v44
    %s47 = scalar_lea.vmem [#allocation1], 552
    %48 = vst [vmem:[%s47] sm:%s3] %v45
    %s49 = scalar_lea.vmem %s0, 272
    %s50 = sshrl.u32 %s3, 1
    %s51 = sor.u32 %s3, %s50
    %s52 = sand.u32 %s51, 85
    %s53 = sshrl.u32 %s52, 1
    %s54 = sor.u32 %s52, %s53
    %s55 = sand.u32 51, %s54
    %s56 = sshrl.u32 %s55, 2
    %s57 = sor.u32 %s55, %s56
    %s58 = sand.u32 15, %s57
    %v59 = vld [vmem:[%s49] sm:%s58]
    %v60 = vunpack.c.l.bf16 %v59
    %v61 = vunpack.c.h.bf16 %v59
    %s62 = scalar_lea.vmem [#allocation1], 544
    %63 = vst [vmem:[%s62] sm:%s3] %v60
    %s64 = scalar_lea.vmem %s0, 268
    %s65 = sshrl.u32 %s3, 1
    %s66 = sor.u32 %s3, %s65
    %s67 = sand.u32 %s66, 85
    %s68 = sshrl.u32 %s67, 1
    %s69 = sor.u32 %s67, %s68
    %s70 = sand.u32 51, %s69
    %s71 = sshrl.u32 %s70, 2
    %s72 = sor.u32 %s70, %s71
    %s73 = sand.u32 15, %s72
    %v74 = vld [vmem:[%s64] sm:%s73]
    %v75 = vunpack.c.l.bf16 %v74
    %v76 = vunpack.c.h.bf16 %v74
    %s77 = scalar_lea.vmem [#allocation1], 536
    %78 = vst [vmem:[%s77] sm:%s3] %v75
    %s79 = scalar_lea.vmem %s0, 264
    %s80 = sshrl.u32 %s3, 1
    %s81 = sor.u32 %s3, %s80
    %s82 = sand.u32 %s81, 85
    %s83 = sshrl.u32 %s82, 1
    %s84 = sor.u32 %s82, %s83
    %s85 = sand.u32 51, %s84
    %s86 = sshrl.u32 %s85, 2
    %s87 = sor.u32 %s85, %s86
    %s88 = sand.u32 15, %s87
    %v89 = vld [vmem:[%s79] sm:%s88]
    %v90 = vunpack.c.l.bf16 %v89
    %v91 = vunpack.c.h.bf16 %v89
    %s92 = scalar_lea.vmem [#allocation1], 528
    %93 = vst [vmem:[%s92] sm:%s3] %v90
    %s94 = scalar_lea.vmem %s0, 260
    %s95 = sshrl.u32 %s3, 1
    %s96 = sor.u32 %s3, %s95
    %s97 = sand.u32 %s96, 85
    %s98 = sshrl.u32 %s97, 1
    %s99 = sor.u32 %s97, %s98
    %s100 = sand.u32 51, %s99
    %s101 = sshrl.u32 %s100, 2
    %s102 = sor.u32 %s100, %s101
    %s103 = sand.u32 15, %s102
    %v104 = vld [vmem:[%s94] sm:%s103]
    %v105 = vunpack.c.l.bf16 %v104
    %v106 = vunpack.c.h.bf16 %v104
    %s107 = scalar_lea.vmem [#allocation1], 520
    %108 = vst [vmem:[%s107] sm:%s3] %v105
    %s109 = scalar_lea.vmem %s0, 256
    %s110 = sshrl.u32 %s3, 1
    %s111 = sor.u32 %s3, %s110
    %s112 = sand.u32 %s111, 85
    %s113 = sshrl.u32 %s112, 1
    %s114 = sor.u32 %s112, %s113
    %s115 = sand.u32 51, %s114
    %s116 = sshrl.u32 %s115, 2
    %s117 = sor.u32 %s115, %s116
    %s118 = sand.u32 15, %s117
    %v119 = vld [vmem:[%s109] sm:%s118]
    %v120 = vunpack.c.l.bf16 %v119
    %v121 = vunpack.c.h.bf16 %v119
    %s122 = scalar_lea.vmem [#allocation1], 512
    %123 = vst [vmem:[%s122] sm:%s3] %v120
    %s124 = scalar_lea.vmem %s0, 252
    %s125 = sshrl.u32 %s3, 1
    %s126 = sor.u32 %s3, %s125
    %s127 = sand.u32 %s126, 85
    %s128 = sshrl.u32 %s127, 1
    %s129 = sor.u32 %s127, %s128
    %s130 = sand.u32 51, %s129
    %s131 = sshrl.u32 %s130, 2
    %s132 = sor.u32 %s130, %s131
    %s133 = sand.u32 15, %s132
    %v134 = vld [vmem:[%s124] sm:%s133]
    %v135 = vunpack.c.l.bf16 %v134
    %v136 = vunpack.c.h.bf16 %v134
    %s137 = scalar_lea.vmem [#allocation1], 504
    %138 = vst [vmem:[%s137] sm:%s3] %v135
    %s139 = scalar_lea.vmem %s0, 248
    %s140 = sshrl.u32 %s3, 1
    %s141 = sor.u32 %s3, %s140
    %s142 = sand.u32 %s141, 85
    %s143 = sshrl.u32 %s142, 1
    %s144 = sor.u32 %s142, %s143
    %s145 = sand.u32 51, %s144
    %s146 = sshrl.u32 %s145, 2
    %s147 = sor.u32 %s145, %s146
    %s148 = sand.u32 15, %s147
    %v149 = vld [vmem:[%s139] sm:%s148]
    %v150 = vunpack.c.l.bf16 %v149
    %v151 = vunpack.c.h.bf16 %v149
    %s152 = scalar_lea.vmem [#allocation1], 496
    %153 = vst [vmem:[%s152] sm:%s3] %v150
    %s154 = scalar_lea.vmem %s0, 244
    %s155 = sshrl.u32 %s3, 1
    %s156 = sor.u32 %s3, %s155
    %s157 = sand.u32 %s156, 85
    %s158 = sshrl.u32 %s157, 1
    %s159 = sor.u32 %s157, %s158
    %s160 = sand.u32 51, %s159
    %s161 = sshrl.u32 %s160, 2
    %s162 = sor.u32 %s160, %s161
    %s163 = sand.u32 15, %s162
    %v164 = vld [vmem:[%s154] sm:%s163]
    %v165 = vunpack.c.l.bf16 %v164
    %v166 = vunpack.c.h.bf16 %v164
    %s167 = scalar_lea.vmem [#allocation1], 488
    %168 = vst [vmem:[%s167] sm:%s3] %v165
    %s169 = scalar_lea.vmem %s0, 240
    %s170 = sshrl.u32 %s3, 1
    %s171 = sor.u32 %s3, %s170
    %s172 = sand.u32 %s171, 85
    %s173 = sshrl.u32 %s172, 1
    %s174 = sor.u32 %s172, %s173
    %s175 = sand.u32 51, %s174
    %s176 = sshrl.u32 %s175, 2
    %s177 = sor.u32 %s175, %s176
    %s178 = sand.u32 15, %s177
    %v179 = vld [vmem:[%s169] sm:%s178]
    %v180 = vunpack.c.l.bf16 %v179
    %v181 = vunpack.c.h.bf16 %v179
    %s182 = scalar_lea.vmem [#allocation1], 480
    %183 = vst [vmem:[%s182] sm:%s3] %v180
    %s184 = scalar_lea.vmem %s0, 236
    %s185 = sshrl.u32 %s3, 1
    %s186 = sor.u32 %s3, %s185
    %s187 = sand.u32 %s186, 85
    %s188 = sshrl.u32 %s187, 1
    %s189 = sor.u32 %s187, %s188
    %s190 = sand.u32 51, %s189
    %s191 = sshrl.u32 %s190, 2
    %s192 = sor.u32 %s190, %s191
    %s193 = sand.u32 15, %s192
    %v194 = vld [vmem:[%s184] sm:%s193]
    %v195 = vunpack.c.l.bf16 %v194
    %v196 = vunpack.c.h.bf16 %v194
    %s197 = scalar_lea.vmem [#allocation1], 472
    %198 = vst [vmem:[%s197] sm:%s3] %v195
    %s199 = scalar_lea.vmem %s0, 232
    %s200 = sshrl.u32 %s3, 1
    %s201 = sor.u32 %s3, %s200
    %s202 = sand.u32 %s201, 85
    %s203 = sshrl.u32 %s202, 1
    %s204 = sor.u32 %s202, %s203
    %s205 = sand.u32 51, %s204
    %s206 = sshrl.u32 %s205, 2
    %s207 = sor.u32 %s205, %s206
    %s208 = sand.u32 15, %s207
    %v209 = vld [vmem:[%s199] sm:%s208]
    %v210 = vunpack.c.l.bf16 %v209
    %v211 = vunpack.c.h.bf16 %v209
    %s212 = scalar_lea.vmem [#allocation1], 464
    %213 = vst [vmem:[%s212] sm:%s3] %v210
    %s214 = scalar_lea.vmem %s0, 228
    %s215 = sshrl.u32 %s3, 1
    %s216 = sor.u32 %s3, %s215
    %s217 = sand.u32 %s216, 85
    %s218 = sshrl.u32 %s217, 1
    %s219 = sor.u32 %s217, %s218
    %s220 = sand.u32 51, %s219
    %s221 = sshrl.u32 %s220, 2
    %s222 = sor.u32 %s220, %s221
    %s223 = sand.u32 15, %s222
    %v224 = vld [vmem:[%s214] sm:%s223]
    %v225 = vunpack.c.l.bf16 %v224
    %v226 = vunpack.c.h.bf16 %v224
    %s227 = scalar_lea.vmem [#allocation1], 456
    %228 = vst [vmem:[%s227] sm:%s3] %v225
    %s229 = scalar_lea.vmem %s0, 224
    %s230 = sshrl.u32 %s3, 1
    %s231 = sor.u32 %s3, %s230
    %s232 = sand.u32 %s231, 85
    %s233 = sshrl.u32 %s232, 1
    %s234 = sor.u32 %s232, %s233
    %s235 = sand.u32 51, %s234
    %s236 = sshrl.u32 %s235, 2
    %s237 = sor.u32 %s235, %s236
    %s238 = sand.u32 15, %s237
    %v239 = vld [vmem:[%s229] sm:%s238]
    %v240 = vunpack.c.l.bf16 %v239
    %v241 = vunpack.c.h.bf16 %v239
    %s242 = scalar_lea.vmem [#allocation1], 448
    %243 = vst [vmem:[%s242] sm:%s3] %v240
    %s244 = scalar_lea.vmem %s0, 220
    %s245 = sshrl.u32 %s3, 1
    %s246 = sor.u32 %s3, %s245
    %s247 = sand.u32 %s246, 85
    %s248 = sshrl.u32 %s247, 1
    %s249 = sor.u32 %s247, %s248
    %s250 = sand.u32 51, %s249
    %s251 = sshrl.u32 %s250, 2
    %s252 = sor.u32 %s250, %s251
    %s253 = sand.u32 15, %s252
    %v254 = vld [vmem:[%s244] sm:%s253]
    %v255 = vunpack.c.l.bf16 %v254
    %v256 = vunpack.c.h.bf16 %v254
    %s257 = scalar_lea.vmem [#allocation1], 440
    %258 = vst [vmem:[%s257] sm:%s3] %v255
    %s259 = scalar_lea.vmem %s0, 216
    %s260 = sshrl.u32 %s3, 1
    %s261 = sor.u32 %s3, %s260
    %s262 = sand.u32 %s261, 85
    %s263 = sshrl.u32 %s262, 1
    %s264 = sor.u32 %s262, %s263
    %s265 = sand.u32 51, %s264
    %s266 = sshrl.u32 %s265, 2
    %s267 = sor.u32 %s265, %s266
    %s268 = sand.u32 15, %s267
    %v269 = vld [vmem:[%s259] sm:%s268]
    %v270 = vunpack.c.l.bf16 %v269
    %v271 = vunpack.c.h.bf16 %v269
    %s272 = scalar_lea.vmem [#allocation1], 432
    %273 = vst [vmem:[%s272] sm:%s3] %v270
    %s274 = scalar_lea.vmem %s0, 212
    %s275 = sshrl.u32 %s3, 1
    %s276 = sor.u32 %s3, %s275
    %s277 = sand.u32 %s276, 85
    %s278 = sshrl.u32 %s277, 1
    %s279 = sor.u32 %s277, %s278
    %s280 = sand.u32 51, %s279
    %s281 = sshrl.u32 %s280, 2
    %s282 = sor.u32 %s280, %s281
    %s283 = sand.u32 15, %s282
    %v284 = vld [vmem:[%s274] sm:%s283]
    %v285 = vunpack.c.l.bf16 %v284
    %v286 = vunpack.c.h.bf16 %v284
    %s287 = scalar_lea.vmem [#allocation1], 424
    %288 = vst [vmem:[%s287] sm:%s3] %v285
    %s289 = scalar_lea.vmem %s0, 208
    %s290 = sshrl.u32 %s3, 1
    %s291 = sor.u32 %s3, %s290
    %s292 = sand.u32 %s291, 85
    %s293 = sshrl.u32 %s292, 1
    %s294 = sor.u32 %s292, %s293
    %s295 = sand.u32 51, %s294
    %s296 = sshrl.u32 %s295, 2
    %s297 = sor.u32 %s295, %s296
    %s298 = sand.u32 15, %s297
    %v299 = vld [vmem:[%s289] sm:%s298]
    %v300 = vunpack.c.l.bf16 %v299
    %v301 = vunpack.c.h.bf16 %v299
    %s302 = scalar_lea.vmem [#allocation1], 416
    %303 = vst [vmem:[%s302] sm:%s3] %v300
    %s304 = scalar_lea.vmem %s0, 204
    %s305 = sshrl.u32 %s3, 1
    %s306 = sor.u32 %s3, %s305
    %s307 = sand.u32 %s306, 85
    %s308 = sshrl.u32 %s307, 1
    %s309 = sor.u32 %s307, %s308
    %s310 = sand.u32 51, %s309
    %s311 = sshrl.u32 %s310, 2
    %s312 = sor.u32 %s310, %s311
    %s313 = sand.u32 15, %s312
    %v314 = vld [vmem:[%s304] sm:%s313]
    %v315 = vunpack.c.l.bf16 %v314
    %v316 = vunpack.c.h.bf16 %v314
    %s317 = scalar_lea.vmem [#allocation1], 408
    %318 = vst [vmem:[%s317] sm:%s3] %v315
    %s319 = scalar_lea.vmem %s0, 200
    %s320 = sshrl.u32 %s3, 1
    %s321 = sor.u32 %s3, %s320
    %s322 = sand.u32 %s321, 85
    %s323 = sshrl.u32 %s322, 1
    %s324 = sor.u32 %s322, %s323
    %s325 = sand.u32 51, %s324
    %s326 = sshrl.u32 %s325, 2
    %s327 = sor.u32 %s325, %s326
    %s328 = sand.u32 15, %s327
    %v329 = vld [vmem:[%s319] sm:%s328]
    %v330 = vunpack.c.l.bf16 %v329
    %v331 = vunpack.c.h.bf16 %v329
    %s332 = scalar_lea.vmem [#allocation1], 400
    %333 = vst [vmem:[%s332] sm:%s3] %v330
    %s334 = scalar_lea.vmem %s0, 196
    %s335 = sshrl.u32 %s3, 1
    %s336 = sor.u32 %s3, %s335
    %s337 = sand.u32 %s336, 85
    %s338 = sshrl.u32 %s337, 1
    %s339 = sor.u32 %s337, %s338
    %s340 = sand.u32 51, %s339
    %s341 = sshrl.u32 %s340, 2
    %s342 = sor.u32 %s340, %s341
    %s343 = sand.u32 15, %s342
    %v344 = vld [vmem:[%s334] sm:%s343]
    %v345 = vunpack.c.l.bf16 %v344
    %v346 = vunpack.c.h.bf16 %v344
    %s347 = scalar_lea.vmem [#allocation1], 392
    %348 = vst [vmem:[%s347] sm:%s3] %v345
    %s349 = scalar_lea.vmem %s0, 192
    %s350 = sshrl.u32 %s3, 1
    %s351 = sor.u32 %s3, %s350
    %s352 = sand.u32 %s351, 85
    %s353 = sshrl.u32 %s352, 1
    %s354 = sor.u32 %s352, %s353
    %s355 = sand.u32 51, %s354
    %s356 = sshrl.u32 %s355, 2
    %s357 = sor.u32 %s355, %s356
    %s358 = sand.u32 15, %s357
    %v359 = vld [vmem:[%s349] sm:%s358]
    %v360 = vunpack.c.l.bf16 %v359
    %v361 = vunpack.c.h.bf16 %v359
    %s362 = scalar_lea.vmem [#allocation1], 384
    %363 = vst [vmem:[%s362] sm:%s3] %v360
    %s364 = scalar_lea.vmem %s0, 188
    %s365 = sshrl.u32 %s3, 1
    %s366 = sor.u32 %s3, %s365
    %s367 = sand.u32 %s366, 85
    %s368 = sshrl.u32 %s367, 1
    %s369 = sor.u32 %s367, %s368
    %s370 = sand.u32 51, %s369
    %s371 = sshrl.u32 %s370, 2
    %s372 = sor.u32 %s370, %s371
    %s373 = sand.u32 15, %s372
    %v374 = vld [vmem:[%s364] sm:%s373]
    %v375 = vunpack.c.l.bf16 %v374
    %v376 = vunpack.c.h.bf16 %v374
    %s377 = scalar_lea.vmem [#allocation1], 376
    %378 = vst [vmem:[%s377] sm:%s3] %v375
    %s379 = scalar_lea.vmem %s0, 184
    %s380 = sshrl.u32 %s3, 1
    %s381 = sor.u32 %s3, %s380
    %s382 = sand.u32 %s381, 85
    %s383 = sshrl.u32 %s382, 1
    %s384 = sor.u32 %s382, %s383
    %s385 = sand.u32 51, %s384
    %s386 = sshrl.u32 %s385, 2
    %s387 = sor.u32 %s385, %s386
    %s388 = sand.u32 15, %s387
    %v389 = vld [vmem:[%s379] sm:%s388]
    %v390 = vunpack.c.l.bf16 %v389
    %v391 = vunpack.c.h.bf16 %v389
    %s392 = scalar_lea.vmem [#allocation1], 368
    %393 = vst [vmem:[%s392] sm:%s3] %v390
    %s394 = scalar_lea.vmem %s0, 180
    %s395 = sshrl.u32 %s3, 1
    %s396 = sor.u32 %s3, %s395
    %s397 = sand.u32 %s396, 85
    %s398 = sshrl.u32 %s397, 1
    %s399 = sor.u32 %s397, %s398
    %s400 = sand.u32 51, %s399
    %s401 = sshrl.u32 %s400, 2
    %s402 = sor.u32 %s400, %s401
    %s403 = sand.u32 15, %s402
    %v404 = vld [vmem:[%s394] sm:%s403]
    %v405 = vunpack.c.l.bf16 %v404
    %v406 = vunpack.c.h.bf16 %v404
    %s407 = scalar_lea.vmem [#allocation1], 360
    %408 = vst [vmem:[%s407] sm:%s3] %v405
    %s409 = scalar_lea.vmem %s0, 176
    %s410 = sshrl.u32 %s3, 1
    %s411 = sor.u32 %s3, %s410
    %s412 = sand.u32 %s411, 85
    %s413 = sshrl.u32 %s412, 1
    %s414 = sor.u32 %s412, %s413
    %s415 = sand.u32 51, %s414
    %s416 = sshrl.u32 %s415, 2
    %s417 = sor.u32 %s415, %s416
    %s418 = sand.u32 15, %s417
    %v419 = vld [vmem:[%s409] sm:%s418]
    %v420 = vunpack.c.l.bf16 %v419
    %v421 = vunpack.c.h.bf16 %v419
    %s422 = scalar_lea.vmem [#allocation1], 352
    %423 = vst [vmem:[%s422] sm:%s3] %v420
    %s424 = scalar_lea.vmem %s0, 172
    %s425 = sshrl.u32 %s3, 1
    %s426 = sor.u32 %s3, %s425
    %s427 = sand.u32 %s426, 85
    %s428 = sshrl.u32 %s427, 1
    %s429 = sor.u32 %s427, %s428
    %s430 = sand.u32 51, %s429
    %s431 = sshrl.u32 %s430, 2
    %s432 = sor.u32 %s430, %s431
    %s433 = sand.u32 15, %s432
    %v434 = vld [vmem:[%s424] sm:%s433]
    %v435 = vunpack.c.l.bf16 %v434
    %v436 = vunpack.c.h.bf16 %v434
    %s437 = scalar_lea.vmem [#allocation1], 344
    %438 = vst [vmem:[%s437] sm:%s3] %v435
    %s439 = scalar_lea.vmem %s0, 168
    %s440 = sshrl.u32 %s3, 1
    %s441 = sor.u32 %s3, %s440
    %s442 = sand.u32 %s441, 85
    %s443 = sshrl.u32 %s442, 1
    %s444 = sor.u32 %s442, %s443
    %s445 = sand.u32 51, %s444
    %s446 = sshrl.u32 %s445, 2
    %s447 = sor.u32 %s445, %s446
    %s448 = sand.u32 15, %s447
    %v449 = vld [vmem:[%s439] sm:%s448]
    %v450 = vunpack.c.l.bf16 %v449
    %v451 = vunpack.c.h.bf16 %v449
    %s452 = scalar_lea.vmem [#allocation1], 336
    %453 = vst [vmem:[%s452] sm:%s3] %v450
    %s454 = scalar_lea.vmem %s0, 164
    %s455 = sshrl.u32 %s3, 1
    %s456 = sor.u32 %s3, %s455
    %s457 = sand.u32 %s456, 85
    %s458 = sshrl.u32 %s457, 1
    %s459 = sor.u32 %s457, %s458
    %s460 = sand.u32 51, %s459
    %s461 = sshrl.u32 %s460, 2
    %s462 = sor.u32 %s460, %s461
    %s463 = sand.u32 15, %s462
    %v464 = vld [vmem:[%s454] sm:%s463]
    %v465 = vunpack.c.l.bf16 %v464
    %v466 = vunpack.c.h.bf16 %v464
    %s467 = scalar_lea.vmem [#allocation1], 328
    %468 = vst [vmem:[%s467] sm:%s3] %v465
    %s469 = scalar_lea.vmem %s0, 160
    %s470 = sshrl.u32 %s3, 1
    %s471 = sor.u32 %s3, %s470
    %s472 = sand.u32 %s471, 85
    %s473 = sshrl.u32 %s472, 1
    %s474 = sor.u32 %s472, %s473
    %s475 = sand.u32 51, %s474
    %s476 = sshrl.u32 %s475, 2
    %s477 = sor.u32 %s475, %s476
    %s478 = sand.u32 15, %s477
    %v479 = vld [vmem:[%s469] sm:%s478]
    %v480 = vunpack.c.l.bf16 %v479
    %v481 = vunpack.c.h.bf16 %v479
    %s482 = scalar_lea.vmem [#allocation1], 320
    %483 = vst [vmem:[%s482] sm:%s3] %v480
    %s484 = scalar_lea.vmem %s0, 156
    %s485 = sshrl.u32 %s3, 1
    %s486 = sor.u32 %s3, %s485
    %s487 = sand.u32 %s486, 85
    %s488 = sshrl.u32 %s487, 1
    %s489 = sor.u32 %s487, %s488
    %s490 = sand.u32 51, %s489
    %s491 = sshrl.u32 %s490, 2
    %s492 = sor.u32 %s490, %s491
    %s493 = sand.u32 15, %s492
    %v494 = vld [vmem:[%s484] sm:%s493]
    %v495 = vunpack.c.l.bf16 %v494
    %v496 = vunpack.c.h.bf16 %v494
    %s497 = scalar_lea.vmem [#allocation1], 312
    %498 = vst [vmem:[%s497] sm:%s3] %v495
    %s499 = scalar_lea.vmem %s0, 152
    %s500 = sshrl.u32 %s3, 1
    %s501 = sor.u32 %s3, %s500
    %s502 = sand.u32 %s501, 85
    %s503 = sshrl.u32 %s502, 1
    %s504 = sor.u32 %s502, %s503
    %s505 = sand.u32 51, %s504
    %s506 = sshrl.u32 %s505, 2
    %s507 = sor.u32 %s505, %s506
    %s508 = sand.u32 15, %s507
    %v509 = vld [vmem:[%s499] sm:%s508]
    %v510 = vunpack.c.l.bf16 %v509
    %v511 = vunpack.c.h.bf16 %v509
    %s512 = scalar_lea.vmem [#allocation1], 304
    %513 = vst [vmem:[%s512] sm:%s3] %v510
    %s514 = scalar_lea.vmem %s0, 148
    %s515 = sshrl.u32 %s3, 1
    %s516 = sor.u32 %s3, %s515
    %s517 = sand.u32 %s516, 85
    %s518 = sshrl.u32 %s517, 1
    %s519 = sor.u32 %s517, %s518
    %s520 = sand.u32 51, %s519
    %s521 = sshrl.u32 %s520, 2
    %s522 = sor.u32 %s520, %s521
    %s523 = sand.u32 15, %s522
    %v524 = vld [vmem:[%s514] sm:%s523]
    %v525 = vunpack.c.l.bf16 %v524
    %v526 = vunpack.c.h.bf16 %v524
    %s527 = scalar_lea.vmem [#allocation1], 296
    %528 = vst [vmem:[%s527] sm:%s3] %v525
    %s529 = scalar_lea.vmem %s0, 144
    %s530 = sshrl.u32 %s3, 1
    %s531 = sor.u32 %s3, %s530
    %s532 = sand.u32 %s531, 85
    %s533 = sshrl.u32 %s532, 1
    %s534 = sor.u32 %s532, %s533
    %s535 = sand.u32 51, %s534
    %s536 = sshrl.u32 %s535, 2
    %s537 = sor.u32 %s535, %s536
    %s538 = sand.u32 15, %s537
    %v539 = vld [vmem:[%s529] sm:%s538]
    %v540 = vunpack.c.l.bf16 %v539
    %v541 = vunpack.c.h.bf16 %v539
    %s542 = scalar_lea.vmem [#allocation1], 288
    %543 = vst [vmem:[%s542] sm:%s3] %v540
    %s544 = scalar_lea.vmem %s0, 140
    %s545 = sshrl.u32 %s3, 1
    %s546 = sor.u32 %s3, %s545
    %s547 = sand.u32 %s546, 85
    %s548 = sshrl.u32 %s547, 1
    %s549 = sor.u32 %s547, %s548
    %s550 = sand.u32 51, %s549
    %s551 = sshrl.u32 %s550, 2
    %s552 = sor.u32 %s550, %s551
    %s553 = sand.u32 15, %s552
    %v554 = vld [vmem:[%s544] sm:%s553]
    %v555 = vunpack.c.l.bf16 %v554
    %v556 = vunpack.c.h.bf16 %v554
    %s557 = scalar_lea.vmem [#allocation1], 280
    %558 = vst [vmem:[%s557] sm:%s3] %v555
    %s559 = scalar_lea.vmem %s0, 136
    %s560 = sshrl.u32 %s3, 1
    %s561 = sor.u32 %s3, %s560
    %s562 = sand.u32 %s561, 85
    %s563 = sshrl.u32 %s562, 1
    %s564 = sor.u32 %s562, %s563
    %s565 = sand.u32 51, %s564
    %s566 = sshrl.u32 %s565, 2
    %s567 = sor.u32 %s565, %s566
    %s568 = sand.u32 15, %s567
    %v569 = vld [vmem:[%s559] sm:%s568]
    %v570 = vunpack.c.l.bf16 %v569
    %v571 = vunpack.c.h.bf16 %v569
    %s572 = scalar_lea.vmem [#allocation1], 272
    %573 = vst [vmem:[%s572] sm:%s3] %v570
    %s574 = scalar_lea.vmem %s0, 132
    %s575 = sshrl.u32 %s3, 1
    %s576 = sor.u32 %s3, %s575
    %s577 = sand.u32 %s576, 85
    %s578 = sshrl.u32 %s577, 1
    %s579 = sor.u32 %s577, %s578
    %s580 = sand.u32 51, %s579
    %s581 = sshrl.u32 %s580, 2
    %s582 = sor.u32 %s580, %s581
    %s583 = sand.u32 15, %s582
    %v584 = vld [vmem:[%s574] sm:%s583]
    %v585 = vunpack.c.l.bf16 %v584
    %v586 = vunpack.c.h.bf16 %v584
    %s587 = scalar_lea.vmem [#allocation1], 264
    %588 = vst [vmem:[%s587] sm:%s3] %v585
    %s589 = scalar_lea.vmem %s0, 128
    %s590 = sshrl.u32 %s3, 1
    %s591 = sor.u32 %s3, %s590
    %s592 = sand.u32 %s591, 85
    %s593 = sshrl.u32 %s592, 1
    %s594 = sor.u32 %s592, %s593
    %s595 = sand.u32 51, %s594
    %s596 = sshrl.u32 %s595, 2
    %s597 = sor.u32 %s595, %s596
    %s598 = sand.u32 15, %s597
    %v599 = vld [vmem:[%s589] sm:%s598]
    %v600 = vunpack.c.l.bf16 %v599
    %v601 = vunpack.c.h.bf16 %v599
    %s602 = scalar_lea.vmem [#allocation1], 256
    %603 = vst [vmem:[%s602] sm:%s3] %v600
    %s604 = scalar_lea.vmem %s0, 124
    %s605 = sshrl.u32 %s3, 1
    %s606 = sor.u32 %s3, %s605
    %s607 = sand.u32 %s606, 85
    %s608 = sshrl.u32 %s607, 1
    %s609 = sor.u32 %s607, %s608
    %s610 = sand.u32 51, %s609
    %s611 = sshrl.u32 %s610, 2
    %s612 = sor.u32 %s610, %s611
    %s613 = sand.u32 15, %s612
    %v614 = vld [vmem:[%s604] sm:%s613]
    %v615 = vunpack.c.l.bf16 %v614
    %v616 = vunpack.c.h.bf16 %v614
    %s617 = scalar_lea.vmem [#allocation1], 248
    %618 = vst [vmem:[%s617] sm:%s3] %v615
    %s619 = scalar_lea.vmem %s0, 120
    %s620 = sshrl.u32 %s3, 1
    %s621 = sor.u32 %s3, %s620
    %s622 = sand.u32 %s621, 85
    %s623 = sshrl.u32 %s622, 1
    %s624 = sor.u32 %s622, %s623
    %s625 = sand.u32 51, %s624
    %s626 = sshrl.u32 %s625, 2
    %s627 = sor.u32 %s625, %s626
    %s628 = sand.u32 15, %s627
    %v629 = vld [vmem:[%s619] sm:%s628]
    %v630 = vunpack.c.l.bf16 %v629
    %v631 = vunpack.c.h.bf16 %v629
    %s632 = scalar_lea.vmem [#allocation1], 240
    %633 = vst [vmem:[%s632] sm:%s3] %v630
    %s634 = scalar_lea.vmem %s0, 116
    %s635 = sshrl.u32 %s3, 1
    %s636 = sor.u32 %s3, %s635
    %s637 = sand.u32 %s636, 85
    %s638 = sshrl.u32 %s637, 1
    %s639 = sor.u32 %s637, %s638
    %s640 = sand.u32 51, %s639
    %s641 = sshrl.u32 %s640, 2
    %s642 = sor.u32 %s640, %s641
    %s643 = sand.u32 15, %s642
    %v644 = vld [vmem:[%s634] sm:%s643]
    %v645 = vunpack.c.l.bf16 %v644
    %v646 = vunpack.c.h.bf16 %v644
    %s647 = scalar_lea.vmem [#allocation1], 232
    %648 = vst [vmem:[%s647] sm:%s3] %v645
    %s649 = scalar_lea.vmem %s0, 112
    %s650 = sshrl.u32 %s3, 1
    %s651 = sor.u32 %s3, %s650
    %s652 = sand.u32 %s651, 85
    %s653 = sshrl.u32 %s652, 1
    %s654 = sor.u32 %s652, %s653
    %s655 = sand.u32 51, %s654
    %s656 = sshrl.u32 %s655, 2
    %s657 = sor.u32 %s655, %s656
    %s658 = sand.u32 15, %s657
    %v659 = vld [vmem:[%s649] sm:%s658]
    %v660 = vunpack.c.l.bf16 %v659
    %v661 = vunpack.c.h.bf16 %v659
    %s662 = scalar_lea.vmem [#allocation1], 224
    %663 = vst [vmem:[%s662] sm:%s3] %v660
    %s664 = scalar_lea.vmem %s0, 108
    %s665 = sshrl.u32 %s3, 1
    %s666 = sor.u32 %s3, %s665
    %s667 = sand.u32 %s666, 85
    %s668 = sshrl.u32 %s667, 1
    %s669 = sor.u32 %s667, %s668
    %s670 = sand.u32 51, %s669
    %s671 = sshrl.u32 %s670, 2
    %s672 = sor.u32 %s670, %s671
    %s673 = sand.u32 15, %s672
    %v674 = vld [vmem:[%s664] sm:%s673]
    %v675 = vunpack.c.l.bf16 %v674
    %v676 = vunpack.c.h.bf16 %v674
    %s677 = scalar_lea.vmem [#allocation1], 216
    %678 = vst [vmem:[%s677] sm:%s3] %v675
    %s679 = scalar_lea.vmem %s0, 104
    %s680 = sshrl.u32 %s3, 1
    %s681 = sor.u32 %s3, %s680
    %s682 = sand.u32 %s681, 85
    %s683 = sshrl.u32 %s682, 1
    %s684 = sor.u32 %s682, %s683
    %s685 = sand.u32 51, %s684
    %s686 = sshrl.u32 %s685, 2
    %s687 = sor.u32 %s685, %s686
    %s688 = sand.u32 15, %s687
    %v689 = vld [vmem:[%s679] sm:%s688]
    %v690 = vunpack.c.l.bf16 %v689
    %v691 = vunpack.c.h.bf16 %v689
    %s692 = scalar_lea.vmem [#allocation1], 208
    %693 = vst [vmem:[%s692] sm:%s3] %v690
    %s694 = scalar_lea.vmem %s0, 100
    %s695 = sshrl.u32 %s3, 1
    %s696 = sor.u32 %s3, %s695
    %s697 = sand.u32 %s696, 85
    %s698 = sshrl.u32 %s697, 1
    %s699 = sor.u32 %s697, %s698
    %s700 = sand.u32 51, %s699
    %s701 = sshrl.u32 %s700, 2
    %s702 = sor.u32 %s700, %s701
    %s703 = sand.u32 15, %s702
    %v704 = vld [vmem:[%s694] sm:%s703]
    %v705 = vunpack.c.l.bf16 %v704
    %v706 = vunpack.c.h.bf16 %v704
    %s707 = scalar_lea.vmem [#allocation1], 200
    %708 = vst [vmem:[%s707] sm:%s3] %v705
    %s709 = scalar_lea.vmem %s0, 96
    %s710 = sshrl.u32 %s3, 1
    %s711 = sor.u32 %s3, %s710
    %s712 = sand.u32 %s711, 85
    %s713 = sshrl.u32 %s712, 1
    %s714 = sor.u32 %s712, %s713
    %s715 = sand.u32 51, %s714
    %s716 = sshrl.u32 %s715, 2
    %s717 = sor.u32 %s715, %s716
    %s718 = sand.u32 15, %s717
    %v719 = vld [vmem:[%s709] sm:%s718]
    %v720 = vunpack.c.l.bf16 %v719
    %v721 = vunpack.c.h.bf16 %v719
    %s722 = scalar_lea.vmem [#allocation1], 192
    %723 = vst [vmem:[%s722] sm:%s3] %v720
    %s724 = scalar_lea.vmem %s0, 92
    %s725 = sshrl.u32 %s3, 1
    %s726 = sor.u32 %s3, %s725
    %s727 = sand.u32 %s726, 85
    %s728 = sshrl.u32 %s727, 1
    %s729 = sor.u32 %s727, %s728
    %s730 = sand.u32 51, %s729
    %s731 = sshrl.u32 %s730, 2
    %s732 = sor.u32 %s730, %s731
    %s733 = sand.u32 15, %s732
    %v734 = vld [vmem:[%s724] sm:%s733]
    %v735 = vunpack.c.l.bf16 %v734
    %v736 = vunpack.c.h.bf16 %v734
    %s737 = scalar_lea.vmem [#allocation1], 184
    %738 = vst [vmem:[%s737] sm:%s3] %v735
    %s739 = scalar_lea.vmem %s0, 88
    %s740 = sshrl.u32 %s3, 1
    %s741 = sor.u32 %s3, %s740
    %s742 = sand.u32 %s741, 85
    %s743 = sshrl.u32 %s742, 1
    %s744 = sor.u32 %s742, %s743
    %s745 = sand.u32 51, %s744
    %s746 = sshrl.u32 %s745, 2
    %s747 = sor.u32 %s745, %s746
    %s748 = sand.u32 15, %s747
    %v749 = vld [vmem:[%s739] sm:%s748]
    %v750 = vunpack.c.l.bf16 %v749
    %v751 = vunpack.c.h.bf16 %v749
    %s752 = scalar_lea.vmem [#allocation1], 176
    %753 = vst [vmem:[%s752] sm:%s3] %v750
    %s754 = scalar_lea.vmem %s0, 84
    %s755 = sshrl.u32 %s3, 1
    %s756 = sor.u32 %s3, %s755
    %s757 = sand.u32 %s756, 85
    %s758 = sshrl.u32 %s757, 1
    %s759 = sor.u32 %s757, %s758
    %s760 = sand.u32 51, %s759
    %s761 = sshrl.u32 %s760, 2
    %s762 = sor.u32 %s760, %s761
    %s763 = sand.u32 15, %s762
    %v764 = vld [vmem:[%s754] sm:%s763]
    %v765 = vunpack.c.l.bf16 %v764
    %v766 = vunpack.c.h.bf16 %v764
    %s767 = scalar_lea.vmem [#allocation1], 168
    %768 = vst [vmem:[%s767] sm:%s3] %v765
    %s769 = scalar_lea.vmem %s0, 80
    %s770 = sshrl.u32 %s3, 1
    %s771 = sor.u32 %s3, %s770
    %s772 = sand.u32 %s771, 85
    %s773 = sshrl.u32 %s772, 1
    %s774 = sor.u32 %s772, %s773
    %s775 = sand.u32 51, %s774
    %s776 = sshrl.u32 %s775, 2
    %s777 = sor.u32 %s775, %s776
    %s778 = sand.u32 15, %s777
    %v779 = vld [vmem:[%s769] sm:%s778]
    %v780 = vunpack.c.l.bf16 %v779
    %v781 = vunpack.c.h.bf16 %v779
    %s782 = scalar_lea.vmem [#allocation1], 160
    %783 = vst [vmem:[%s782] sm:%s3] %v780
    %s784 = scalar_lea.vmem %s0, 76
    %s785 = sshrl.u32 %s3, 1
    %s786 = sor.u32 %s3, %s785
    %s787 = sand.u32 %s786, 85
    %s788 = sshrl.u32 %s787, 1
    %s789 = sor.u32 %s787, %s788
    %s790 = sand.u32 51, %s789
    %s791 = sshrl.u32 %s790, 2
    %s792 = sor.u32 %s790, %s791
    %s793 = sand.u32 15, %s792
    %v794 = vld [vmem:[%s784] sm:%s793]
    %v795 = vunpack.c.l.bf16 %v794
    %v796 = vunpack.c.h.bf16 %v794
    %s797 = scalar_lea.vmem [#allocation1], 152
    %798 = vst [vmem:[%s797] sm:%s3] %v795
    %s799 = scalar_lea.vmem %s0, 72
    %s800 = sshrl.u32 %s3, 1
    %s801 = sor.u32 %s3, %s800
    %s802 = sand.u32 %s801, 85
    %s803 = sshrl.u32 %s802, 1
    %s804 = sor.u32 %s802, %s803
    %s805 = sand.u32 51, %s804
    %s806 = sshrl.u32 %s805, 2
    %s807 = sor.u32 %s805, %s806
    %s808 = sand.u32 15, %s807
    %v809 = vld [vmem:[%s799] sm:%s808]
    %v810 = vunpack.c.l.bf16 %v809
    %v811 = vunpack.c.h.bf16 %v809
    %s812 = scalar_lea.vmem [#allocation1], 144
    %813 = vst [vmem:[%s812] sm:%s3] %v810
    %s814 = scalar_lea.vmem %s0, 68
    %s815 = sshrl.u32 %s3, 1
    %s816 = sor.u32 %s3, %s815
    %s817 = sand.u32 %s816, 85
    %s818 = sshrl.u32 %s817, 1
    %s819 = sor.u32 %s817, %s818
    %s820 = sand.u32 51, %s819
    %s821 = sshrl.u32 %s820, 2
    %s822 = sor.u32 %s820, %s821
    %s823 = sand.u32 15, %s822
    %v824 = vld [vmem:[%s814] sm:%s823]
    %v825 = vunpack.c.l.bf16 %v824
    %v826 = vunpack.c.h.bf16 %v824
    %s827 = scalar_lea.vmem [#allocation1], 136
    %828 = vst [vmem:[%s827] sm:%s3] %v825
    %s829 = scalar_lea.vmem %s0, 64
    %s830 = sshrl.u32 %s3, 1
    %s831 = sor.u32 %s3, %s830
    %s832 = sand.u32 %s831, 85
    %s833 = sshrl.u32 %s832, 1
    %s834 = sor.u32 %s832, %s833
    %s835 = sand.u32 51, %s834
    %s836 = sshrl.u32 %s835, 2
    %s837 = sor.u32 %s835, %s836
    %s838 = sand.u32 15, %s837
    %v839 = vld [vmem:[%s829] sm:%s838]
    %v840 = vunpack.c.l.bf16 %v839
    %v841 = vunpack.c.h.bf16 %v839
    %s842 = scalar_lea.vmem [#allocation1], 128
    %843 = vst [vmem:[%s842] sm:%s3] %v840
    %s844 = scalar_lea.vmem %s0, 60
    %s845 = sshrl.u32 %s3, 1
    %s846 = sor.u32 %s3, %s845
    %s847 = sand.u32 %s846, 85
    %s848 = sshrl.u32 %s847, 1
    %s849 = sor.u32 %s847, %s848
    %s850 = sand.u32 51, %s849
    %s851 = sshrl.u32 %s850, 2
    %s852 = sor.u32 %s850, %s851
    %s853 = sand.u32 15, %s852
    %v854 = vld [vmem:[%s844] sm:%s853]
    %v855 = vunpack.c.l.bf16 %v854
    %v856 = vunpack.c.h.bf16 %v854
    %s857 = scalar_lea.vmem [#allocation1], 120
    %858 = vst [vmem:[%s857] sm:%s3] %v855
    %s859 = scalar_lea.vmem %s0, 56
    %s860 = sshrl.u32 %s3, 1
    %s861 = sor.u32 %s3, %s860
    %s862 = sand.u32 %s861, 85
    %s863 = sshrl.u32 %s862, 1
    %s864 = sor.u32 %s862, %s863
    %s865 = sand.u32 51, %s864
    %s866 = sshrl.u32 %s865, 2
    %s867 = sor.u32 %s865, %s866
    %s868 = sand.u32 15, %s867
    %v869 = vld [vmem:[%s859] sm:%s868]
    %v870 = vunpack.c.l.bf16 %v869
    %v871 = vunpack.c.h.bf16 %v869
    %s872 = scalar_lea.vmem [#allocation1], 112
    %873 = vst [vmem:[%s872] sm:%s3] %v870
    %s874 = scalar_lea.vmem %s0, 52
    %s875 = sshrl.u32 %s3, 1
    %s876 = sor.u32 %s3, %s875
    %s877 = sand.u32 %s876, 85
    %s878 = sshrl.u32 %s877, 1
    %s879 = sor.u32 %s877, %s878
    %s880 = sand.u32 51, %s879
    %s881 = sshrl.u32 %s880, 2
    %s882 = sor.u32 %s880, %s881
    %s883 = sand.u32 15, %s882
    %v884 = vld [vmem:[%s874] sm:%s883]
    %v885 = vunpack.c.l.bf16 %v884
    %v886 = vunpack.c.h.bf16 %v884
    %s887 = scalar_lea.vmem [#allocation1], 104
    %888 = vst [vmem:[%s887] sm:%s3] %v885
    %s889 = scalar_lea.vmem %s0, 48
    %s890 = sshrl.u32 %s3, 1
    %s891 = sor.u32 %s3, %s890
    %s892 = sand.u32 %s891, 85
    %s893 = sshrl.u32 %s892, 1
    %s894 = sor.u32 %s892, %s893
    %s895 = sand.u32 51, %s894
    %s896 = sshrl.u32 %s895, 2
    %s897 = sor.u32 %s895, %s896
    %s898 = sand.u32 15, %s897
    %v899 = vld [vmem:[%s889] sm:%s898]
    %v900 = vunpack.c.l.bf16 %v899
    %v901 = vunpack.c.h.bf16 %v899
    %s902 = scalar_lea.vmem [#allocation1], 96
    %903 = vst [vmem:[%s902] sm:%s3] %v900
    %s904 = scalar_lea.vmem %s0, 44
    %s905 = sshrl.u32 %s3, 1
    %s906 = sor.u32 %s3, %s905
    %s907 = sand.u32 %s906, 85
    %s908 = sshrl.u32 %s907, 1
    %s909 = sor.u32 %s907, %s908
    %s910 = sand.u32 51, %s909
    %s911 = sshrl.u32 %s910, 2
    %s912 = sor.u32 %s910, %s911
    %s913 = sand.u32 15, %s912
    %v914 = vld [vmem:[%s904] sm:%s913]
    %v915 = vunpack.c.l.bf16 %v914
    %v916 = vunpack.c.h.bf16 %v914
    %s917 = scalar_lea.vmem [#allocation1], 88
    %918 = vst [vmem:[%s917] sm:%s3] %v915
    %s919 = scalar_lea.vmem %s0, 40
    %s920 = sshrl.u32 %s3, 1
    %s921 = sor.u32 %s3, %s920
    %s922 = sand.u32 %s921, 85
    %s923 = sshrl.u32 %s922, 1
    %s924 = sor.u32 %s922, %s923
    %s925 = sand.u32 51, %s924
    %s926 = sshrl.u32 %s925, 2
    %s927 = sor.u32 %s925, %s926
    %s928 = sand.u32 15, %s927
    %v929 = vld [vmem:[%s919] sm:%s928]
    %v930 = vunpack.c.l.bf16 %v929
    %v931 = vunpack.c.h.bf16 %v929
    %s932 = scalar_lea.vmem [#allocation1], 80
    %933 = vst [vmem:[%s932] sm:%s3] %v930
    %s934 = scalar_lea.vmem %s0, 36
    %s935 = sshrl.u32 %s3, 1
    %s936 = sor.u32 %s3, %s935
    %s937 = sand.u32 %s936, 85
    %s938 = sshrl.u32 %s937, 1
    %s939 = sor.u32 %s937, %s938
    %s940 = sand.u32 51, %s939
    %s941 = sshrl.u32 %s940, 2
    %s942 = sor.u32 %s940, %s941
    %s943 = sand.u32 15, %s942
    %v944 = vld [vmem:[%s934] sm:%s943]
    %v945 = vunpack.c.l.bf16 %v944
    %v946 = vunpack.c.h.bf16 %v944
    %s947 = scalar_lea.vmem [#allocation1], 72
    %948 = vst [vmem:[%s947] sm:%s3] %v945
    %s949 = scalar_lea.vmem %s0, 32
    %s950 = sshrl.u32 %s3, 1
    %s951 = sor.u32 %s3, %s950
    %s952 = sand.u32 %s951, 85
    %s953 = sshrl.u32 %s952, 1
    %s954 = sor.u32 %s952, %s953
    %s955 = sand.u32 51, %s954
    %s956 = sshrl.u32 %s955, 2
    %s957 = sor.u32 %s955, %s956
    %s958 = sand.u32 15, %s957
    %v959 = vld [vmem:[%s949] sm:%s958]
    %v960 = vunpack.c.l.bf16 %v959
    %v961 = vunpack.c.h.bf16 %v959
    %s962 = scalar_lea.vmem [#allocation1], 64
    %963 = vst [vmem:[%s962] sm:%s3] %v960
    %s964 = scalar_lea.vmem %s0, 28
    %s965 = sshrl.u32 %s3, 1
    %s966 = sor.u32 %s3, %s965
    %s967 = sand.u32 %s966, 85
    %s968 = sshrl.u32 %s967, 1
    %s969 = sor.u32 %s967, %s968
    %s970 = sand.u32 51, %s969
    %s971 = sshrl.u32 %s970, 2
    %s972 = sor.u32 %s970, %s971
    %s973 = sand.u32 15, %s972
    %v974 = vld [vmem:[%s964] sm:%s973]
    %v975 = vunpack.c.l.bf16 %v974
    %v976 = vunpack.c.h.bf16 %v974
    %s977 = scalar_lea.vmem [#allocation1], 56
    %978 = vst [vmem:[%s977] sm:%s3] %v975
    %s979 = scalar_lea.vmem %s0, 24
    %s980 = sshrl.u32 %s3, 1
    %s981 = sor.u32 %s3, %s980
    %s982 = sand.u32 %s981, 85
    %s983 = sshrl.u32 %s982, 1
    %s984 = sor.u32 %s982, %s983
    %s985 = sand.u32 51, %s984
    %s986 = sshrl.u32 %s985, 2
    %s987 = sor.u32 %s985, %s986
    %s988 = sand.u32 15, %s987
    %v989 = vld [vmem:[%s979] sm:%s988]
    %v990 = vunpack.c.l.bf16 %v989
    %v991 = vunpack.c.h.bf16 %v989
    %s992 = scalar_lea.vmem [#allocation1], 48
    %993 = vst [vmem:[%s992] sm:%s3] %v990
    %s994 = scalar_lea.vmem %s0, 20
    %s995 = sshrl.u32 %s3, 1
    %s996 = sor.u32 %s3, %s995
    %s997 = sand.u32 %s996, 85
    %s998 = sshrl.u32 %s997, 1
    %s999 = sor.u32 %s997, %s998
    %s1000 = sand.u32 51, %s999
    %s1001 = sshrl.u32 %s1000, 2
    %s1002 = sor.u32 %s1000, %s1001
    %s1003 = sand.u32 15, %s1002
    %v1004 = vld [vmem:[%s994] sm:%s1003]
    %v1005 = vunpack.c.l.bf16 %v1004
    %v1006 = vunpack.c.h.bf16 %v1004
    %s1007 = scalar_lea.vmem [#allocation1], 40
    %1008 = vst [vmem:[%s1007] sm:%s3] %v1005
    %s1009 = scalar_lea.vmem %s0, 16
    %s1010 = sshrl.u32 %s3, 1
    %s1011 = sor.u32 %s3, %s1010
    %s1012 = sand.u32 %s1011, 85
    %s1013 = sshrl.u32 %s1012, 1
    %s1014 = sor.u32 %s1012, %s1013
    %s1015 = sand.u32 51, %s1014
    %s1016 = sshrl.u32 %s1015, 2
    %s1017 = sor.u32 %s1015, %s1016
    %s1018 = sand.u32 15, %s1017
    %v1019 = vld [vmem:[%s1009] sm:%s1018]
    %v1020 = vunpack.c.l.bf16 %v1019
    %v1021 = vunpack.c.h.bf16 %v1019
    %s1022 = scalar_lea.vmem [#allocation1], 32
    %1023 = vst [vmem:[%s1022] sm:%s3] %v1020
    %s1024 = scalar_lea.vmem %s0, 12
    %s1025 = sshrl.u32 %s3, 1
    %s1026 = sor.u32 %s3, %s1025
    %s1027 = sand.u32 %s1026, 85
    %s1028 = sshrl.u32 %s1027, 1
    %s1029 = sor.u32 %s1027, %s1028
    %s1030 = sand.u32 51, %s1029
    %s1031 = sshrl.u32 %s1030, 2
    %s1032 = sor.u32 %s1030, %s1031
    %s1033 = sand.u32 15, %s1032
    %v1034 = vld [vmem:[%s1024] sm:%s1033]
    %v1035 = vunpack.c.l.bf16 %v1034
    %v1036 = vunpack.c.h.bf16 %v1034
    %s1037 = scalar_lea.vmem [#allocation1], 24
    %1038 = vst [vmem:[%s1037] sm:%s3] %v1035
    %s1039 = scalar_lea.vmem %s0, 8
    %s1040 = sshrl.u32 %s3, 1
    %s1041 = sor.u32 %s3, %s1040
    %s1042 = sand.u32 %s1041, 85
    %s1043 = sshrl.u32 %s1042, 1
    %s1044 = sor.u32 %s1042, %s1043
    %s1045 = sand.u32 51, %s1044
    %s1046 = sshrl.u32 %s1045, 2
    %s1047 = sor.u32 %s1045, %s1046
    %s1048 = sand.u32 15, %s1047
    %v1049 = vld [vmem:[%s1039] sm:%s1048]
    %v1050 = vunpack.c.l.bf16 %v1049
    %v1051 = vunpack.c.h.bf16 %v1049
    %s1052 = scalar_lea.vmem [#allocation1], 16
    %1053 = vst [vmem:[%s1052] sm:%s3] %v1050
    %s1054 = scalar_lea.vmem %s0, 4
    %s1055 = sshrl.u32 %s3, 1
    %s1056 = sor.u32 %s3, %s1055
    %s1057 = sand.u32 %s1056, 85
    %s1058 = sshrl.u32 %s1057, 1
    %s1059 = sor.u32 %s1057, %s1058
    %s1060 = sand.u32 51, %s1059
    %s1061 = sshrl.u32 %s1060, 2
    %s1062 = sor.u32 %s1060, %s1061
    %s1063 = sand.u32 15, %s1062
    %v1064 = vld [vmem:[%s1054] sm:%s1063]
    %v1065 = vunpack.c.l.bf16 %v1064
    %v1066 = vunpack.c.h.bf16 %v1064
    %s1067 = scalar_lea.vmem [#allocation1], 8
    %1068 = vst [vmem:[%s1067] sm:%s3] %v1065
    %s1069 = sshrl.u32 %s3, 1
    %s1070 = sor.u32 %s3, %s1069
    %s1071 = sand.u32 %s1070, 85
    %s1072 = sshrl.u32 %s1071, 1
    %s1073 = sor.u32 %s1071, %s1072
    %s1074 = sand.u32 51, %s1073
    %s1075 = sshrl.u32 %s1074, 2
    %s1076 = sor.u32 %s1074, %s1075
    %s1077 = sand.u32 15, %s1076
    %v1078 = vld [vmem:[%s0] sm:%s1077]
    %v1079 = vunpack.c.l.bf16 %v1078
    %v1080 = vunpack.c.h.bf16 %v1078
    %1081 = vst [vmem:[#allocation1] sm:%s3] %v1079
    %v1082 = vld [vmem:[#allocation1] ss:$2 sm:$0xff]
    %vm1083 = vcmask 523264
    %1084 = vst.msk [vmem:[#allocation0] ss:$8 sm:$0xf] %vm1083, %v1082
    %1085 = vst.msk [vmem:[#allocation0] ss:$8 sm:$0xf0] %vm1083, %v1082
    %s1086 = scalar_lea.vmem [#allocation1], 16
    %v1087 = vld [vmem:[%s1086] ss:$2 sm:$0xff]
    %vm1088 = vcmask 523264
    %s1089 = scalar_lea.vmem [#allocation0], 64
    %1090 = vst.msk [vmem:[%s1089] ss:$8 sm:$0xf] %vm1088, %v1087
    %s1091 = scalar_lea.vmem [#allocation0], 64
    %1092 = vst.msk [vmem:[%s1091] ss:$8 sm:$0xf0] %vm1088, %v1087
    %s1093 = scalar_lea.vmem [#allocation1], 32
    %v1094 = vld [vmem:[%s1093] ss:$2 sm:$0xff]
    %vm1095 = vcmask 523264
    %s1096 = scalar_lea.vmem [#allocation0], 128
    %1097 = vst.msk [vmem:[%s1096] ss:$8 sm:$0xf] %vm1095, %v1094
    %s1098 = scalar_lea.vmem [#allocation0], 128
    %1099 = vst.msk [vmem:[%s1098] ss:$8 sm:$0xf0] %vm1095, %v1094
    %s1100 = scalar_lea.vmem [#allocation1], 48
    %v1101 = vld [vmem:[%s1100] ss:$2 sm:$0xff]
    %vm1102 = vcmask 523264
    %s1103 = scalar_lea.vmem [#allocation0], 192
    %1104 = vst.msk [vmem:[%s1103] ss:$8 sm:$0xf] %vm1102, %v1101
    %s1105 = scalar_lea.vmem [#allocation0], 192
    %1106 = vst.msk [vmem:[%s1105] ss:$8 sm:$0xf0] %vm1102, %v1101
    %s1107 = scalar_lea.vmem [#allocation1], 64
    %v1108 = vld [vmem:[%s1107] ss:$2 sm:$0xff]
    %vm1109 = vcmask 523264
    %s1110 = scalar_lea.vmem [#allocation0], 1
    %1111 = vst.msk [vmem:[%s1110] ss:$8 sm:$0xf] %vm1109, %v1108
    %s1112 = scalar_lea.vmem [#allocation0], 1
    %1113 = vst.msk [vmem:[%s1112] ss:$8 sm:$0xf0] %vm1109, %v1108
    %s1114 = scalar_lea.vmem [#allocation1], 80
    %v1115 = vld [vmem:[%s1114] ss:$2 sm:$0xff]
    %vm1116 = vcmask 523264
    %s1117 = scalar_lea.vmem [#allocation0], 65
    %1118 = vst.msk [vmem:[%s1117] ss:$8 sm:$0xf] %vm1116, %v1115
    %s1119 = scalar_lea.vmem [#allocation0], 65
    %1120 = vst.msk [vmem:[%s1119] ss:$8 sm:$0xf0] %vm1116, %v1115
    %s1121 = scalar_lea.vmem [#allocation1], 96
    %v1122 = vld [vmem:[%s1121] ss:$2 sm:$0xff]
    %vm1123 = vcmask 523264
    %s1124 = scalar_lea.vmem [#allocation0], 129
    %1125 = vst.msk [vmem:[%s1124] ss:$8 sm:$0xf] %vm1123, %v1122
    %s1126 = scalar_lea.vmem [#allocation0], 129
    %1127 = vst.msk [vmem:[%s1126] ss:$8 sm:$0xf0] %vm1123, %v1122
    %s1128 = scalar_lea.vmem [#allocation1], 112
    %v1129 = vld [vmem:[%s1128] ss:$2 sm:$0xff]
    %vm1130 = vcmask 523264
    %s1131 = scalar_lea.vmem [#allocation0], 193
    %1132 = vst.msk [vmem:[%s1131] ss:$8 sm:$0xf] %vm1130, %v1129
    %s1133 = scalar_lea.vmem [#allocation0], 193
    %1134 = vst.msk [vmem:[%s1133] ss:$8 sm:$0xf0] %vm1130, %v1129
    %s1135 = scalar_lea.vmem [#allocation1], 128
    %v1136 = vld [vmem:[%s1135] ss:$2 sm:$0xff]
    %vm1137 = vcmask 523264
    %s1138 = scalar_lea.vmem [#allocation0], 2
    %1139 = vst.msk [vmem:[%s1138] ss:$8 sm:$0xf] %vm1137, %v1136
    %s1140 = scalar_lea.vmem [#allocation0], 2
    %1141 = vst.msk [vmem:[%s1140] ss:$8 sm:$0xf0] %vm1137, %v1136
    %s1142 = scalar_lea.vmem [#allocation1], 144
    %v1143 = vld [vmem:[%s1142] ss:$2 sm:$0xff]
    %vm1144 = vcmask 523264
    %s1145 = scalar_lea.vmem [#allocation0], 66
    %1146 = vst.msk [vmem:[%s1145] ss:$8 sm:$0xf] %vm1144, %v1143
    %s1147 = scalar_lea.vmem [#allocation0], 66
    %1148 = vst.msk [vmem:[%s1147] ss:$8 sm:$0xf0] %vm1144, %v1143
    %s1149 = scalar_lea.vmem [#allocation1], 160
    %v1150 = vld [vmem:[%s1149] ss:$2 sm:$0xff]
    %vm1151 = vcmask 523264
    %s1152 = scalar_lea.vmem [#allocation0], 130
    %1153 = vst.msk [vmem:[%s1152] ss:$8 sm:$0xf] %vm1151, %v1150
    %s1154 = scalar_lea.vmem [#allocation0], 130
    %1155 = vst.msk [vmem:[%s1154] ss:$8 sm:$0xf0] %vm1151, %v1150
    %s1156 = scalar_lea.vmem [#allocation1], 176
    %v1157 = vld [vmem:[%s1156] ss:$2 sm:$0xff]
    %vm1158 = vcmask 523264
    %s1159 = scalar_lea.vmem [#allocation0], 194
    %1160 = vst.msk [vmem:[%s1159] ss:$8 sm:$0xf] %vm1158, %v1157
    %s1161 = scalar_lea.vmem [#allocation0], 194
    %1162 = vst.msk [vmem:[%s1161] ss:$8 sm:$0xf0] %vm1158, %v1157
    %s1163 = scalar_lea.vmem [#allocation1], 192
    %v1164 = vld [vmem:[%s1163] ss:$2 sm:$0xff]
    %vm1165 = vcmask 523264
    %s1166 = scalar_lea.vmem [#allocation0], 3
    %1167 = vst.msk [vmem:[%s1166] ss:$8 sm:$0xf] %vm1165, %v1164
    %s1168 = scalar_lea.vmem [#allocation0], 3
    %1169 = vst.msk [vmem:[%s1168] ss:$8 sm:$0xf0] %vm1165, %v1164
    %s1170 = scalar_lea.vmem [#allocation1], 208
    %v1171 = vld [vmem:[%s1170] ss:$2 sm:$0xff]
    %vm1172 = vcmask 523264
    %s1173 = scalar_lea.vmem [#allocation0], 67
    %1174 = vst.msk [vmem:[%s1173] ss:$8 sm:$0xf] %vm1172, %v1171
    %s1175 = scalar_lea.vmem [#allocation0], 67
    %1176 = vst.msk [vmem:[%s1175] ss:$8 sm:$0xf0] %vm1172, %v1171
    %s1177 = scalar_lea.vmem [#allocation1], 224
    %v1178 = vld [vmem:[%s1177] ss:$2 sm:$0xff]
    %vm1179 = vcmask 523264
    %s1180 = scalar_lea.vmem [#allocation0], 131
    %1181 = vst.msk [vmem:[%s1180] ss:$8 sm:$0xf] %vm1179, %v1178
    %s1182 = scalar_lea.vmem [#allocation0], 131
    %1183 = vst.msk [vmem:[%s1182] ss:$8 sm:$0xf0] %vm1179, %v1178
    %s1184 = scalar_lea.vmem [#allocation1], 240
    %v1185 = vld [vmem:[%s1184] ss:$2 sm:$0xff]
    %vm1186 = vcmask 523264
    %s1187 = scalar_lea.vmem [#allocation0], 195
    %1188 = vst.msk [vmem:[%s1187] ss:$8 sm:$0xf] %vm1186, %v1185
    %s1189 = scalar_lea.vmem [#allocation0], 195
    %1190 = vst.msk [vmem:[%s1189] ss:$8 sm:$0xf0] %vm1186, %v1185
    %s1191 = scalar_lea.vmem [#allocation1], 256
    %v1192 = vld [vmem:[%s1191] ss:$2 sm:$0xff]
    %vm1193 = vcmask 523264
    %s1194 = scalar_lea.vmem [#allocation0], 4
    %1195 = vst.msk [vmem:[%s1194] ss:$8 sm:$0xf] %vm1193, %v1192
    %s1196 = scalar_lea.vmem [#allocation0], 4
    %1197 = vst.msk [vmem:[%s1196] ss:$8 sm:$0xf0] %vm1193, %v1192
    %s1198 = scalar_lea.vmem [#allocation1], 272
    %v1199 = vld [vmem:[%s1198] ss:$2 sm:$0xff]
    %vm1200 = vcmask 523264
    %s1201 = scalar_lea.vmem [#allocation0], 68
    %1202 = vst.msk [vmem:[%s1201] ss:$8 sm:$0xf] %vm1200, %v1199
    %s1203 = scalar_lea.vmem [#allocation0], 68
    %1204 = vst.msk [vmem:[%s1203] ss:$8 sm:$0xf0] %vm1200, %v1199
    %s1205 = scalar_lea.vmem [#allocation1], 288
    %v1206 = vld [vmem:[%s1205] ss:$2 sm:$0xff]
    %vm1207 = vcmask 523264
    %s1208 = scalar_lea.vmem [#allocation0], 132
    %1209 = vst.msk [vmem:[%s1208] ss:$8 sm:$0xf] %vm1207, %v1206
    %s1210 = scalar_lea.vmem [#allocation0], 132
    %1211 = vst.msk [vmem:[%s1210] ss:$8 sm:$0xf0] %vm1207, %v1206
    %s1212 = scalar_lea.vmem [#allocation1], 304
    %v1213 = vld [vmem:[%s1212] ss:$2 sm:$0xff]
    %vm1214 = vcmask 523264
    %s1215 = scalar_lea.vmem [#allocation0], 196
    %1216 = vst.msk [vmem:[%s1215] ss:$8 sm:$0xf] %vm1214, %v1213
    %s1217 = scalar_lea.vmem [#allocation0], 196
    %1218 = vst.msk [vmem:[%s1217] ss:$8 sm:$0xf0] %vm1214, %v1213
    %s1219 = scalar_lea.vmem [#allocation1], 320
    %v1220 = vld [vmem:[%s1219] ss:$2 sm:$0xff]
    %vm1221 = vcmask 523264
    %s1222 = scalar_lea.vmem [#allocation0], 5
    %1223 = vst.msk [vmem:[%s1222] ss:$8 sm:$0xf] %vm1221, %v1220
    %s1224 = scalar_lea.vmem [#allocation0], 5
    %1225 = vst.msk [vmem:[%s1224] ss:$8 sm:$0xf0] %vm1221, %v1220
    %s1226 = scalar_lea.vmem [#allocation1], 336
    %v1227 = vld [vmem:[%s1226] ss:$2 sm:$0xff]
    %vm1228 = vcmask 523264
    %s1229 = scalar_lea.vmem [#allocation0], 69
    %1230 = vst.msk [vmem:[%s1229] ss:$8 sm:$0xf] %vm1228, %v1227
    %s1231 = scalar_lea.vmem [#allocation0], 69
    %1232 = vst.msk [vmem:[%s1231] ss:$8 sm:$0xf0] %vm1228, %v1227
    %s1233 = scalar_lea.vmem [#allocation1], 352
    %v1234 = vld [vmem:[%s1233] ss:$2 sm:$0xff]
    %vm1235 = vcmask 523264
    %s1236 = scalar_lea.vmem [#allocation0], 133
    %1237 = vst.msk [vmem:[%s1236] ss:$8 sm:$0xf] %vm1235, %v1234
    %s1238 = scalar_lea.vmem [#allocation0], 133
    %1239 = vst.msk [vmem:[%s1238] ss:$8 sm:$0xf0] %vm1235, %v1234
    %s1240 = scalar_lea.vmem [#allocation1], 368
    %v1241 = vld [vmem:[%s1240] ss:$2 sm:$0xff]
    %vm1242 = vcmask 523264
    %s1243 = scalar_lea.vmem [#allocation0], 197
    %1244 = vst.msk [vmem:[%s1243] ss:$8 sm:$0xf] %vm1242, %v1241
    %s1245 = scalar_lea.vmem [#allocation0], 197
    %1246 = vst.msk [vmem:[%s1245] ss:$8 sm:$0xf0] %vm1242, %v1241
    %s1247 = scalar_lea.vmem [#allocation1], 384
    %v1248 = vld [vmem:[%s1247] ss:$2 sm:$0xff]
    %vm1249 = vcmask 523264
    %s1250 = scalar_lea.vmem [#allocation0], 6
    %1251 = vst.msk [vmem:[%s1250] ss:$8 sm:$0xf] %vm1249, %v1248
    %s1252 = scalar_lea.vmem [#allocation0], 6
    %1253 = vst.msk [vmem:[%s1252] ss:$8 sm:$0xf0] %vm1249, %v1248
    %s1254 = scalar_lea.vmem [#allocation1], 400
    %v1255 = vld [vmem:[%s1254] ss:$2 sm:$0xff]
    %vm1256 = vcmask 523264
    %s1257 = scalar_lea.vmem [#allocation0], 70
    %1258 = vst.msk [vmem:[%s1257] ss:$8 sm:$0xf] %vm1256, %v1255
    %s1259 = scalar_lea.vmem [#allocation0], 70
    %1260 = vst.msk [vmem:[%s1259] ss:$8 sm:$0xf0] %vm1256, %v1255
    %s1261 = scalar_lea.vmem [#allocation1], 416
    %v1262 = vld [vmem:[%s1261] ss:$2 sm:$0xff]
    %vm1263 = vcmask 523264
    %s1264 = scalar_lea.vmem [#allocation0], 134
    %1265 = vst.msk [vmem:[%s1264] ss:$8 sm:$0xf] %vm1263, %v1262
    %s1266 = scalar_lea.vmem [#allocation0], 134
    %1267 = vst.msk [vmem:[%s1266] ss:$8 sm:$0xf0] %vm1263, %v1262
    %s1268 = scalar_lea.vmem [#allocation1], 432
    %v1269 = vld [vmem:[%s1268] ss:$2 sm:$0xff]
    %vm1270 = vcmask 523264
    %s1271 = scalar_lea.vmem [#allocation0], 198
    %1272 = vst.msk [vmem:[%s1271] ss:$8 sm:$0xf] %vm1270, %v1269
    %s1273 = scalar_lea.vmem [#allocation0], 198
    %1274 = vst.msk [vmem:[%s1273] ss:$8 sm:$0xf0] %vm1270, %v1269
    %s1275 = scalar_lea.vmem [#allocation1], 448
    %v1276 = vld [vmem:[%s1275] ss:$2 sm:$0xff]
    %vm1277 = vcmask 523264
    %s1278 = scalar_lea.vmem [#allocation0], 7
    %1279 = vst.msk [vmem:[%s1278] ss:$8 sm:$0xf] %vm1277, %v1276
    %s1280 = scalar_lea.vmem [#allocation0], 7
    %1281 = vst.msk [vmem:[%s1280] ss:$8 sm:$0xf0] %vm1277, %v1276
    %s1282 = scalar_lea.vmem [#allocation1], 464
    %v1283 = vld [vmem:[%s1282] ss:$2 sm:$0xff]
    %vm1284 = vcmask 523264
    %s1285 = scalar_lea.vmem [#allocation0], 71
    %1286 = vst.msk [vmem:[%s1285] ss:$8 sm:$0xf] %vm1284, %v1283
    %s1287 = scalar_lea.vmem [#allocation0], 71
    %1288 = vst.msk [vmem:[%s1287] ss:$8 sm:$0xf0] %vm1284, %v1283
    %s1289 = scalar_lea.vmem [#allocation1], 480
    %v1290 = vld [vmem:[%s1289] ss:$2 sm:$0xff]
    %vm1291 = vcmask 523264
    %s1292 = scalar_lea.vmem [#allocation0], 135
    %1293 = vst.msk [vmem:[%s1292] ss:$8 sm:$0xf] %vm1291, %v1290
    %s1294 = scalar_lea.vmem [#allocation0], 135
    %1295 = vst.msk [vmem:[%s1294] ss:$8 sm:$0xf0] %vm1291, %v1290
    %s1296 = scalar_lea.vmem [#allocation1], 496
    %v1297 = vld [vmem:[%s1296] ss:$2 sm:$0xff]
    %vm1298 = vcmask 523264
    %s1299 = scalar_lea.vmem [#allocation0], 199
    %1300 = vst.msk [vmem:[%s1299] ss:$8 sm:$0xf] %vm1298, %v1297
    %s1301 = scalar_lea.vmem [#allocation0], 199
    %1302 = vst.msk [vmem:[%s1301] ss:$8 sm:$0xf0] %vm1298, %v1297
    %s1303 = scalar_lea.vmem [#allocation1], 512
    %v1304 = vld [vmem:[%s1303] ss:$2 sm:$0xff]
    %vm1305 = vcmask 523264
    %s1306 = scalar_lea.vmem [#allocation0], 256
    %1307 = vst.msk [vmem:[%s1306] ss:$8 sm:$0xf] %vm1305, %v1304
    %s1308 = scalar_lea.vmem [#allocation0], 256
    %1309 = vst.msk [vmem:[%s1308] ss:$8 sm:$0xf0] %vm1305, %v1304
    %s1310 = scalar_lea.vmem [#allocation1], 528
    %v1311 = vld [vmem:[%s1310] ss:$2 sm:$0xff]
    %vm1312 = vcmask 523264
    %s1313 = scalar_lea.vmem [#allocation0], 320
    %1314 = vst.msk [vmem:[%s1313] ss:$8 sm:$0xf] %vm1312, %v1311
    %s1315 = scalar_lea.vmem [#allocation0], 320
    %1316 = vst.msk [vmem:[%s1315] ss:$8 sm:$0xf0] %vm1312, %v1311
    %s1317 = scalar_lea.vmem [#allocation1], 544
    %v1318 = vld [vmem:[%s1317] ss:$2 sm:$0xff]
    %vm1319 = vcmask 523264
    %s1320 = scalar_lea.vmem [#allocation0], 384
    %1321 = vst.msk [vmem:[%s1320] ss:$8 sm:$0xf] %vm1319, %v1318
    %s1322 = scalar_lea.vmem [#allocation0], 384
    %1323 = vst.msk [vmem:[%s1322] ss:$8 sm:$0xf0] %vm1319, %v1318
    %s1324 = scalar_lea.vmem [#allocation1], 560
    %v1325 = vld [vmem:[%s1324] ss:$2 sm:$0xff]
    %vm1326 = vcmask 523264
    %s1327 = scalar_lea.vmem [#allocation0], 448
    %1328 = vst.msk [vmem:[%s1327] ss:$8 sm:$0xf] %vm1326, %v1325
    %s1329 = scalar_lea.vmem [#allocation0], 448
    %1330 = vst.msk [vmem:[%s1329] ss:$8 sm:$0xf0] %vm1326, %v1325
    %s1331 = scalar_lea.vmem [#allocation1], 1
    %v1332 = vld [vmem:[%s1331] sm:$0x1]
    %s1333 = scalar_lea.vmem [#allocation1], 64
    %v1334 = vld [vmem:[%s1333] sm:$0x2]
    %vm1335 = vcmask 1041409
    %v1336 = vsel %vm1335, %v1334, %v1332
    %s1337 = scalar_lea.vmem [#allocation1], 127
    %v1338 = vld [vmem:[%s1337] sm:$0x4]
    %vm1339 = vcmask 1042434
    %v1340 = vsel %vm1339, %v1338, %v1336
    %s1341 = scalar_lea.vmem [#allocation1], 190
    %v1342 = vld [vmem:[%s1341] sm:$0x8]
    %vm1343 = vcmask 1043459
    %v1344 = vsel %vm1343, %v1342, %v1340
    %s1345 = scalar_lea.vmem [#allocation1], 253
    %v1346 = vld [vmem:[%s1345] sm:$0x10]
    %vm1347 = vcmask 1044484
    %v1348 = vsel %vm1347, %v1346, %v1344
    %s1349 = scalar_lea.vmem [#allocation1], 316
    %v1350 = vld [vmem:[%s1349] sm:$0x20]
    %vm1351 = vcmask 1045509
    %v1352 = vsel %vm1351, %v1350, %v1348
    %s1353 = scalar_lea.vmem [#allocation1], 379
    %v1354 = vld [vmem:[%s1353] sm:$0x40]
    %vm1355 = vcmask 1046534
    %v1356 = vsel %vm1355, %v1354, %v1352
    %s1357 = scalar_lea.vmem [#allocation1], 442
    %v1358 = vld [vmem:[%s1357] sm:$0x80]
    %vm1359 = vcmask 1047559
    %v1360 = vsel %vm1359, %v1358, %v1356
    %1361 = vrot.lane.b32.xlu0 %v1360, 64
    %v1362 = vpop.permute.xlu0 %1361
    %vm1363 = vcmask 1048064
    %1364 = vst.msk [vmem:[#allocation0] sm:$0xff] %vm1363, %v1362
    %s1365 = scalar_lea.vmem [#allocation1], 9
    %v1366 = vld [vmem:[%s1365] sm:$0x1]
    %s1367 = scalar_lea.vmem [#allocation1], 72
    %v1368 = vld [vmem:[%s1367] sm:$0x2]
    %vm1369 = vcmask 1041409
    %v1370 = vsel %vm1369, %v1368, %v1366
    %s1371 = scalar_lea.vmem [#allocation1], 135
    %v1372 = vld [vmem:[%s1371] sm:$0x4]
    %vm1373 = vcmask 1042434
    %v1374 = vsel %vm1373, %v1372, %v1370
    %s1375 = scalar_lea.vmem [#allocation1], 198
    %v1376 = vld [vmem:[%s1375] sm:$0x8]
    %vm1377 = vcmask 1043459
    %v1378 = vsel %vm1377, %v1376, %v1374
    %s1379 = scalar_lea.vmem [#allocation1], 261
    %v1380 = vld [vmem:[%s1379] sm:$0x10]
    %vm1381 = vcmask 1044484
    %v1382 = vsel %vm1381, %v1380, %v1378
    %s1383 = scalar_lea.vmem [#allocation1], 324
    %v1384 = vld [vmem:[%s1383] sm:$0x20]
    %vm1385 = vcmask 1045509
    %v1386 = vsel %vm1385, %v1384, %v1382
    %s1387 = scalar_lea.vmem [#allocation1], 387
    %v1388 = vld [vmem:[%s1387] sm:$0x40]
    %vm1389 = vcmask 1046534
    %v1390 = vsel %vm1389, %v1388, %v1386
    %s1391 = scalar_lea.vmem [#allocation1], 450
    %v1392 = vld [vmem:[%s1391] sm:$0x80]
    %vm1393 = vcmask 1047559
    %v1394 = vsel %vm1393, %v1392, %v1390
    %1395 = vrot.lane.b32.xlu0 %v1394, 64
    %v1396 = vpop.permute.xlu0 %1395
    %vm1397 = vcmask 1048064
    %s1398 = scalar_lea.vmem [#allocation0], 32
    %1399 = vst.msk [vmem:[%s1398] sm:$0xff] %vm1397, %v1396
    %s1400 = scalar_lea.vmem [#allocation1], 17
    %v1401 = vld [vmem:[%s1400] sm:$0x1]
    %s1402 = scalar_lea.vmem [#allocation1], 80
    %v1403 = vld [vmem:[%s1402] sm:$0x2]
    %vm1404 = vcmask 1041409
    %v1405 = vsel %vm1404, %v1403, %v1401
    %s1406 = scalar_lea.vmem [#allocation1], 143
    %v1407 = vld [vmem:[%s1406] sm:$0x4]
    %vm1408 = vcmask 1042434
    %v1409 = vsel %vm1408, %v1407, %v1405
    %s1410 = scalar_lea.vmem [#allocation1], 206
    %v1411 = vld [vmem:[%s1410] sm:$0x8]
    %vm1412 = vcmask 1043459
    %v1413 = vsel %vm1412, %v1411, %v1409
    %s1414 = scalar_lea.vmem [#allocation1], 269
    %v1415 = vld [vmem:[%s1414] sm:$0x10]
    %vm1416 = vcmask 1044484
    %v1417 = vsel %vm1416, %v1415, %v1413
    %s1418 = scalar_lea.vmem [#allocation1], 332
    %v1419 = vld [vmem:[%s1418] sm:$0x20]
    %vm1420 = vcmask 1045509
    %v1421 = vsel %vm1420, %v1419, %v1417
    %s1422 = scalar_lea.vmem [#allocation1], 395
    %v1423 = vld [vmem:[%s1422] sm:$0x40]
    %vm1424 = vcmask 1046534
    %v1425 = vsel %vm1424, %v1423, %v1421
    %s1426 = scalar_lea.vmem [#allocation1], 458
    %v1427 = vld [vmem:[%s1426] sm:$0x80]
    %vm1428 = vcmask 1047559
    %v1429 = vsel %vm1428, %v1427, %v1425
    %1430 = vrot.lane.b32.xlu0 %v1429, 64
    %v1431 = vpop.permute.xlu0 %1430
    %vm1432 = vcmask 1048064
    %s1433 = scalar_lea.vmem [#allocation0], 64
    %1434 = vst.msk [vmem:[%s1433] sm:$0xff] %vm1432, %v1431
    %s1435 = scalar_lea.vmem [#allocation1], 25
    %v1436 = vld [vmem:[%s1435] sm:$0x1]
    %s1437 = scalar_lea.vmem [#allocation1], 88
    %v1438 = vld [vmem:[%s1437] sm:$0x2]
    %vm1439 = vcmask 1041409
    %v1440 = vsel %vm1439, %v1438, %v1436
    %s1441 = scalar_lea.vmem [#allocation1], 151
    %v1442 = vld [vmem:[%s1441] sm:$0x4]
    %vm1443 = vcmask 1042434
    %v1444 = vsel %vm1443, %v1442, %v1440
    %s1445 = scalar_lea.vmem [#allocation1], 214
    %v1446 = vld [vmem:[%s1445] sm:$0x8]
    %vm1447 = vcmask 1043459
    %v1448 = vsel %vm1447, %v1446, %v1444
    %s1449 = scalar_lea.vmem [#allocation1], 277
    %v1450 = vld [vmem:[%s1449] sm:$0x10]
    %vm1451 = vcmask 1044484
    %v1452 = vsel %vm1451, %v1450, %v1448
    %s1453 = scalar_lea.vmem [#allocation1], 340
    %v1454 = vld [vmem:[%s1453] sm:$0x20]
    %vm1455 = vcmask 1045509
    %v1456 = vsel %vm1455, %v1454, %v1452
    %s1457 = scalar_lea.vmem [#allocation1], 403
    %v1458 = vld [vmem:[%s1457] sm:$0x40]
    %vm1459 = vcmask 1046534
    %v1460 = vsel %vm1459, %v1458, %v1456
    %s1461 = scalar_lea.vmem [#allocation1], 466
    %v1462 = vld [vmem:[%s1461] sm:$0x80]
    %vm1463 = vcmask 1047559
    %v1464 = vsel %vm1463, %v1462, %v1460
    %1465 = vrot.lane.b32.xlu0 %v1464, 64
    %v1466 = vpop.permute.xlu0 %1465
    %vm1467 = vcmask 1048064
    %s1468 = scalar_lea.vmem [#allocation0], 96
    %1469 = vst.msk [vmem:[%s1468] sm:$0xff] %vm1467, %v1466
    %s1470 = scalar_lea.vmem [#allocation1], 33
    %v1471 = vld [vmem:[%s1470] sm:$0x1]
    %s1472 = scalar_lea.vmem [#allocation1], 96
    %v1473 = vld [vmem:[%s1472] sm:$0x2]
    %vm1474 = vcmask 1041409
    %v1475 = vsel %vm1474, %v1473, %v1471
    %s1476 = scalar_lea.vmem [#allocation1], 159
    %v1477 = vld [vmem:[%s1476] sm:$0x4]
    %vm1478 = vcmask 1042434
    %v1479 = vsel %vm1478, %v1477, %v1475
    %s1480 = scalar_lea.vmem [#allocation1], 222
    %v1481 = vld [vmem:[%s1480] sm:$0x8]
    %vm1482 = vcmask 1043459
    %v1483 = vsel %vm1482, %v1481, %v1479
    %s1484 = scalar_lea.vmem [#allocation1], 285
    %v1485 = vld [vmem:[%s1484] sm:$0x10]
    %vm1486 = vcmask 1044484
    %v1487 = vsel %vm1486, %v1485, %v1483
    %s1488 = scalar_lea.vmem [#allocation1], 348
    %v1489 = vld [vmem:[%s1488] sm:$0x20]
    %vm1490 = vcmask 1045509
    %v1491 = vsel %vm1490, %v1489, %v1487
    %s1492 = scalar_lea.vmem [#allocation1], 411
    %v1493 = vld [vmem:[%s1492] sm:$0x40]
    %vm1494 = vcmask 1046534
    %v1495 = vsel %vm1494, %v1493, %v1491
    %s1496 = scalar_lea.vmem [#allocation1], 474
    %v1497 = vld [vmem:[%s1496] sm:$0x80]
    %vm1498 = vcmask 1047559
    %v1499 = vsel %vm1498, %v1497, %v1495
    %1500 = vrot.lane.b32.xlu0 %v1499, 64
    %v1501 = vpop.permute.xlu0 %1500
    %vm1502 = vcmask 1048064
    %s1503 = scalar_lea.vmem [#allocation0], 128
    %1504 = vst.msk [vmem:[%s1503] sm:$0xff] %vm1502, %v1501
    %s1505 = scalar_lea.vmem [#allocation1], 41
    %v1506 = vld [vmem:[%s1505] sm:$0x1]
    %s1507 = scalar_lea.vmem [#allocation1], 104
    %v1508 = vld [vmem:[%s1507] sm:$0x2]
    %vm1509 = vcmask 1041409
    %v1510 = vsel %vm1509, %v1508, %v1506
    %s1511 = scalar_lea.vmem [#allocation1], 167
    %v1512 = vld [vmem:[%s1511] sm:$0x4]
    %vm1513 = vcmask 1042434
    %v1514 = vsel %vm1513, %v1512, %v1510
    %s1515 = scalar_lea.vmem [#allocation1], 230
    %v1516 = vld [vmem:[%s1515] sm:$0x8]
    %vm1517 = vcmask 1043459
    %v1518 = vsel %vm1517, %v1516, %v1514
    %s1519 = scalar_lea.vmem [#allocation1], 293
    %v1520 = vld [vmem:[%s1519] sm:$0x10]
    %vm1521 = vcmask 1044484
    %v1522 = vsel %vm1521, %v1520, %v1518
    %s1523 = scalar_lea.vmem [#allocation1], 356
    %v1524 = vld [vmem:[%s1523] sm:$0x20]
    %vm1525 = vcmask 1045509
    %v1526 = vsel %vm1525, %v1524, %v1522
    %s1527 = scalar_lea.vmem [#allocation1], 419
    %v1528 = vld [vmem:[%s1527] sm:$0x40]
    %vm1529 = vcmask 1046534
    %v1530 = vsel %vm1529, %v1528, %v1526
    %s1531 = scalar_lea.vmem [#allocation1], 482
    %v1532 = vld [vmem:[%s1531] sm:$0x80]
    %vm1533 = vcmask 1047559
    %v1534 = vsel %vm1533, %v1532, %v1530
    %1535 = vrot.lane.b32.xlu0 %v1534, 64
    %v1536 = vpop.permute.xlu0 %1535
    %vm1537 = vcmask 1048064
    %s1538 = scalar_lea.vmem [#allocation0], 160
    %1539 = vst.msk [vmem:[%s1538] sm:$0xff] %vm1537, %v1536
    %s1540 = scalar_lea.vmem [#allocation1], 49
    %v1541 = vld [vmem:[%s1540] sm:$0x1]
    %s1542 = scalar_lea.vmem [#allocation1], 112
    %v1543 = vld [vmem:[%s1542] sm:$0x2]
    %vm1544 = vcmask 1041409
    %v1545 = vsel %vm1544, %v1543, %v1541
    %s1546 = scalar_lea.vmem [#allocation1], 175
    %v1547 = vld [vmem:[%s1546] sm:$0x4]
    %vm1548 = vcmask 1042434
    %v1549 = vsel %vm1548, %v1547, %v1545
    %s1550 = scalar_lea.vmem [#allocation1], 238
    %v1551 = vld [vmem:[%s1550] sm:$0x8]
    %vm1552 = vcmask 1043459
    %v1553 = vsel %vm1552, %v1551, %v1549
    %s1554 = scalar_lea.vmem [#allocation1], 301
    %v1555 = vld [vmem:[%s1554] sm:$0x10]
    %vm1556 = vcmask 1044484
    %v1557 = vsel %vm1556, %v1555, %v1553
    %s1558 = scalar_lea.vmem [#allocation1], 364
    %v1559 = vld [vmem:[%s1558] sm:$0x20]
    %vm1560 = vcmask 1045509
    %v1561 = vsel %vm1560, %v1559, %v1557
    %s1562 = scalar_lea.vmem [#allocation1], 427
    %v1563 = vld [vmem:[%s1562] sm:$0x40]
    %vm1564 = vcmask 1046534
    %v1565 = vsel %vm1564, %v1563, %v1561
    %s1566 = scalar_lea.vmem [#allocation1], 490
    %v1567 = vld [vmem:[%s1566] sm:$0x80]
    %vm1568 = vcmask 1047559
    %v1569 = vsel %vm1568, %v1567, %v1565
    %1570 = vrot.lane.b32.xlu0 %v1569, 64
    %v1571 = vpop.permute.xlu0 %1570
    %vm1572 = vcmask 1048064
    %s1573 = scalar_lea.vmem [#allocation0], 192
    %1574 = vst.msk [vmem:[%s1573] sm:$0xff] %vm1572, %v1571
    %s1575 = scalar_lea.vmem [#allocation1], 57
    %v1576 = vld [vmem:[%s1575] sm:$0x1]
    %s1577 = scalar_lea.vmem [#allocation1], 120
    %v1578 = vld [vmem:[%s1577] sm:$0x2]
    %vm1579 = vcmask 1041409
    %v1580 = vsel %vm1579, %v1578, %v1576
    %s1581 = scalar_lea.vmem [#allocation1], 183
    %v1582 = vld [vmem:[%s1581] sm:$0x4]
    %vm1583 = vcmask 1042434
    %v1584 = vsel %vm1583, %v1582, %v1580
    %s1585 = scalar_lea.vmem [#allocation1], 246
    %v1586 = vld [vmem:[%s1585] sm:$0x8]
    %vm1587 = vcmask 1043459
    %v1588 = vsel %vm1587, %v1586, %v1584
    %s1589 = scalar_lea.vmem [#allocation1], 309
    %v1590 = vld [vmem:[%s1589] sm:$0x10]
    %vm1591 = vcmask 1044484
    %v1592 = vsel %vm1591, %v1590, %v1588
    %s1593 = scalar_lea.vmem [#allocation1], 372
    %v1594 = vld [vmem:[%s1593] sm:$0x20]
    %vm1595 = vcmask 1045509
    %v1596 = vsel %vm1595, %v1594, %v1592
    %s1597 = scalar_lea.vmem [#allocation1], 435
    %v1598 = vld [vmem:[%s1597] sm:$0x40]
    %vm1599 = vcmask 1046534
    %v1600 = vsel %vm1599, %v1598, %v1596
    %s1601 = scalar_lea.vmem [#allocation1], 498
    %v1602 = vld [vmem:[%s1601] sm:$0x80]
    %vm1603 = vcmask 1047559
    %v1604 = vsel %vm1603, %v1602, %v1600
    %1605 = vrot.lane.b32.xlu0 %v1604, 64
    %v1606 = vpop.permute.xlu0 %1605
    %vm1607 = vcmask 1048064
    %s1608 = scalar_lea.vmem [#allocation0], 224
    %1609 = vst.msk [vmem:[%s1608] sm:$0xff] %vm1607, %v1606
    %s1610 = scalar_lea.vmem [#allocation1], 513
    %s1611 = smov 3
    %v1612 = vld [vmem:[%s1610] ss:$-510 sm:%s1611]
    %s1613 = scalar_lea.vmem [#allocation1], 65
    %v1614 = vld [vmem:[%s1613] sm:$0x4]
    %vm1615 = vcmask 1042434
    %v1616 = vsel %vm1615, %v1614, %v1612
    %s1617 = scalar_lea.vmem [#allocation1], 128
    %v1618 = vld [vmem:[%s1617] sm:$0x8]
    %vm1619 = vcmask 1043459
    %v1620 = vsel %vm1619, %v1618, %v1616
    %s1621 = scalar_lea.vmem [#allocation1], 191
    %v1622 = vld [vmem:[%s1621] sm:$0x10]
    %vm1623 = vcmask 1044484
    %v1624 = vsel %vm1623, %v1622, %v1620
    %s1625 = scalar_lea.vmem [#allocation1], 254
    %v1626 = vld [vmem:[%s1625] sm:$0x20]
    %vm1627 = vcmask 1045509
    %v1628 = vsel %vm1627, %v1626, %v1624
    %s1629 = scalar_lea.vmem [#allocation1], 317
    %v1630 = vld [vmem:[%s1629] sm:$0x40]
    %vm1631 = vcmask 1046534
    %v1632 = vsel %vm1631, %v1630, %v1628
    %s1633 = scalar_lea.vmem [#allocation1], 380
    %v1634 = vld [vmem:[%s1633] sm:$0x80]
    %vm1635 = vcmask 1047559
    %v1636 = vsel %vm1635, %v1634, %v1632
    %1637 = vrot.lane.b32.xlu0 %v1636, 64
    %v1638 = vpop.permute.xlu0 %1637
    %vm1639 = vcmask 1048064
    %s1640 = scalar_lea.vmem [#allocation0], 256
    %1641 = vst.msk [vmem:[%s1640] ss:$-248 sm:$0x3] %vm1639, %v1638
    %s1642 = scalar_lea.vmem [#allocation0], 7
    %1643 = vst.msk [vmem:[%s1642] sm:$0xfc] %vm1639, %v1638
    %s1644 = scalar_lea.vmem [#allocation1], 521
    %s1645 = smov 3
    %v1646 = vld [vmem:[%s1644] ss:$-510 sm:%s1645]
    %s1647 = scalar_lea.vmem [#allocation1], 73
    %v1648 = vld [vmem:[%s1647] sm:$0x4]
    %vm1649 = vcmask 1042434
    %v1650 = vsel %vm1649, %v1648, %v1646
    %s1651 = scalar_lea.vmem [#allocation1], 136
    %v1652 = vld [vmem:[%s1651] sm:$0x8]
    %vm1653 = vcmask 1043459
    %v1654 = vsel %vm1653, %v1652, %v1650
    %s1655 = scalar_lea.vmem [#allocation1], 199
    %v1656 = vld [vmem:[%s1655] sm:$0x10]
    %vm1657 = vcmask 1044484
    %v1658 = vsel %vm1657, %v1656, %v1654
    %s1659 = scalar_lea.vmem [#allocation1], 262
    %v1660 = vld [vmem:[%s1659] sm:$0x20]
    %vm1661 = vcmask 1045509
    %v1662 = vsel %vm1661, %v1660, %v1658
    %s1663 = scalar_lea.vmem [#allocation1], 325
    %v1664 = vld [vmem:[%s1663] sm:$0x40]
    %vm1665 = vcmask 1046534
    %v1666 = vsel %vm1665, %v1664, %v1662
    %s1667 = scalar_lea.vmem [#allocation1], 388
    %v1668 = vld [vmem:[%s1667] sm:$0x80]
    %vm1669 = vcmask 1047559
    %v1670 = vsel %vm1669, %v1668, %v1666
    %1671 = vrot.lane.b32.xlu0 %v1670, 64
    %v1672 = vpop.permute.xlu0 %1671
    %vm1673 = vcmask 1048064
    %s1674 = scalar_lea.vmem [#allocation0], 288
    %1675 = vst.msk [vmem:[%s1674] ss:$-248 sm:$0x3] %vm1673, %v1672
    %s1676 = scalar_lea.vmem [#allocation0], 39
    %1677 = vst.msk [vmem:[%s1676] sm:$0xfc] %vm1673, %v1672
    %s1678 = scalar_lea.vmem [#allocation1], 529
    %s1679 = smov 3
    %v1680 = vld [vmem:[%s1678] ss:$-510 sm:%s1679]
    %s1681 = scalar_lea.vmem [#allocation1], 81
    %v1682 = vld [vmem:[%s1681] sm:$0x4]
    %vm1683 = vcmask 1042434
    %v1684 = vsel %vm1683, %v1682, %v1680
    %s1685 = scalar_lea.vmem [#allocation1], 144
    %v1686 = vld [vmem:[%s1685] sm:$0x8]
    %vm1687 = vcmask 1043459
    %v1688 = vsel %vm1687, %v1686, %v1684
    %s1689 = scalar_lea.vmem [#allocation1], 207
    %v1690 = vld [vmem:[%s1689] sm:$0x10]
    %vm1691 = vcmask 1044484
    %v1692 = vsel %vm1691, %v1690, %v1688
    %s1693 = scalar_lea.vmem [#allocation1], 270
    %v1694 = vld [vmem:[%s1693] sm:$0x20]
    %vm1695 = vcmask 1045509
    %v1696 = vsel %vm1695, %v1694, %v1692
    %s1697 = scalar_lea.vmem [#allocation1], 333
    %v1698 = vld [vmem:[%s1697] sm:$0x40]
    %vm1699 = vcmask 1046534
    %v1700 = vsel %vm1699, %v1698, %v1696
    %s1701 = scalar_lea.vmem [#allocation1], 396
    %v1702 = vld [vmem:[%s1701] sm:$0x80]
    %vm1703 = vcmask 1047559
    %v1704 = vsel %vm1703, %v1702, %v1700
    %1705 = vrot.lane.b32.xlu0 %v1704, 64
    %v1706 = vpop.permute.xlu0 %1705
    %vm1707 = vcmask 1048064
    %s1708 = scalar_lea.vmem [#allocation0], 320
    %1709 = vst.msk [vmem:[%s1708] ss:$-248 sm:$0x3] %vm1707, %v1706
    %s1710 = scalar_lea.vmem [#allocation0], 71
    %1711 = vst.msk [vmem:[%s1710] sm:$0xfc] %vm1707, %v1706
    %s1712 = scalar_lea.vmem [#allocation1], 537
    %s1713 = smov 3
    %v1714 = vld [vmem:[%s1712] ss:$-510 sm:%s1713]
    %s1715 = scalar_lea.vmem [#allocation1], 89
    %v1716 = vld [vmem:[%s1715] sm:$0x4]
    %vm1717 = vcmask 1042434
    %v1718 = vsel %vm1717, %v1716, %v1714
    %s1719 = scalar_lea.vmem [#allocation1], 152
    %v1720 = vld [vmem:[%s1719] sm:$0x8]
    %vm1721 = vcmask 1043459
    %v1722 = vsel %vm1721, %v1720, %v1718
    %s1723 = scalar_lea.vmem [#allocation1], 215
    %v1724 = vld [vmem:[%s1723] sm:$0x10]
    %vm1725 = vcmask 1044484
    %v1726 = vsel %vm1725, %v1724, %v1722
    %s1727 = scalar_lea.vmem [#allocation1], 278
    %v1728 = vld [vmem:[%s1727] sm:$0x20]
    %vm1729 = vcmask 1045509
    %v1730 = vsel %vm1729, %v1728, %v1726
    %s1731 = scalar_lea.vmem [#allocation1], 341
    %v1732 = vld [vmem:[%s1731] sm:$0x40]
    %vm1733 = vcmask 1046534
    %v1734 = vsel %vm1733, %v1732, %v1730
    %s1735 = scalar_lea.vmem [#allocation1], 404
    %v1736 = vld [vmem:[%s1735] sm:$0x80]
    %vm1737 = vcmask 1047559
    %v1738 = vsel %vm1737, %v1736, %v1734
    %1739 = vrot.lane.b32.xlu0 %v1738, 64
    %v1740 = vpop.permute.xlu0 %1739
    %vm1741 = vcmask 1048064
    %s1742 = scalar_lea.vmem [#allocation0], 352
    %1743 = vst.msk [vmem:[%s1742] ss:$-248 sm:$0x3] %vm1741, %v1740
    %s1744 = scalar_lea.vmem [#allocation0], 103
    %1745 = vst.msk [vmem:[%s1744] sm:$0xfc] %vm1741, %v1740
    %s1746 = scalar_lea.vmem [#allocation1], 545
    %s1747 = smov 3
    %v1748 = vld [vmem:[%s1746] ss:$-510 sm:%s1747]
    %s1749 = scalar_lea.vmem [#allocation1], 97
    %v1750 = vld [vmem:[%s1749] sm:$0x4]
    %vm1751 = vcmask 1042434
    %v1752 = vsel %vm1751, %v1750, %v1748
    %s1753 = scalar_lea.vmem [#allocation1], 160
    %v1754 = vld [vmem:[%s1753] sm:$0x8]
    %vm1755 = vcmask 1043459
    %v1756 = vsel %vm1755, %v1754, %v1752
    %s1757 = scalar_lea.vmem [#allocation1], 223
    %v1758 = vld [vmem:[%s1757] sm:$0x10]
    %vm1759 = vcmask 1044484
    %v1760 = vsel %vm1759, %v1758, %v1756
    %s1761 = scalar_lea.vmem [#allocation1], 286
    %v1762 = vld [vmem:[%s1761] sm:$0x20]
    %vm1763 = vcmask 1045509
    %v1764 = vsel %vm1763, %v1762, %v1760
    %s1765 = scalar_lea.vmem [#allocation1], 349
    %v1766 = vld [vmem:[%s1765] sm:$0x40]
    %vm1767 = vcmask 1046534
    %v1768 = vsel %vm1767, %v1766, %v1764
    %s1769 = scalar_lea.vmem [#allocation1], 412
    %v1770 = vld [vmem:[%s1769] sm:$0x80]
    %vm1771 = vcmask 1047559
    %v1772 = vsel %vm1771, %v1770, %v1768
    %1773 = vrot.lane.b32.xlu0 %v1772, 64
    %v1774 = vpop.permute.xlu0 %1773
    %vm1775 = vcmask 1048064
    %s1776 = scalar_lea.vmem [#allocation0], 384
    %1777 = vst.msk [vmem:[%s1776] ss:$-248 sm:$0x3] %vm1775, %v1774
    %s1778 = scalar_lea.vmem [#allocation0], 135
    %1779 = vst.msk [vmem:[%s1778] sm:$0xfc] %vm1775, %v1774
    %s1780 = scalar_lea.vmem [#allocation1], 553
    %s1781 = smov 3
    %v1782 = vld [vmem:[%s1780] ss:$-510 sm:%s1781]
    %s1783 = scalar_lea.vmem [#allocation1], 105
    %v1784 = vld [vmem:[%s1783] sm:$0x4]
    %vm1785 = vcmask 1042434
    %v1786 = vsel %vm1785, %v1784, %v1782
    %s1787 = scalar_lea.vmem [#allocation1], 168
    %v1788 = vld [vmem:[%s1787] sm:$0x8]
    %vm1789 = vcmask 1043459
    %v1790 = vsel %vm1789, %v1788, %v1786
    %s1791 = scalar_lea.vmem [#allocation1], 231
    %v1792 = vld [vmem:[%s1791] sm:$0x10]
    %vm1793 = vcmask 1044484
    %v1794 = vsel %vm1793, %v1792, %v1790
    %s1795 = scalar_lea.vmem [#allocation1], 294
    %v1796 = vld [vmem:[%s1795] sm:$0x20]
    %vm1797 = vcmask 1045509
    %v1798 = vsel %vm1797, %v1796, %v1794
    %s1799 = scalar_lea.vmem [#allocation1], 357
    %v1800 = vld [vmem:[%s1799] sm:$0x40]
    %vm1801 = vcmask 1046534
    %v1802 = vsel %vm1801, %v1800, %v1798
    %s1803 = scalar_lea.vmem [#allocation1], 420
    %v1804 = vld [vmem:[%s1803] sm:$0x80]
    %vm1805 = vcmask 1047559
    %v1806 = vsel %vm1805, %v1804, %v1802
    %1807 = vrot.lane.b32.xlu0 %v1806, 64
    %v1808 = vpop.permute.xlu0 %1807
    %vm1809 = vcmask 1048064
    %s1810 = scalar_lea.vmem [#allocation0], 416
    %1811 = vst.msk [vmem:[%s1810] ss:$-248 sm:$0x3] %vm1809, %v1808
    %s1812 = scalar_lea.vmem [#allocation0], 167
    %1813 = vst.msk [vmem:[%s1812] sm:$0xfc] %vm1809, %v1808
    %s1814 = scalar_lea.vmem [#allocation1], 561
    %s1815 = smov 3
    %v1816 = vld [vmem:[%s1814] ss:$-510 sm:%s1815]
    %s1817 = scalar_lea.vmem [#allocation1], 113
    %v1818 = vld [vmem:[%s1817] sm:$0x4]
    %vm1819 = vcmask 1042434
    %v1820 = vsel %vm1819, %v1818, %v1816
    %s1821 = scalar_lea.vmem [#allocation1], 176
    %v1822 = vld [vmem:[%s1821] sm:$0x8]
    %vm1823 = vcmask 1043459
    %v1824 = vsel %vm1823, %v1822, %v1820
    %s1825 = scalar_lea.vmem [#allocation1], 239
    %v1826 = vld [vmem:[%s1825] sm:$0x10]
    %vm1827 = vcmask 1044484
    %v1828 = vsel %vm1827, %v1826, %v1824
    %s1829 = scalar_lea.vmem [#allocation1], 302
    %v1830 = vld [vmem:[%s1829] sm:$0x20]
    %vm1831 = vcmask 1045509
    %v1832 = vsel %vm1831, %v1830, %v1828
    %s1833 = scalar_lea.vmem [#allocation1], 365
    %v1834 = vld [vmem:[%s1833] sm:$0x40]
    %vm1835 = vcmask 1046534
    %v1836 = vsel %vm1835, %v1834, %v1832
    %s1837 = scalar_lea.vmem [#allocation1], 428
    %v1838 = vld [vmem:[%s1837] sm:$0x80]
    %vm1839 = vcmask 1047559
    %v1840 = vsel %vm1839, %v1838, %v1836
    %1841 = vrot.lane.b32.xlu0 %v1840, 64
    %v1842 = vpop.permute.xlu0 %1841
    %vm1843 = vcmask 1048064
    %s1844 = scalar_lea.vmem [#allocation0], 448
    %1845 = vst.msk [vmem:[%s1844] ss:$-248 sm:$0x3] %vm1843, %v1842
    %s1846 = scalar_lea.vmem [#allocation0], 199
    %1847 = vst.msk [vmem:[%s1846] sm:$0xfc] %vm1843, %v1842
    %s1848 = scalar_lea.vmem [#allocation1], 569
    %s1849 = smov 3
    %v1850 = vld [vmem:[%s1848] ss:$-510 sm:%s1849]
    %s1851 = scalar_lea.vmem [#allocation1], 121
    %v1852 = vld [vmem:[%s1851] sm:$0x4]
    %vm1853 = vcmask 1042434
    %v1854 = vsel %vm1853, %v1852, %v1850
    %s1855 = scalar_lea.vmem [#allocation1], 184
    %v1856 = vld [vmem:[%s1855] sm:$0x8]
    %vm1857 = vcmask 1043459
    %v1858 = vsel %vm1857, %v1856, %v1854
    %s1859 = scalar_lea.vmem [#allocation1], 247
    %v1860 = vld [vmem:[%s1859] sm:$0x10]
    %vm1861 = vcmask 1044484
    %v1862 = vsel %vm1861, %v1860, %v1858
    %s1863 = scalar_lea.vmem [#allocation1], 310
    %v1864 = vld [vmem:[%s1863] sm:$0x20]
    %vm1865 = vcmask 1045509
    %v1866 = vsel %vm1865, %v1864, %v1862
    %s1867 = scalar_lea.vmem [#allocation1], 373
    %v1868 = vld [vmem:[%s1867] sm:$0x40]
    %vm1869 = vcmask 1046534
    %v1870 = vsel %vm1869, %v1868, %v1866
    %s1871 = scalar_lea.vmem [#allocation1], 436
    %v1872 = vld [vmem:[%s1871] sm:$0x80]
    %vm1873 = vcmask 1047559
    %v1874 = vsel %vm1873, %v1872, %v1870
    %1875 = vrot.lane.b32.xlu0 %v1874, 64
    %v1876 = vpop.permute.xlu0 %1875
    %vm1877 = vcmask 1048064
    %s1878 = scalar_lea.vmem [#allocation0], 480
    %1879 = vst.msk [vmem:[%s1878] ss:$-248 sm:$0x3] %vm1877, %v1876
    %s1880 = scalar_lea.vmem [#allocation0], 231
    %1881 = vst.msk [vmem:[%s1880] sm:$0xfc] %vm1877, %v1876
    %s1882 = scalar_lea.vmem [#allocation1], 515
    %v1883 = vld [vmem:[%s1882] sm:$0x1]
    %s1884 = scalar_lea.vmem [#allocation1], 897
    %s1885 = smov 6
    %v1886 = vld [vmem:[%s1884] ss:$-446 sm:%s1885]
    %vm1887 = vcmask 1042433
    %v1888 = vsel %vm1887, %v1886, %v1883
    %s1889 = scalar_lea.vmem [#allocation1], 66
    %v1890 = vld [vmem:[%s1889] sm:$0x8]
    %vm1891 = vcmask 1043459
    %v1892 = vsel %vm1891, %v1890, %v1888
    %s1893 = scalar_lea.vmem [#allocation1], 129
    %v1894 = vld [vmem:[%s1893] sm:$0x10]
    %vm1895 = vcmask 1044484
    %v1896 = vsel %vm1895, %v1894, %v1892
    %s1897 = scalar_lea.vmem [#allocation1], 192
    %v1898 = vld [vmem:[%s1897] sm:$0x20]
    %vm1899 = vcmask 1045509
    %v1900 = vsel %vm1899, %v1898, %v1896
    %s1901 = scalar_lea.vmem [#allocation1], 255
    %v1902 = vld [vmem:[%s1901] sm:$0x40]
    %vm1903 = vcmask 1046534
    %v1904 = vsel %vm1903, %v1902, %v1900
    %s1905 = scalar_lea.vmem [#allocation1], 318
    %v1906 = vld [vmem:[%s1905] sm:$0x80]
    %vm1907 = vcmask 1047559
    %v1908 = vsel %vm1907, %v1906, %v1904
    %1909 = vrot.lane.b32.xlu0 %v1908, 64
    %v1910 = vpop.permute.xlu0 %1909
    %vm1911 = vcmask 1048064
    %s1912 = scalar_lea.vmem [#allocation0], 264
    %1913 = vst.msk [vmem:[%s1912] ss:$-249 sm:$0x3] %vm1911, %v1910
    %s1914 = scalar_lea.vmem [#allocation0], 14
    %1915 = vst.msk [vmem:[%s1914] sm:$0xfc] %vm1911, %v1910
    %s1916 = scalar_lea.vmem [#allocation1], 523
    %v1917 = vld [vmem:[%s1916] sm:$0x1]
    %s1918 = scalar_lea.vmem [#allocation1], 905
    %s1919 = smov 6
    %v1920 = vld [vmem:[%s1918] ss:$-446 sm:%s1919]
    %vm1921 = vcmask 1042433
    %v1922 = vsel %vm1921, %v1920, %v1917
    %s1923 = scalar_lea.vmem [#allocation1], 74
    %v1924 = vld [vmem:[%s1923] sm:$0x8]
    %vm1925 = vcmask 1043459
    %v1926 = vsel %vm1925, %v1924, %v1922
    %s1927 = scalar_lea.vmem [#allocation1], 137
    %v1928 = vld [vmem:[%s1927] sm:$0x10]
    %vm1929 = vcmask 1044484
    %v1930 = vsel %vm1929, %v1928, %v1926
    %s1931 = scalar_lea.vmem [#allocation1], 200
    %v1932 = vld [vmem:[%s1931] sm:$0x20]
    %vm1933 = vcmask 1045509
    %v1934 = vsel %vm1933, %v1932, %v1930
    %s1935 = scalar_lea.vmem [#allocation1], 263
    %v1936 = vld [vmem:[%s1935] sm:$0x40]
    %vm1937 = vcmask 1046534
    %v1938 = vsel %vm1937, %v1936, %v1934
    %s1939 = scalar_lea.vmem [#allocation1], 326
    %v1940 = vld [vmem:[%s1939] sm:$0x80]
    %vm1941 = vcmask 1047559
    %v1942 = vsel %vm1941, %v1940, %v1938
    %1943 = vrot.lane.b32.xlu0 %v1942, 64
    %v1944 = vpop.permute.xlu0 %1943
    %vm1945 = vcmask 1048064
    %s1946 = scalar_lea.vmem [#allocation0], 296
    %1947 = vst.msk [vmem:[%s1946] ss:$-249 sm:$0x3] %vm1945, %v1944
    %s1948 = scalar_lea.vmem [#allocation0], 46
    %1949 = vst.msk [vmem:[%s1948] sm:$0xfc] %vm1945, %v1944
    %s1950 = scalar_lea.vmem [#allocation1], 531
    %v1951 = vld [vmem:[%s1950] sm:$0x1]
    %s1952 = scalar_lea.vmem [#allocation1], 913
    %s1953 = smov 6
    %v1954 = vld [vmem:[%s1952] ss:$-446 sm:%s1953]
    %vm1955 = vcmask 1042433
    %v1956 = vsel %vm1955, %v1954, %v1951
    %s1957 = scalar_lea.vmem [#allocation1], 82
    %v1958 = vld [vmem:[%s1957] sm:$0x8]
    %vm1959 = vcmask 1043459
    %v1960 = vsel %vm1959, %v1958, %v1956
    %s1961 = scalar_lea.vmem [#allocation1], 145
    %v1962 = vld [vmem:[%s1961] sm:$0x10]
    %vm1963 = vcmask 1044484
    %v1964 = vsel %vm1963, %v1962, %v1960
    %s1965 = scalar_lea.vmem [#allocation1], 208
    %v1966 = vld [vmem:[%s1965] sm:$0x20]
    %vm1967 = vcmask 1045509
    %v1968 = vsel %vm1967, %v1966, %v1964
    %s1969 = scalar_lea.vmem [#allocation1], 271
    %v1970 = vld [vmem:[%s1969] sm:$0x40]
    %vm1971 = vcmask 1046534
    %v1972 = vsel %vm1971, %v1970, %v1968
    %s1973 = scalar_lea.vmem [#allocation1], 334
    %v1974 = vld [vmem:[%s1973] sm:$0x80]
    %vm1975 = vcmask 1047559
    %v1976 = vsel %vm1975, %v1974, %v1972
    %1977 = vrot.lane.b32.xlu0 %v1976, 64
    %v1978 = vpop.permute.xlu0 %1977
    %vm1979 = vcmask 1048064
    %s1980 = scalar_lea.vmem [#allocation0], 328
    %1981 = vst.msk [vmem:[%s1980] ss:$-249 sm:$0x3] %vm1979, %v1978
    %s1982 = scalar_lea.vmem [#allocation0], 78
    %1983 = vst.msk [vmem:[%s1982] sm:$0xfc] %vm1979, %v1978
    %s1984 = scalar_lea.vmem [#allocation1], 539
    %v1985 = vld [vmem:[%s1984] sm:$0x1]
    %s1986 = scalar_lea.vmem [#allocation1], 921
    %s1987 = smov 6
    %v1988 = vld [vmem:[%s1986] ss:$-446 sm:%s1987]
    %vm1989 = vcmask 1042433
    %v1990 = vsel %vm1989, %v1988, %v1985
    %s1991 = scalar_lea.vmem [#allocation1], 90
    %v1992 = vld [vmem:[%s1991] sm:$0x8]
    %vm1993 = vcmask 1043459
    %v1994 = vsel %vm1993, %v1992, %v1990
    %s1995 = scalar_lea.vmem [#allocation1], 153
    %v1996 = vld [vmem:[%s1995] sm:$0x10]
    %vm1997 = vcmask 1044484
    %v1998 = vsel %vm1997, %v1996, %v1994
    %s1999 = scalar_lea.vmem [#allocation1], 216
    %v2000 = vld [vmem:[%s1999] sm:$0x20]
    %vm2001 = vcmask 1045509
    %v2002 = vsel %vm2001, %v2000, %v1998
    %s2003 = scalar_lea.vmem [#allocation1], 279
    %v2004 = vld [vmem:[%s2003] sm:$0x40]
    %vm2005 = vcmask 1046534
    %v2006 = vsel %vm2005, %v2004, %v2002
    %s2007 = scalar_lea.vmem [#allocation1], 342
    %v2008 = vld [vmem:[%s2007] sm:$0x80]
    %vm2009 = vcmask 1047559
    %v2010 = vsel %vm2009, %v2008, %v2006
    %2011 = vrot.lane.b32.xlu0 %v2010, 64
    %v2012 = vpop.permute.xlu0 %2011
    %vm2013 = vcmask 1048064
    %s2014 = scalar_lea.vmem [#allocation0], 360
    %2015 = vst.msk [vmem:[%s2014] ss:$-249 sm:$0x3] %vm2013, %v2012
    %s2016 = scalar_lea.vmem [#allocation0], 110
    %2017 = vst.msk [vmem:[%s2016] sm:$0xfc] %vm2013, %v2012
    %s2018 = scalar_lea.vmem [#allocation1], 547
    %v2019 = vld [vmem:[%s2018] sm:$0x1]
    %s2020 = scalar_lea.vmem [#allocation1], 929
    %s2021 = smov 6
    %v2022 = vld [vmem:[%s2020] ss:$-446 sm:%s2021]
    %vm2023 = vcmask 1042433
    %v2024 = vsel %vm2023, %v2022, %v2019
    %s2025 = scalar_lea.vmem [#allocation1], 98
    %v2026 = vld [vmem:[%s2025] sm:$0x8]
    %vm2027 = vcmask 1043459
    %v2028 = vsel %vm2027, %v2026, %v2024
    %s2029 = scalar_lea.vmem [#allocation1], 161
    %v2030 = vld [vmem:[%s2029] sm:$0x10]
    %vm2031 = vcmask 1044484
    %v2032 = vsel %vm2031, %v2030, %v2028
    %s2033 = scalar_lea.vmem [#allocation1], 224
    %v2034 = vld [vmem:[%s2033] sm:$0x20]
    %vm2035 = vcmask 1045509
    %v2036 = vsel %vm2035, %v2034, %v2032
    %s2037 = scalar_lea.vmem [#allocation1], 287
    %v2038 = vld [vmem:[%s2037] sm:$0x40]
    %vm2039 = vcmask 1046534
    %v2040 = vsel %vm2039, %v2038, %v2036
    %s2041 = scalar_lea.vmem [#allocation1], 350
    %v2042 = vld [vmem:[%s2041] sm:$0x80]
    %vm2043 = vcmask 1047559
    %v2044 = vsel %vm2043, %v2042, %v2040
    %2045 = vrot.lane.b32.xlu0 %v2044, 64
    %v2046 = vpop.permute.xlu0 %2045
    %vm2047 = vcmask 1048064
    %s2048 = scalar_lea.vmem [#allocation0], 392
    %2049 = vst.msk [vmem:[%s2048] ss:$-249 sm:$0x3] %vm2047, %v2046
    %s2050 = scalar_lea.vmem [#allocation0], 142
    %2051 = vst.msk [vmem:[%s2050] sm:$0xfc] %vm2047, %v2046
    %s2052 = scalar_lea.vmem [#allocation1], 555
    %v2053 = vld [vmem:[%s2052] sm:$0x1]
    %s2054 = scalar_lea.vmem [#allocation1], 937
    %s2055 = smov 6
    %v2056 = vld [vmem:[%s2054] ss:$-446 sm:%s2055]
    %vm2057 = vcmask 1042433
    %v2058 = vsel %vm2057, %v2056, %v2053
    %s2059 = scalar_lea.vmem [#allocation1], 106
    %v2060 = vld [vmem:[%s2059] sm:$0x8]
    %vm2061 = vcmask 1043459
    %v2062 = vsel %vm2061, %v2060, %v2058
    %s2063 = scalar_lea.vmem [#allocation1], 169
    %v2064 = vld [vmem:[%s2063] sm:$0x10]
    %vm2065 = vcmask 1044484
    %v2066 = vsel %vm2065, %v2064, %v2062
    %s2067 = scalar_lea.vmem [#allocation1], 232
    %v2068 = vld [vmem:[%s2067] sm:$0x20]
    %vm2069 = vcmask 1045509
    %v2070 = vsel %vm2069, %v2068, %v2066
    %s2071 = scalar_lea.vmem [#allocation1], 295
    %v2072 = vld [vmem:[%s2071] sm:$0x40]
    %vm2073 = vcmask 1046534
    %v2074 = vsel %vm2073, %v2072, %v2070
    %s2075 = scalar_lea.vmem [#allocation1], 358
    %v2076 = vld [vmem:[%s2075] sm:$0x80]
    %vm2077 = vcmask 1047559
    %v2078 = vsel %vm2077, %v2076, %v2074
    %2079 = vrot.lane.b32.xlu0 %v2078, 64
    %v2080 = vpop.permute.xlu0 %2079
    %vm2081 = vcmask 1048064
    %s2082 = scalar_lea.vmem [#allocation0], 424
    %2083 = vst.msk [vmem:[%s2082] ss:$-249 sm:$0x3] %vm2081, %v2080
    %s2084 = scalar_lea.vmem [#allocation0], 174
    %2085 = vst.msk [vmem:[%s2084] sm:$0xfc] %vm2081, %v2080
    %s2086 = scalar_lea.vmem [#allocation1], 563
    %v2087 = vld [vmem:[%s2086] sm:$0x1]
    %s2088 = scalar_lea.vmem [#allocation1], 945
    %s2089 = smov 6
    %v2090 = vld [vmem:[%s2088] ss:$-446 sm:%s2089]
    %vm2091 = vcmask 1042433
    %v2092 = vsel %vm2091, %v2090, %v2087
    %s2093 = scalar_lea.vmem [#allocation1], 114
    %v2094 = vld [vmem:[%s2093] sm:$0x8]
    %vm2095 = vcmask 1043459
    %v2096 = vsel %vm2095, %v2094, %v2092
    %s2097 = scalar_lea.vmem [#allocation1], 177
    %v2098 = vld [vmem:[%s2097] sm:$0x10]
    %vm2099 = vcmask 1044484
    %v2100 = vsel %vm2099, %v2098, %v2096
    %s2101 = scalar_lea.vmem [#allocation1], 240
    %v2102 = vld [vmem:[%s2101] sm:$0x20]
    %vm2103 = vcmask 1045509
    %v2104 = vsel %vm2103, %v2102, %v2100
    %s2105 = scalar_lea.vmem [#allocation1], 303
    %v2106 = vld [vmem:[%s2105] sm:$0x40]
    %vm2107 = vcmask 1046534
    %v2108 = vsel %vm2107, %v2106, %v2104
    %s2109 = scalar_lea.vmem [#allocation1], 366
    %v2110 = vld [vmem:[%s2109] sm:$0x80]
    %vm2111 = vcmask 1047559
    %v2112 = vsel %vm2111, %v2110, %v2108
    %2113 = vrot.lane.b32.xlu0 %v2112, 64
    %v2114 = vpop.permute.xlu0 %2113
    %vm2115 = vcmask 1048064
    %s2116 = scalar_lea.vmem [#allocation0], 456
    %2117 = vst.msk [vmem:[%s2116] ss:$-249 sm:$0x3] %vm2115, %v2114
    %s2118 = scalar_lea.vmem [#allocation0], 206
    %2119 = vst.msk [vmem:[%s2118] sm:$0xfc] %vm2115, %v2114
    %s2120 = scalar_lea.vmem [#allocation1], 571
    %v2121 = vld [vmem:[%s2120] sm:$0x1]
    %s2122 = scalar_lea.vmem [#allocation1], 953
    %s2123 = smov 6
    %v2124 = vld [vmem:[%s2122] ss:$-446 sm:%s2123]
    %vm2125 = vcmask 1042433
    %v2126 = vsel %vm2125, %v2124, %v2121
    %s2127 = scalar_lea.vmem [#allocation1], 122
    %v2128 = vld [vmem:[%s2127] sm:$0x8]
    %vm2129 = vcmask 1043459
    %v2130 = vsel %vm2129, %v2128, %v2126
    %s2131 = scalar_lea.vmem [#allocation1], 185
    %v2132 = vld [vmem:[%s2131] sm:$0x10]
    %vm2133 = vcmask 1044484
    %v2134 = vsel %vm2133, %v2132, %v2130
    %s2135 = scalar_lea.vmem [#allocation1], 248
    %v2136 = vld [vmem:[%s2135] sm:$0x20]
    %vm2137 = vcmask 1045509
    %v2138 = vsel %vm2137, %v2136, %v2134
    %s2139 = scalar_lea.vmem [#allocation1], 311
    %v2140 = vld [vmem:[%s2139] sm:$0x40]
    %vm2141 = vcmask 1046534
    %v2142 = vsel %vm2141, %v2140, %v2138
    %s2143 = scalar_lea.vmem [#allocation1], 374
    %v2144 = vld [vmem:[%s2143] sm:$0x80]
    %vm2145 = vcmask 1047559
    %v2146 = vsel %vm2145, %v2144, %v2142
    %2147 = vrot.lane.b32.xlu0 %v2146, 64
    %v2148 = vpop.permute.xlu0 %2147
    %vm2149 = vcmask 1048064
    %s2150 = scalar_lea.vmem [#allocation0], 488
    %2151 = vst.msk [vmem:[%s2150] ss:$-249 sm:$0x3] %vm2149, %v2148
    %s2152 = scalar_lea.vmem [#allocation0], 238
    %2153 = vst.msk [vmem:[%s2152] sm:$0xfc] %vm2149, %v2148
    %s2154 = scalar_lea.vmem [#allocation1], 517
    %v2155 = vld [vmem:[%s2154] sm:$0x1]
    %s2156 = scalar_lea.vmem [#allocation1], 388
    %v2157 = vld [vmem:[%s2156] sm:$0x2]
    %vm2158 = vcmask 1041409
    %v2159 = vsel %vm2158, %v2157, %v2155
    %s2160 = scalar_lea.vmem [#allocation1], 1345
    %s2161 = smov 12
    %v2162 = vld [vmem:[%s2160] ss:$-446 sm:%s2161]
    %vm2163 = vcmask 1043458
    %v2164 = vsel %vm2163, %v2162, %v2159
    %s2165 = scalar_lea.vmem [#allocation1], 67
    %v2166 = vld [vmem:[%s2165] sm:$0x10]
    %vm2167 = vcmask 1044484
    %v2168 = vsel %vm2167, %v2166, %v2164
    %s2169 = scalar_lea.vmem [#allocation1], 130
    %v2170 = vld [vmem:[%s2169] sm:$0x20]
    %vm2171 = vcmask 1045509
    %v2172 = vsel %vm2171, %v2170, %v2168
    %s2173 = scalar_lea.vmem [#allocation1], 193
    %v2174 = vld [vmem:[%s2173] sm:$0x40]
    %vm2175 = vcmask 1046534
    %v2176 = vsel %vm2175, %v2174, %v2172
    %s2177 = scalar_lea.vmem [#allocation1], 256
    %v2178 = vld [vmem:[%s2177] sm:$0x80]
    %vm2179 = vcmask 1047559
    %v2180 = vsel %vm2179, %v2178, %v2176
    %2181 = vrot.lane.b32.xlu0 %v2180, 64
    %v2182 = vpop.permute.xlu0 %2181
    %vm2183 = vcmask 1048064
    %s2184 = scalar_lea.vmem [#allocation0], 272
    %2185 = vst.msk [vmem:[%s2184] ss:$-250 sm:$0x3] %vm2183, %v2182
    %s2186 = scalar_lea.vmem [#allocation0], 21
    %2187 = vst.msk [vmem:[%s2186] sm:$0xfc] %vm2183, %v2182
    %s2188 = scalar_lea.vmem [#allocation1], 525
    %v2189 = vld [vmem:[%s2188] sm:$0x1]
    %s2190 = scalar_lea.vmem [#allocation1], 396
    %v2191 = vld [vmem:[%s2190] sm:$0x2]
    %vm2192 = vcmask 1041409
    %v2193 = vsel %vm2192, %v2191, %v2189
    %s2194 = scalar_lea.vmem [#allocation1], 1353
    %s2195 = smov 12
    %v2196 = vld [vmem:[%s2194] ss:$-446 sm:%s2195]
    %vm2197 = vcmask 1043458
    %v2198 = vsel %vm2197, %v2196, %v2193
    %s2199 = scalar_lea.vmem [#allocation1], 75
    %v2200 = vld [vmem:[%s2199] sm:$0x10]
    %vm2201 = vcmask 1044484
    %v2202 = vsel %vm2201, %v2200, %v2198
    %s2203 = scalar_lea.vmem [#allocation1], 138
    %v2204 = vld [vmem:[%s2203] sm:$0x20]
    %vm2205 = vcmask 1045509
    %v2206 = vsel %vm2205, %v2204, %v2202
    %s2207 = scalar_lea.vmem [#allocation1], 201
    %v2208 = vld [vmem:[%s2207] sm:$0x40]
    %vm2209 = vcmask 1046534
    %v2210 = vsel %vm2209, %v2208, %v2206
    %s2211 = scalar_lea.vmem [#allocation1], 264
    %v2212 = vld [vmem:[%s2211] sm:$0x80]
    %vm2213 = vcmask 1047559
    %v2214 = vsel %vm2213, %v2212, %v2210
    %2215 = vrot.lane.b32.xlu0 %v2214, 64
    %v2216 = vpop.permute.xlu0 %2215
    %vm2217 = vcmask 1048064
    %s2218 = scalar_lea.vmem [#allocation0], 304
    %2219 = vst.msk [vmem:[%s2218] ss:$-250 sm:$0x3] %vm2217, %v2216
    %s2220 = scalar_lea.vmem [#allocation0], 53
    %2221 = vst.msk [vmem:[%s2220] sm:$0xfc] %vm2217, %v2216
    %s2222 = scalar_lea.vmem [#allocation1], 533
    %v2223 = vld [vmem:[%s2222] sm:$0x1]
    %s2224 = scalar_lea.vmem [#allocation1], 404
    %v2225 = vld [vmem:[%s2224] sm:$0x2]
    %vm2226 = vcmask 1041409
    %v2227 = vsel %vm2226, %v2225, %v2223
    %s2228 = scalar_lea.vmem [#allocation1], 1361
    %s2229 = smov 12
    %v2230 = vld [vmem:[%s2228] ss:$-446 sm:%s2229]
    %vm2231 = vcmask 1043458
    %v2232 = vsel %vm2231, %v2230, %v2227
    %s2233 = scalar_lea.vmem [#allocation1], 83
    %v2234 = vld [vmem:[%s2233] sm:$0x10]
    %vm2235 = vcmask 1044484
    %v2236 = vsel %vm2235, %v2234, %v2232
    %s2237 = scalar_lea.vmem [#allocation1], 146
    %v2238 = vld [vmem:[%s2237] sm:$0x20]
    %vm2239 = vcmask 1045509
    %v2240 = vsel %vm2239, %v2238, %v2236
    %s2241 = scalar_lea.vmem [#allocation1], 209
    %v2242 = vld [vmem:[%s2241] sm:$0x40]
    %vm2243 = vcmask 1046534
    %v2244 = vsel %vm2243, %v2242, %v2240
    %s2245 = scalar_lea.vmem [#allocation1], 272
    %v2246 = vld [vmem:[%s2245] sm:$0x80]
    %vm2247 = vcmask 1047559
    %v2248 = vsel %vm2247, %v2246, %v2244
    %2249 = vrot.lane.b32.xlu0 %v2248, 64
    %v2250 = vpop.permute.xlu0 %2249
    %vm2251 = vcmask 1048064
    %s2252 = scalar_lea.vmem [#allocation0], 336
    %2253 = vst.msk [vmem:[%s2252] ss:$-250 sm:$0x3] %vm2251, %v2250
    %s2254 = scalar_lea.vmem [#allocation0], 85
    %2255 = vst.msk [vmem:[%s2254] sm:$0xfc] %vm2251, %v2250
    %s2256 = scalar_lea.vmem [#allocation1], 541
    %v2257 = vld [vmem:[%s2256] sm:$0x1]
    %s2258 = scalar_lea.vmem [#allocation1], 412
    %v2259 = vld [vmem:[%s2258] sm:$0x2]
    %vm2260 = vcmask 1041409
    %v2261 = vsel %vm2260, %v2259, %v2257
    %s2262 = scalar_lea.vmem [#allocation1], 1369
    %s2263 = smov 12
    %v2264 = vld [vmem:[%s2262] ss:$-446 sm:%s2263]
    %vm2265 = vcmask 1043458
    %v2266 = vsel %vm2265, %v2264, %v2261
    %s2267 = scalar_lea.vmem [#allocation1], 91
    %v2268 = vld [vmem:[%s2267] sm:$0x10]
    %vm2269 = vcmask 1044484
    %v2270 = vsel %vm2269, %v2268, %v2266
    %s2271 = scalar_lea.vmem [#allocation1], 154
    %v2272 = vld [vmem:[%s2271] sm:$0x20]
    %vm2273 = vcmask 1045509
    %v2274 = vsel %vm2273, %v2272, %v2270
    %s2275 = scalar_lea.vmem [#allocation1], 217
    %v2276 = vld [vmem:[%s2275] sm:$0x40]
    %vm2277 = vcmask 1046534
    %v2278 = vsel %vm2277, %v2276, %v2274
    %s2279 = scalar_lea.vmem [#allocation1], 280
    %v2280 = vld [vmem:[%s2279] sm:$0x80]
    %vm2281 = vcmask 1047559
    %v2282 = vsel %vm2281, %v2280, %v2278
    %2283 = vrot.lane.b32.xlu0 %v2282, 64
    %v2284 = vpop.permute.xlu0 %2283
    %vm2285 = vcmask 1048064
    %s2286 = scalar_lea.vmem [#allocation0], 368
    %2287 = vst.msk [vmem:[%s2286] ss:$-250 sm:$0x3] %vm2285, %v2284
    %s2288 = scalar_lea.vmem [#allocation0], 117
    %2289 = vst.msk [vmem:[%s2288] sm:$0xfc] %vm2285, %v2284
    %s2290 = scalar_lea.vmem [#allocation1], 549
    %v2291 = vld [vmem:[%s2290] sm:$0x1]
    %s2292 = scalar_lea.vmem [#allocation1], 420
    %v2293 = vld [vmem:[%s2292] sm:$0x2]
    %vm2294 = vcmask 1041409
    %v2295 = vsel %vm2294, %v2293, %v2291
    %s2296 = scalar_lea.vmem [#allocation1], 1377
    %s2297 = smov 12
    %v2298 = vld [vmem:[%s2296] ss:$-446 sm:%s2297]
    %vm2299 = vcmask 1043458
    %v2300 = vsel %vm2299, %v2298, %v2295
    %s2301 = scalar_lea.vmem [#allocation1], 99
    %v2302 = vld [vmem:[%s2301] sm:$0x10]
    %vm2303 = vcmask 1044484
    %v2304 = vsel %vm2303, %v2302, %v2300
    %s2305 = scalar_lea.vmem [#allocation1], 162
    %v2306 = vld [vmem:[%s2305] sm:$0x20]
    %vm2307 = vcmask 1045509
    %v2308 = vsel %vm2307, %v2306, %v2304
    %s2309 = scalar_lea.vmem [#allocation1], 225
    %v2310 = vld [vmem:[%s2309] sm:$0x40]
    %vm2311 = vcmask 1046534
    %v2312 = vsel %vm2311, %v2310, %v2308
    %s2313 = scalar_lea.vmem [#allocation1], 288
    %v2314 = vld [vmem:[%s2313] sm:$0x80]
    %vm2315 = vcmask 1047559
    %v2316 = vsel %vm2315, %v2314, %v2312
    %2317 = vrot.lane.b32.xlu0 %v2316, 64
    %v2318 = vpop.permute.xlu0 %2317
    %vm2319 = vcmask 1048064
    %s2320 = scalar_lea.vmem [#allocation0], 400
    %2321 = vst.msk [vmem:[%s2320] ss:$-250 sm:$0x3] %vm2319, %v2318
    %s2322 = scalar_lea.vmem [#allocation0], 149
    %2323 = vst.msk [vmem:[%s2322] sm:$0xfc] %vm2319, %v2318
    %s2324 = scalar_lea.vmem [#allocation1], 557
    %v2325 = vld [vmem:[%s2324] sm:$0x1]
    %s2326 = scalar_lea.vmem [#allocation1], 428
    %v2327 = vld [vmem:[%s2326] sm:$0x2]
    %vm2328 = vcmask 1041409
    %v2329 = vsel %vm2328, %v2327, %v2325
    %s2330 = scalar_lea.vmem [#allocation1], 1385
    %s2331 = smov 12
    %v2332 = vld [vmem:[%s2330] ss:$-446 sm:%s2331]
    %vm2333 = vcmask 1043458
    %v2334 = vsel %vm2333, %v2332, %v2329
    %s2335 = scalar_lea.vmem [#allocation1], 107
    %v2336 = vld [vmem:[%s2335] sm:$0x10]
    %vm2337 = vcmask 1044484
    %v2338 = vsel %vm2337, %v2336, %v2334
    %s2339 = scalar_lea.vmem [#allocation1], 170
    %v2340 = vld [vmem:[%s2339] sm:$0x20]
    %vm2341 = vcmask 1045509
    %v2342 = vsel %vm2341, %v2340, %v2338
    %s2343 = scalar_lea.vmem [#allocation1], 233
    %v2344 = vld [vmem:[%s2343] sm:$0x40]
    %vm2345 = vcmask 1046534
    %v2346 = vsel %vm2345, %v2344, %v2342
    %s2347 = scalar_lea.vmem [#allocation1], 296
    %v2348 = vld [vmem:[%s2347] sm:$0x80]
    %vm2349 = vcmask 1047559
    %v2350 = vsel %vm2349, %v2348, %v2346
    %2351 = vrot.lane.b32.xlu0 %v2350, 64
    %v2352 = vpop.permute.xlu0 %2351
    %vm2353 = vcmask 1048064
    %s2354 = scalar_lea.vmem [#allocation0], 432
    %2355 = vst.msk [vmem:[%s2354] ss:$-250 sm:$0x3] %vm2353, %v2352
    %s2356 = scalar_lea.vmem [#allocation0], 181
    %2357 = vst.msk [vmem:[%s2356] sm:$0xfc] %vm2353, %v2352
    %s2358 = scalar_lea.vmem [#allocation1], 565
    %v2359 = vld [vmem:[%s2358] sm:$0x1]
    %s2360 = scalar_lea.vmem [#allocation1], 436
    %v2361 = vld [vmem:[%s2360] sm:$0x2]
    %vm2362 = vcmask 1041409
    %v2363 = vsel %vm2362, %v2361, %v2359
    %s2364 = scalar_lea.vmem [#allocation1], 1393
    %s2365 = smov 12
    %v2366 = vld [vmem:[%s2364] ss:$-446 sm:%s2365]
    %vm2367 = vcmask 1043458
    %v2368 = vsel %vm2367, %v2366, %v2363
    %s2369 = scalar_lea.vmem [#allocation1], 115
    %v2370 = vld [vmem:[%s2369] sm:$0x10]
    %vm2371 = vcmask 1044484
    %v2372 = vsel %vm2371, %v2370, %v2368
    %s2373 = scalar_lea.vmem [#allocation1], 178
    %v2374 = vld [vmem:[%s2373] sm:$0x20]
    %vm2375 = vcmask 1045509
    %v2376 = vsel %vm2375, %v2374, %v2372
    %s2377 = scalar_lea.vmem [#allocation1], 241
    %v2378 = vld [vmem:[%s2377] sm:$0x40]
    %vm2379 = vcmask 1046534
    %v2380 = vsel %vm2379, %v2378, %v2376
    %s2381 = scalar_lea.vmem [#allocation1], 304
    %v2382 = vld [vmem:[%s2381] sm:$0x80]
    %vm2383 = vcmask 1047559
    %v2384 = vsel %vm2383, %v2382, %v2380
    %2385 = vrot.lane.b32.xlu0 %v2384, 64
    %v2386 = vpop.permute.xlu0 %2385
    %vm2387 = vcmask 1048064
    %s2388 = scalar_lea.vmem [#allocation0], 464
    %2389 = vst.msk [vmem:[%s2388] ss:$-250 sm:$0x3] %vm2387, %v2386
    %s2390 = scalar_lea.vmem [#allocation0], 213
    %2391 = vst.msk [vmem:[%s2390] sm:$0xfc] %vm2387, %v2386
    %s2392 = scalar_lea.vmem [#allocation1], 573
    %v2393 = vld [vmem:[%s2392] sm:$0x1]
    %s2394 = scalar_lea.vmem [#allocation1], 444
    %v2395 = vld [vmem:[%s2394] sm:$0x2]
    %vm2396 = vcmask 1041409
    %v2397 = vsel %vm2396, %v2395, %v2393
    %s2398 = scalar_lea.vmem [#allocation1], 1401
    %s2399 = smov 12
    %v2400 = vld [vmem:[%s2398] ss:$-446 sm:%s2399]
    %vm2401 = vcmask 1043458
    %v2402 = vsel %vm2401, %v2400, %v2397
    %s2403 = scalar_lea.vmem [#allocation1], 123
    %v2404 = vld [vmem:[%s2403] sm:$0x10]
    %vm2405 = vcmask 1044484
    %v2406 = vsel %vm2405, %v2404, %v2402
    %s2407 = scalar_lea.vmem [#allocation1], 186
    %v2408 = vld [vmem:[%s2407] sm:$0x20]
    %vm2409 = vcmask 1045509
    %v2410 = vsel %vm2409, %v2408, %v2406
    %s2411 = scalar_lea.vmem [#allocation1], 249
    %v2412 = vld [vmem:[%s2411] sm:$0x40]
    %vm2413 = vcmask 1046534
    %v2414 = vsel %vm2413, %v2412, %v2410
    %s2415 = scalar_lea.vmem [#allocation1], 312
    %v2416 = vld [vmem:[%s2415] sm:$0x80]
    %vm2417 = vcmask 1047559
    %v2418 = vsel %vm2417, %v2416, %v2414
    %2419 = vrot.lane.b32.xlu0 %v2418, 64
    %v2420 = vpop.permute.xlu0 %2419
    %vm2421 = vcmask 1048064
    %s2422 = scalar_lea.vmem [#allocation0], 496
    %2423 = vst.msk [vmem:[%s2422] ss:$-250 sm:$0x3] %vm2421, %v2420
    %s2424 = scalar_lea.vmem [#allocation0], 245
    %2425 = vst.msk [vmem:[%s2424] sm:$0xfc] %vm2421, %v2420
    %s2426 = scalar_lea.vmem [#allocation1], 519
    %v2427 = vld [vmem:[%s2426] sm:$0x1]
    %s2428 = scalar_lea.vmem [#allocation1], 326
    %v2429 = vld [vmem:[%s2428] sm:$0x2]
    %vm2430 = vcmask 1041409
    %v2431 = vsel %vm2430, %v2429, %v2427
    %s2432 = scalar_lea.vmem [#allocation1], 389
    %v2433 = vld [vmem:[%s2432] sm:$0x4]
    %vm2434 = vcmask 1042434
    %v2435 = vsel %vm2434, %v2433, %v2431
    %s2436 = scalar_lea.vmem [#allocation1], 239
    %s2437 = smov 24
    %v2438 = vld [vmem:[%s2436] ss:$72 sm:%s2437]
    %vm2439 = vcmask 1044483
    %v2440 = vsel %vm2439, %v2438, %v2435
    %s2441 = scalar_lea.vmem [#allocation1], 330
    %v2442 = vld [vmem:[%s2441] sm:$0x20]
    %vm2443 = vcmask 1045509
    %v2444 = vsel %vm2443, %v2442, %v2440
    %s2445 = scalar_lea.vmem [#allocation1], 393
    %v2446 = vld [vmem:[%s2445] sm:$0x40]
    %vm2447 = vcmask 1046534
    %v2448 = vsel %vm2447, %v2446, %v2444
    %s2449 = scalar_lea.vmem [#allocation1], 456
    %v2450 = vld [vmem:[%s2449] sm:$0x80]
    %vm2451 = vcmask 1047559
    %v2452 = vsel %vm2451, %v2450, %v2448
    %2453 = vrot.lane.b32.xlu0 %v2452, 64
    %v2454 = vpop.permute.xlu0 %2453
    %vm2455 = vcmask 1048064
    %s2456 = scalar_lea.vmem [#allocation0], 280
    %2457 = vst.msk [vmem:[%s2456] ss:$-251 sm:$0x3] %vm2455, %v2454
    %s2458 = scalar_lea.vmem [#allocation0], 28
    %2459 = vst.msk [vmem:[%s2458] sm:$0xc] %vm2455, %v2454
    %s2460 = scalar_lea.vmem [#allocation0], 1316
    %2461 = vst.msk [vmem:[%s2460] ss:$-251 sm:$0x30] %vm2455, %v2454
    %s2462 = scalar_lea.vmem [#allocation0], 56
    %2463 = vst.msk [vmem:[%s2462] sm:$0xc0] %vm2455, %v2454
    %s2464 = scalar_lea.vmem [#allocation1], 535
    %v2465 = vld [vmem:[%s2464] sm:$0x1]
    %s2466 = scalar_lea.vmem [#allocation1], 342
    %v2467 = vld [vmem:[%s2466] sm:$0x2]
    %vm2468 = vcmask 1041409
    %v2469 = vsel %vm2468, %v2467, %v2465
    %s2470 = scalar_lea.vmem [#allocation1], 405
    %v2471 = vld [vmem:[%s2470] sm:$0x4]
    %vm2472 = vcmask 1042434
    %v2473 = vsel %vm2472, %v2471, %v2469
    %s2474 = scalar_lea.vmem [#allocation1], 255
    %s2475 = smov 24
    %v2476 = vld [vmem:[%s2474] ss:$72 sm:%s2475]
    %vm2477 = vcmask 1044483
    %v2478 = vsel %vm2477, %v2476, %v2473
    %s2479 = scalar_lea.vmem [#allocation1], 346
    %v2480 = vld [vmem:[%s2479] sm:$0x20]
    %vm2481 = vcmask 1045509
    %v2482 = vsel %vm2481, %v2480, %v2478
    %s2483 = scalar_lea.vmem [#allocation1], 409
    %v2484 = vld [vmem:[%s2483] sm:$0x40]
    %vm2485 = vcmask 1046534
    %v2486 = vsel %vm2485, %v2484, %v2482
    %s2487 = scalar_lea.vmem [#allocation1], 472
    %v2488 = vld [vmem:[%s2487] sm:$0x80]
    %vm2489 = vcmask 1047559
    %v2490 = vsel %vm2489, %v2488, %v2486
    %2491 = vrot.lane.b32.xlu0 %v2490, 64
    %v2492 = vpop.permute.xlu0 %2491
    %vm2493 = vcmask 1048064
    %s2494 = scalar_lea.vmem [#allocation0], 344
    %2495 = vst.msk [vmem:[%s2494] ss:$-251 sm:$0x3] %vm2493, %v2492
    %s2496 = scalar_lea.vmem [#allocation0], 92
    %2497 = vst.msk [vmem:[%s2496] sm:$0xc] %vm2493, %v2492
    %s2498 = scalar_lea.vmem [#allocation0], 1380
    %2499 = vst.msk [vmem:[%s2498] ss:$-251 sm:$0x30] %vm2493, %v2492
    %s2500 = scalar_lea.vmem [#allocation0], 120
    %2501 = vst.msk [vmem:[%s2500] sm:$0xc0] %vm2493, %v2492
    %s2502 = scalar_lea.vmem [#allocation1], 551
    %v2503 = vld [vmem:[%s2502] sm:$0x1]
    %s2504 = scalar_lea.vmem [#allocation1], 358
    %v2505 = vld [vmem:[%s2504] sm:$0x2]
    %vm2506 = vcmask 1041409
    %v2507 = vsel %vm2506, %v2505, %v2503
    %s2508 = scalar_lea.vmem [#allocation1], 421
    %v2509 = vld [vmem:[%s2508] sm:$0x4]
    %vm2510 = vcmask 1042434
    %v2511 = vsel %vm2510, %v2509, %v2507
    %s2512 = scalar_lea.vmem [#allocation1], 271
    %s2513 = smov 24
    %v2514 = vld [vmem:[%s2512] ss:$72 sm:%s2513]
    %vm2515 = vcmask 1044483
    %v2516 = vsel %vm2515, %v2514, %v2511
    %s2517 = scalar_lea.vmem [#allocation1], 362
    %v2518 = vld [vmem:[%s2517] sm:$0x20]
    %vm2519 = vcmask 1045509
    %v2520 = vsel %vm2519, %v2518, %v2516
    %s2521 = scalar_lea.vmem [#allocation1], 425
    %v2522 = vld [vmem:[%s2521] sm:$0x40]
    %vm2523 = vcmask 1046534
    %v2524 = vsel %vm2523, %v2522, %v2520
    %s2525 = scalar_lea.vmem [#allocation1], 488
    %v2526 = vld [vmem:[%s2525] sm:$0x80]
    %vm2527 = vcmask 1047559
    %v2528 = vsel %vm2527, %v2526, %v2524
    %2529 = vrot.lane.b32.xlu0 %v2528, 64
    %v2530 = vpop.permute.xlu0 %2529
    %vm2531 = vcmask 1048064
    %s2532 = scalar_lea.vmem [#allocation0], 408
    %2533 = vst.msk [vmem:[%s2532] ss:$-251 sm:$0x3] %vm2531, %v2530
    %s2534 = scalar_lea.vmem [#allocation0], 156
    %2535 = vst.msk [vmem:[%s2534] sm:$0xc] %vm2531, %v2530
    %s2536 = scalar_lea.vmem [#allocation0], 1444
    %2537 = vst.msk [vmem:[%s2536] ss:$-251 sm:$0x30] %vm2531, %v2530
    %s2538 = scalar_lea.vmem [#allocation0], 184
    %2539 = vst.msk [vmem:[%s2538] sm:$0xc0] %vm2531, %v2530
    %s2540 = scalar_lea.vmem [#allocation1], 567
    %v2541 = vld [vmem:[%s2540] sm:$0x1]
    %s2542 = scalar_lea.vmem [#allocation1], 374
    %v2543 = vld [vmem:[%s2542] sm:$0x2]
    %vm2544 = vcmask 1041409
    %v2545 = vsel %vm2544, %v2543, %v2541
    %s2546 = scalar_lea.vmem [#allocation1], 437
    %v2547 = vld [vmem:[%s2546] sm:$0x4]
    %vm2548 = vcmask 1042434
    %v2549 = vsel %vm2548, %v2547, %v2545
    %s2550 = scalar_lea.vmem [#allocation1], 287
    %s2551 = smov 24
    %v2552 = vld [vmem:[%s2550] ss:$72 sm:%s2551]
    %vm2553 = vcmask 1044483
    %v2554 = vsel %vm2553, %v2552, %v2549
    %s2555 = scalar_lea.vmem [#allocation1], 378
    %v2556 = vld [vmem:[%s2555] sm:$0x20]
    %vm2557 = vcmask 1045509
    %v2558 = vsel %vm2557, %v2556, %v2554
    %s2559 = scalar_lea.vmem [#allocation1], 441
    %v2560 = vld [vmem:[%s2559] sm:$0x40]
    %vm2561 = vcmask 1046534
    %v2562 = vsel %vm2561, %v2560, %v2558
    %s2563 = scalar_lea.vmem [#allocation1], 504
    %v2564 = vld [vmem:[%s2563] sm:$0x80]
    %vm2565 = vcmask 1047559
    %v2566 = vsel %vm2565, %v2564, %v2562
    %2567 = vrot.lane.b32.xlu0 %v2566, 64
    %v2568 = vpop.permute.xlu0 %2567
    %vm2569 = vcmask 1048064
    %s2570 = scalar_lea.vmem [#allocation0], 472
    %2571 = vst.msk [vmem:[%s2570] ss:$-251 sm:$0x3] %vm2569, %v2568
    %s2572 = scalar_lea.vmem [#allocation0], 220
    %2573 = vst.msk [vmem:[%s2572] sm:$0xc] %vm2569, %v2568
    %s2574 = scalar_lea.vmem [#allocation0], 1508
    %2575 = vst.msk [vmem:[%s2574] ss:$-251 sm:$0x30] %vm2569, %v2568
    %s2576 = scalar_lea.vmem [#allocation0], 248
    %2577 = vst.msk [vmem:[%s2576] sm:$0xc0] %vm2569, %v2568
    %s2579 = ssub.s32 256, 1
    %v2580 = vld [vmem:[#allocation0] sm:%s2579]
    %v2581 = vpack.c.bf16 0.0, %v2580
    %s2583 = ssub.s32 16, 1
    %2584 = vst [vmem:[%s1] sm:%s2583] %v2581
    %s2585 = scalar_lea.vmem [#allocation0], 8
    %v2586 = vld [vmem:[%s2585] sm:%s2579]
    %v2587 = vpack.c.bf16 0.0, %v2586
    %s2589 = ssub.s32 16, 1
    %s2590 = scalar_lea.vmem %s1, 4
    %2591 = vst [vmem:[%s2590] sm:%s2589] %v2587
    %s2592 = scalar_lea.vmem [#allocation0], 16
    %v2593 = vld [vmem:[%s2592] sm:%s2579]
    %v2594 = vpack.c.bf16 0.0, %v2593
    %s2596 = ssub.s32 16, 1
    %s2597 = scalar_lea.vmem %s1, 8
    %2598 = vst [vmem:[%s2597] sm:%s2596] %v2594
    %s2599 = scalar_lea.vmem [#allocation0], 24
    %v2600 = vld [vmem:[%s2599] sm:%s2579]
    %v2601 = vpack.c.bf16 0.0, %v2600
    %s2603 = ssub.s32 16, 1
    %s2604 = scalar_lea.vmem %s1, 12
    %2605 = vst [vmem:[%s2604] sm:%s2603] %v2601
    %s2606 = scalar_lea.vmem [#allocation0], 32
    %v2607 = vld [vmem:[%s2606] sm:%s2579]
    %v2608 = vpack.c.bf16 0.0, %v2607
    %s2610 = ssub.s32 16, 1
    %s2611 = scalar_lea.vmem %s1, 16
    %2612 = vst [vmem:[%s2611] sm:%s2610] %v2608
    %s2613 = scalar_lea.vmem [#allocation0], 40
    %v2614 = vld [vmem:[%s2613] sm:%s2579]
    %v2615 = vpack.c.bf16 0.0, %v2614
    %s2617 = ssub.s32 16, 1
    %s2618 = scalar_lea.vmem %s1, 20
    %2619 = vst [vmem:[%s2618] sm:%s2617] %v2615
    %s2620 = scalar_lea.vmem [#allocation0], 48
    %v2621 = vld [vmem:[%s2620] sm:%s2579]
    %v2622 = vpack.c.bf16 0.0, %v2621
    %s2624 = ssub.s32 16, 1
    %s2625 = scalar_lea.vmem %s1, 24
    %2626 = vst [vmem:[%s2625] sm:%s2624] %v2622
    %s2627 = scalar_lea.vmem [#allocation0], 56
    %v2628 = vld [vmem:[%s2627] sm:%s2579]
    %v2629 = vpack.c.bf16 0.0, %v2628
    %s2631 = ssub.s32 16, 1
    %s2632 = scalar_lea.vmem %s1, 28
    %2633 = vst [vmem:[%s2632] sm:%s2631] %v2629
    %s2634 = scalar_lea.vmem [#allocation0], 64
    %v2635 = vld [vmem:[%s2634] sm:%s2579]
    %v2636 = vpack.c.bf16 0.0, %v2635
    %s2638 = ssub.s32 16, 1
    %s2639 = scalar_lea.vmem %s1, 32
    %2640 = vst [vmem:[%s2639] sm:%s2638] %v2636
    %s2641 = scalar_lea.vmem [#allocation0], 72
    %v2642 = vld [vmem:[%s2641] sm:%s2579]
    %v2643 = vpack.c.bf16 0.0, %v2642
    %s2645 = ssub.s32 16, 1
    %s2646 = scalar_lea.vmem %s1, 36
    %2647 = vst [vmem:[%s2646] sm:%s2645] %v2643
    %s2648 = scalar_lea.vmem [#allocation0], 80
    %v2649 = vld [vmem:[%s2648] sm:%s2579]
    %v2650 = vpack.c.bf16 0.0, %v2649
    %s2652 = ssub.s32 16, 1
    %s2653 = scalar_lea.vmem %s1, 40
    %2654 = vst [vmem:[%s2653] sm:%s2652] %v2650
    %s2655 = scalar_lea.vmem [#allocation0], 88
    %v2656 = vld [vmem:[%s2655] sm:%s2579]
    %v2657 = vpack.c.bf16 0.0, %v2656
    %s2659 = ssub.s32 16, 1
    %s2660 = scalar_lea.vmem %s1, 44
    %2661 = vst [vmem:[%s2660] sm:%s2659] %v2657
    %s2662 = scalar_lea.vmem [#allocation0], 96
    %v2663 = vld [vmem:[%s2662] sm:%s2579]
    %v2664 = vpack.c.bf16 0.0, %v2663
    %s2666 = ssub.s32 16, 1
    %s2667 = scalar_lea.vmem %s1, 48
    %2668 = vst [vmem:[%s2667] sm:%s2666] %v2664
    %s2669 = scalar_lea.vmem [#allocation0], 104
    %v2670 = vld [vmem:[%s2669] sm:%s2579]
    %v2671 = vpack.c.bf16 0.0, %v2670
    %s2673 = ssub.s32 16, 1
    %s2674 = scalar_lea.vmem %s1, 52
    %2675 = vst [vmem:[%s2674] sm:%s2673] %v2671
    %s2676 = scalar_lea.vmem [#allocation0], 112
    %v2677 = vld [vmem:[%s2676] sm:%s2579]
    %v2678 = vpack.c.bf16 0.0, %v2677
    %s2680 = ssub.s32 16, 1
    %s2681 = scalar_lea.vmem %s1, 56
    %2682 = vst [vmem:[%s2681] sm:%s2680] %v2678
    %s2683 = scalar_lea.vmem [#allocation0], 120
    %v2684 = vld [vmem:[%s2683] sm:%s2579]
    %v2685 = vpack.c.bf16 0.0, %v2684
    %s2687 = ssub.s32 16, 1
    %s2688 = scalar_lea.vmem %s1, 60
    %2689 = vst [vmem:[%s2688] sm:%s2687] %v2685
    %s2690 = scalar_lea.vmem [#allocation0], 128
    %v2691 = vld [vmem:[%s2690] sm:%s2579]
    %v2692 = vpack.c.bf16 0.0, %v2691
    %s2694 = ssub.s32 16, 1
    %s2695 = scalar_lea.vmem %s1, 64
    %2696 = vst [vmem:[%s2695] sm:%s2694] %v2692
    %s2697 = scalar_lea.vmem [#allocation0], 136
    %v2698 = vld [vmem:[%s2697] sm:%s2579]
    %v2699 = vpack.c.bf16 0.0, %v2698
    %s2701 = ssub.s32 16, 1
    %s2702 = scalar_lea.vmem %s1, 68
    %2703 = vst [vmem:[%s2702] sm:%s2701] %v2699
    %s2704 = scalar_lea.vmem [#allocation0], 144
    %v2705 = vld [vmem:[%s2704] sm:%s2579]
    %v2706 = vpack.c.bf16 0.0, %v2705
    %s2708 = ssub.s32 16, 1
    %s2709 = scalar_lea.vmem %s1, 72
    %2710 = vst [vmem:[%s2709] sm:%s2708] %v2706
    %s2711 = scalar_lea.vmem [#allocation0], 152
    %v2712 = vld [vmem:[%s2711] sm:%s2579]
    %v2713 = vpack.c.bf16 0.0, %v2712
    %s2715 = ssub.s32 16, 1
    %s2716 = scalar_lea.vmem %s1, 76
    %2717 = vst [vmem:[%s2716] sm:%s2715] %v2713
    %s2718 = scalar_lea.vmem [#allocation0], 160
    %v2719 = vld [vmem:[%s2718] sm:%s2579]
    %v2720 = vpack.c.bf16 0.0, %v2719
    %s2722 = ssub.s32 16, 1
    %s2723 = scalar_lea.vmem %s1, 80
    %2724 = vst [vmem:[%s2723] sm:%s2722] %v2720
    %s2725 = scalar_lea.vmem [#allocation0], 168
    %v2726 = vld [vmem:[%s2725] sm:%s2579]
    %v2727 = vpack.c.bf16 0.0, %v2726
    %s2729 = ssub.s32 16, 1
    %s2730 = scalar_lea.vmem %s1, 84
    %2731 = vst [vmem:[%s2730] sm:%s2729] %v2727
    %s2732 = scalar_lea.vmem [#allocation0], 176
    %v2733 = vld [vmem:[%s2732] sm:%s2579]
    %v2734 = vpack.c.bf16 0.0, %v2733
    %s2736 = ssub.s32 16, 1
    %s2737 = scalar_lea.vmem %s1, 88
    %2738 = vst [vmem:[%s2737] sm:%s2736] %v2734
    %s2739 = scalar_lea.vmem [#allocation0], 184
    %v2740 = vld [vmem:[%s2739] sm:%s2579]
    %v2741 = vpack.c.bf16 0.0, %v2740
    %s2743 = ssub.s32 16, 1
    %s2744 = scalar_lea.vmem %s1, 92
    %2745 = vst [vmem:[%s2744] sm:%s2743] %v2741
    %s2746 = scalar_lea.vmem [#allocation0], 192
    %v2747 = vld [vmem:[%s2746] sm:%s2579]
    %v2748 = vpack.c.bf16 0.0, %v2747
    %s2750 = ssub.s32 16, 1
    %s2751 = scalar_lea.vmem %s1, 96
    %2752 = vst [vmem:[%s2751] sm:%s2750] %v2748
    %s2753 = scalar_lea.vmem [#allocation0], 200
    %v2754 = vld [vmem:[%s2753] sm:%s2579]
    %v2755 = vpack.c.bf16 0.0, %v2754
    %s2757 = ssub.s32 16, 1
    %s2758 = scalar_lea.vmem %s1, 100
    %2759 = vst [vmem:[%s2758] sm:%s2757] %v2755
    %s2760 = scalar_lea.vmem [#allocation0], 208
    %v2761 = vld [vmem:[%s2760] sm:%s2579]
    %v2762 = vpack.c.bf16 0.0, %v2761
    %s2764 = ssub.s32 16, 1
    %s2765 = scalar_lea.vmem %s1, 104
    %2766 = vst [vmem:[%s2765] sm:%s2764] %v2762
    %s2767 = scalar_lea.vmem [#allocation0], 216
    %v2768 = vld [vmem:[%s2767] sm:%s2579]
    %v2769 = vpack.c.bf16 0.0, %v2768
    %s2771 = ssub.s32 16, 1
    %s2772 = scalar_lea.vmem %s1, 108
    %2773 = vst [vmem:[%s2772] sm:%s2771] %v2769
    %s2774 = scalar_lea.vmem [#allocation0], 224
    %v2775 = vld [vmem:[%s2774] sm:%s2579]
    %v2776 = vpack.c.bf16 0.0, %v2775
    %s2778 = ssub.s32 16, 1
    %s2779 = scalar_lea.vmem %s1, 112
    %2780 = vst [vmem:[%s2779] sm:%s2778] %v2776
    %s2781 = scalar_lea.vmem [#allocation0], 232
    %v2782 = vld [vmem:[%s2781] sm:%s2579]
    %v2783 = vpack.c.bf16 0.0, %v2782
    %s2785 = ssub.s32 16, 1
    %s2786 = scalar_lea.vmem %s1, 116
    %2787 = vst [vmem:[%s2786] sm:%s2785] %v2783
    %s2788 = scalar_lea.vmem [#allocation0], 240
    %v2789 = vld [vmem:[%s2788] sm:%s2579]
    %v2790 = vpack.c.bf16 0.0, %v2789
    %s2792 = ssub.s32 16, 1
    %s2793 = scalar_lea.vmem %s1, 120
    %2794 = vst [vmem:[%s2793] sm:%s2792] %v2790
    %s2795 = scalar_lea.vmem [#allocation0], 248
    %v2796 = vld [vmem:[%s2795] sm:%s2579]
    %v2797 = vpack.c.bf16 0.0, %v2796
    %s2799 = ssub.s32 16, 1
    %s2800 = scalar_lea.vmem %s1, 124
    %2801 = vst [vmem:[%s2800] sm:%s2799] %v2797
    %s2802 = scalar_lea.vmem [#allocation0], 256
    %v2803 = vld [vmem:[%s2802] sm:%s2579]
    %v2804 = vpack.c.bf16 0.0, %v2803
    %s2806 = ssub.s32 16, 1
    %s2807 = scalar_lea.vmem %s1, 128
    %2808 = vst [vmem:[%s2807] sm:%s2806] %v2804
    %s2809 = scalar_lea.vmem [#allocation0], 264
    %v2810 = vld [vmem:[%s2809] sm:%s2579]
    %v2811 = vpack.c.bf16 0.0, %v2810
    %s2813 = ssub.s32 16, 1
    %s2814 = scalar_lea.vmem %s1, 132
    %2815 = vst [vmem:[%s2814] sm:%s2813] %v2811
    %s2816 = scalar_lea.vmem [#allocation0], 272
    %v2817 = vld [vmem:[%s2816] sm:%s2579]
    %v2818 = vpack.c.bf16 0.0, %v2817
    %s2820 = ssub.s32 16, 1
    %s2821 = scalar_lea.vmem %s1, 136
    %2822 = vst [vmem:[%s2821] sm:%s2820] %v2818
    %s2823 = scalar_lea.vmem [#allocation0], 280
    %v2824 = vld [vmem:[%s2823] sm:%s2579]
    %v2825 = vpack.c.bf16 0.0, %v2824
    %s2827 = ssub.s32 16, 1
    %s2828 = scalar_lea.vmem %s1, 140
    %2829 = vst [vmem:[%s2828] sm:%s2827] %v2825
    %s2830 = scalar_lea.vmem [#allocation0], 288
    %v2831 = vld [vmem:[%s2830] sm:%s2579]
    %v2832 = vpack.c.bf16 0.0, %v2831
    %s2834 = ssub.s32 16, 1
    %s2835 = scalar_lea.vmem %s1, 144
    %2836 = vst [vmem:[%s2835] sm:%s2834] %v2832
    %s2837 = scalar_lea.vmem [#allocation0], 296
    %v2838 = vld [vmem:[%s2837] sm:%s2579]
    %v2839 = vpack.c.bf16 0.0, %v2838
    %s2841 = ssub.s32 16, 1
    %s2842 = scalar_lea.vmem %s1, 148
    %2843 = vst [vmem:[%s2842] sm:%s2841] %v2839
    %s2844 = scalar_lea.vmem [#allocation0], 304
    %v2845 = vld [vmem:[%s2844] sm:%s2579]
    %v2846 = vpack.c.bf16 0.0, %v2845
    %s2848 = ssub.s32 16, 1
    %s2849 = scalar_lea.vmem %s1, 152
    %2850 = vst [vmem:[%s2849] sm:%s2848] %v2846
    %s2851 = scalar_lea.vmem [#allocation0], 312
    %v2852 = vld [vmem:[%s2851] sm:%s2579]
    %v2853 = vpack.c.bf16 0.0, %v2852
    %s2855 = ssub.s32 16, 1
    %s2856 = scalar_lea.vmem %s1, 156
    %2857 = vst [vmem:[%s2856] sm:%s2855] %v2853
    %s2858 = scalar_lea.vmem [#allocation0], 320
    %v2859 = vld [vmem:[%s2858] sm:%s2579]
    %v2860 = vpack.c.bf16 0.0, %v2859
    %s2862 = ssub.s32 16, 1
    %s2863 = scalar_lea.vmem %s1, 160
    %2864 = vst [vmem:[%s2863] sm:%s2862] %v2860
    %s2865 = scalar_lea.vmem [#allocation0], 328
    %v2866 = vld [vmem:[%s2865] sm:%s2579]
    %v2867 = vpack.c.bf16 0.0, %v2866
    %s2869 = ssub.s32 16, 1
    %s2870 = scalar_lea.vmem %s1, 164
    %2871 = vst [vmem:[%s2870] sm:%s2869] %v2867
    %s2872 = scalar_lea.vmem [#allocation0], 336
    %v2873 = vld [vmem:[%s2872] sm:%s2579]
    %v2874 = vpack.c.bf16 0.0, %v2873
    %s2876 = ssub.s32 16, 1
    %s2877 = scalar_lea.vmem %s1, 168
    %2878 = vst [vmem:[%s2877] sm:%s2876] %v2874
    %s2879 = scalar_lea.vmem [#allocation0], 344
    %v2880 = vld [vmem:[%s2879] sm:%s2579]
    %v2881 = vpack.c.bf16 0.0, %v2880
    %s2883 = ssub.s32 16, 1
    %s2884 = scalar_lea.vmem %s1, 172
    %2885 = vst [vmem:[%s2884] sm:%s2883] %v2881
    %s2886 = scalar_lea.vmem [#allocation0], 352
    %v2887 = vld [vmem:[%s2886] sm:%s2579]
    %v2888 = vpack.c.bf16 0.0, %v2887
    %s2890 = ssub.s32 16, 1
    %s2891 = scalar_lea.vmem %s1, 176
    %2892 = vst [vmem:[%s2891] sm:%s2890] %v2888
    %s2893 = scalar_lea.vmem [#allocation0], 360
    %v2894 = vld [vmem:[%s2893] sm:%s2579]
    %v2895 = vpack.c.bf16 0.0, %v2894
    %s2897 = ssub.s32 16, 1
    %s2898 = scalar_lea.vmem %s1, 180
    %2899 = vst [vmem:[%s2898] sm:%s2897] %v2895
    %s2900 = scalar_lea.vmem [#allocation0], 368
    %v2901 = vld [vmem:[%s2900] sm:%s2579]
    %v2902 = vpack.c.bf16 0.0, %v2901
    %s2904 = ssub.s32 16, 1
    %s2905 = scalar_lea.vmem %s1, 184
    %2906 = vst [vmem:[%s2905] sm:%s2904] %v2902
    %s2907 = scalar_lea.vmem [#allocation0], 376
    %v2908 = vld [vmem:[%s2907] sm:%s2579]
    %v2909 = vpack.c.bf16 0.0, %v2908
    %s2911 = ssub.s32 16, 1
    %s2912 = scalar_lea.vmem %s1, 188
    %2913 = vst [vmem:[%s2912] sm:%s2911] %v2909
    %s2914 = scalar_lea.vmem [#allocation0], 384
    %v2915 = vld [vmem:[%s2914] sm:%s2579]
    %v2916 = vpack.c.bf16 0.0, %v2915
    %s2918 = ssub.s32 16, 1
    %s2919 = scalar_lea.vmem %s1, 192
    %2920 = vst [vmem:[%s2919] sm:%s2918] %v2916
    %s2921 = scalar_lea.vmem [#allocation0], 392
    %v2922 = vld [vmem:[%s2921] sm:%s2579]
    %v2923 = vpack.c.bf16 0.0, %v2922
    %s2925 = ssub.s32 16, 1
    %s2926 = scalar_lea.vmem %s1, 196
    %2927 = vst [vmem:[%s2926] sm:%s2925] %v2923
    %s2928 = scalar_lea.vmem [#allocation0], 400
    %v2929 = vld [vmem:[%s2928] sm:%s2579]
    %v2930 = vpack.c.bf16 0.0, %v2929
    %s2932 = ssub.s32 16, 1
    %s2933 = scalar_lea.vmem %s1, 200
    %2934 = vst [vmem:[%s2933] sm:%s2932] %v2930
    %s2935 = scalar_lea.vmem [#allocation0], 408
    %v2936 = vld [vmem:[%s2935] sm:%s2579]
    %v2937 = vpack.c.bf16 0.0, %v2936
    %s2939 = ssub.s32 16, 1
    %s2940 = scalar_lea.vmem %s1, 204
    %2941 = vst [vmem:[%s2940] sm:%s2939] %v2937
    %s2942 = scalar_lea.vmem [#allocation0], 416
    %v2943 = vld [vmem:[%s2942] sm:%s2579]
    %v2944 = vpack.c.bf16 0.0, %v2943
    %s2946 = ssub.s32 16, 1
    %s2947 = scalar_lea.vmem %s1, 208
    %2948 = vst [vmem:[%s2947] sm:%s2946] %v2944
    %s2949 = scalar_lea.vmem [#allocation0], 424
    %v2950 = vld [vmem:[%s2949] sm:%s2579]
    %v2951 = vpack.c.bf16 0.0, %v2950
    %s2953 = ssub.s32 16, 1
    %s2954 = scalar_lea.vmem %s1, 212
    %2955 = vst [vmem:[%s2954] sm:%s2953] %v2951
    %s2956 = scalar_lea.vmem [#allocation0], 432
    %v2957 = vld [vmem:[%s2956] sm:%s2579]
    %v2958 = vpack.c.bf16 0.0, %v2957
    %s2960 = ssub.s32 16, 1
    %s2961 = scalar_lea.vmem %s1, 216
    %2962 = vst [vmem:[%s2961] sm:%s2960] %v2958
    %s2963 = scalar_lea.vmem [#allocation0], 440
    %v2964 = vld [vmem:[%s2963] sm:%s2579]
    %v2965 = vpack.c.bf16 0.0, %v2964
    %s2967 = ssub.s32 16, 1
    %s2968 = scalar_lea.vmem %s1, 220
    %2969 = vst [vmem:[%s2968] sm:%s2967] %v2965
    %s2970 = scalar_lea.vmem [#allocation0], 448
    %v2971 = vld [vmem:[%s2970] sm:%s2579]
    %v2972 = vpack.c.bf16 0.0, %v2971
    %s2974 = ssub.s32 16, 1
    %s2975 = scalar_lea.vmem %s1, 224
    %2976 = vst [vmem:[%s2975] sm:%s2974] %v2972
    %s2977 = scalar_lea.vmem [#allocation0], 456
    %v2978 = vld [vmem:[%s2977] sm:%s2579]
    %v2979 = vpack.c.bf16 0.0, %v2978
    %s2981 = ssub.s32 16, 1
    %s2982 = scalar_lea.vmem %s1, 228
    %2983 = vst [vmem:[%s2982] sm:%s2981] %v2979
    %s2984 = scalar_lea.vmem [#allocation0], 464
    %v2985 = vld [vmem:[%s2984] sm:%s2579]
    %v2986 = vpack.c.bf16 0.0, %v2985
    %s2988 = ssub.s32 16, 1
    %s2989 = scalar_lea.vmem %s1, 232
    %2990 = vst [vmem:[%s2989] sm:%s2988] %v2986
    %s2991 = scalar_lea.vmem [#allocation0], 472
    %v2992 = vld [vmem:[%s2991] sm:%s2579]
    %v2993 = vpack.c.bf16 0.0, %v2992
    %s2995 = ssub.s32 16, 1
    %s2996 = scalar_lea.vmem %s1, 236
    %2997 = vst [vmem:[%s2996] sm:%s2995] %v2993
    %s2998 = scalar_lea.vmem [#allocation0], 480
    %v2999 = vld [vmem:[%s2998] sm:%s2579]
    %v3000 = vpack.c.bf16 0.0, %v2999
    %s3002 = ssub.s32 16, 1
    %s3003 = scalar_lea.vmem %s1, 240
    %3004 = vst [vmem:[%s3003] sm:%s3002] %v3000
    %s3005 = scalar_lea.vmem [#allocation0], 488
    %v3006 = vld [vmem:[%s3005] sm:%s2579]
    %v3007 = vpack.c.bf16 0.0, %v3006
    %s3009 = ssub.s32 16, 1
    %s3010 = scalar_lea.vmem %s1, 244
    %3011 = vst [vmem:[%s3010] sm:%s3009] %v3007
    %s3012 = scalar_lea.vmem [#allocation0], 496
    %v3013 = vld [vmem:[%s3012] sm:%s2579]
    %v3014 = vpack.c.bf16 0.0, %v3013
    %s3016 = ssub.s32 16, 1
    %s3017 = scalar_lea.vmem %s1, 248
    %3018 = vst [vmem:[%s3017] sm:%s3016] %v3014
    %s3019 = scalar_lea.vmem [#allocation0], 504
    %v3020 = vld [vmem:[%s3019] sm:%s2579]
    %v3021 = vpack.c.bf16 0.0, %v3020
    %s3023 = ssub.s32 16, 1
    %s3024 = scalar_lea.vmem %s1, 252
    %3025 = vst [vmem:[%s3024] sm:%s3023] %v3021

// kernel: conv2d_tanh.1
$region0: #{conv2d_tanh.1}
  #allocation0 [shape = 'u32[]', space=smem, size = 0x4, offset = 0x4, fixed_abs, tag = 'smem constant byte address 0x4 - core index']
  #allocation1 [shape = 'u32[72,128]{1,0:T(1,128)}', space=vmem, size = 0x9000, scoped, tag = 'internal scratch']
  %s0 = inlined_call_operand.vmem [shape: bf16[32,18], index: 0, kind: input, shape index: {}]
  %s1 = inlined_call_operand.vmem [shape: bf16[32,9], index: 1, kind: input, shape index: {}]
  %s2 = inlined_call_operand.vmem [shape: f32[32,1], index: 2, kind: input, shape index: {}]
  %s3 = inlined_call_operand.vmem [shape: bf16[18,4096], index: 3, kind: input, shape index: {}]
  %s4 = inlined_call_operand.vmem [shape: bf16[9,4096], index: 4, kind: input, shape index: {}]
  %s5 = inlined_call_operand.vmem [shape: f32[32,4096], index: 5, kind: output, shape index: {}]
  %s6 = sld [smem:[#allocation0]]
  $region118: #{conv2d_tanh.1} parent=0
    _
  %s8 = ssub.s32 1, %s6
  %s9 = scalar_select 0, %s8, %s6
  $region1: #{conv2d_tanh.1} parent=0
    #allocation2 [shape = 'u8[196608]{0}', space=vmem, size = 0x30000, scoped, tag = 'input window, operand 3']
    #allocation3 [shape = 'u8[131072]{0}', space=vmem, size = 0x20000, scoped, tag = 'input window, operand 4']
    #allocation4 [shape = 'u8[524288]{0}', space=vmem, size = 0x80000, scoped, tag = 'output window, operand 0']
    loop: start=0, step=1, limit=4
    $region2: #{conv2d_tanh.1} parent=1 // loop_pre_header
      _
    $region3: #{conv2d_tanh.1} parent=1 // loop_header
      %s11 = sphi 0, %s15
      %p12 = scmp.ge.s32.totalorder %s11, 4
      %s19 = sphi 0, %s19
      %s21 = sphi 0, %s19
      %s22 = sphi 0, %s21
      %s36 = sphi 0, %s22
      %s40 = sphi 0, %s40
      %s42 = sphi 0, %s40
      %s43 = sphi 0, %s42
      %s57 = sphi 0, %s43
      %s61 = sphi 0, %s61
      %s63 = sphi 0, %s61
      %s64 = sphi 0, %s63
      %s78 = sphi 0, %s64
      %s84 = sphi 0, %s86
      %s87 = sphi 0, %s84
      %s88 = sphi 0, %s87
      %s104 = sphi 0, %s88
      %s110 = sphi 0, %s112
      %s113 = sphi 0, %s110
      %s114 = sphi 0, %s113
      %s130 = sphi 0, %s114
      %s136 = sphi 0, %s138
      %s139 = sphi 0, %s136
      %s140 = sphi 0, %s139
      %s156 = sphi 0, %s140
    $region4: #{conv2d_tanh.1} parent=1 // loop_header_branch
      %14 = sbr.rel (%p12) target = $region8
    $region5: #{conv2d_tanh.1} parent=1 // loop_body
      %s16 = ssub.s32 %s11, 1
      %s17 = ssub.s32 %s11, 2
      %s18 = sadd.s32 %s11, 1
      %s20 = sadd.s32 %s19, 1
      %p23 = scmp.eq.s32.totalorder %s11, 1
      %p24 = scmp.ne.s32.totalorder %s19, %s21
      %p25 = scmp.eq.s32.totalorder %s11, 0
      %p26 = por %p24, %p25
      %p27 = scmp.ne.s32.totalorder %s19, %s21
      %p28 = scmp.eq.s32.totalorder %s16, 1
      %p29 = por %p27, %p28
      %p30 = scmp.ne.s32.totalorder %s21, %s22
      %p31 = scmp.eq.s32.totalorder %s16, 0
      %p32 = por %p30, %p31
      %p33 = scmp.ne.s32.totalorder %s21, %s22
      %p34 = scmp.eq.s32.totalorder %s17, 1
      %p35 = por %p33, %p34
      %p37 = scmp.ne.s32.totalorder %s22, %s36
      %p38 = scmp.eq.s32.totalorder %s17, 0
      %p39 = por %p37, %p38
      %s41 = sadd.s32 %s40, 1
      %p44 = scmp.eq.s32.totalorder %s11, 1
      %p45 = scmp.ne.s32.totalorder %s40, %s42
      %p46 = scmp.eq.s32.totalorder %s11, 0
      %p47 = por %p45, %p46
      %p48 = scmp.ne.s32.totalorder %s40, %s42
      %p49 = scmp.eq.s32.totalorder %s16, 1
      %p50 = por %p48, %p49
      %p51 = scmp.ne.s32.totalorder %s42, %s43
      %p52 = scmp.eq.s32.totalorder %s16, 0
      %p53 = por %p51, %p52
      %p54 = scmp.ne.s32.totalorder %s42, %s43
      %p55 = scmp.eq.s32.totalorder %s17, 1
      %p56 = por %p54, %p55
      %p58 = scmp.ne.s32.totalorder %s43, %s57
      %p59 = scmp.eq.s32.totalorder %s17, 0
      %p60 = por %p58, %p59
      %s62 = sadd.s32 %s61, 1
      %p65 = scmp.eq.s32.totalorder %s11, 1
      %p66 = scmp.ne.s32.totalorder %s61, %s63
      %p67 = scmp.eq.s32.totalorder %s11, 0
      %p68 = por %p66, %p67
      %p69 = scmp.ne.s32.totalorder %s61, %s63
      %p70 = scmp.eq.s32.totalorder %s16, 1
      %p71 = por %p69, %p70
      %p72 = scmp.ne.s32.totalorder %s63, %s64
      %p73 = scmp.eq.s32.totalorder %s16, 0
      %p74 = por %p72, %p73
      %p75 = scmp.ne.s32.totalorder %s63, %s64
      %p76 = scmp.eq.s32.totalorder %s17, 1
      %p77 = por %p75, %p76
      %p79 = scmp.ne.s32.totalorder %s64, %s78
      %p80 = scmp.eq.s32.totalorder %s17, 0
      %p81 = por %p79, %p80
      %s82 = ssub.s32 %s11, %s18
      %p83 = scmp.eq.s32.totalorder %s82, 0
      %s85 = sadd.s32 %s84, 1
      %s86 = scalar_select %p83, %s84, %s85
      %p89 = pneg %p83
      %p90 = scmp.eq.s32.totalorder %s11, 1
      %p91 = por %p89, %p90
      %p92 = scmp.ne.s32.totalorder %s84, %s87
      %p93 = scmp.eq.s32.totalorder %s11, 0
      %p94 = por %p92, %p93
      %p95 = scmp.ne.s32.totalorder %s84, %s87
      %p96 = scmp.eq.s32.totalorder %s16, 1
      %p97 = por %p95, %p96
      %p98 = scmp.ne.s32.totalorder %s87, %s88
      %p99 = scmp.eq.s32.totalorder %s16, 0
      %p100 = por %p98, %p99
      %p101 = scmp.ne.s32.totalorder %s87, %s88
      %p102 = scmp.eq.s32.totalorder %s17, 1
      %p103 = por %p101, %p102
      %p105 = scmp.ne.s32.totalorder %s88, %s104
      %p106 = scmp.eq.s32.totalorder %s17, 0
      %p107 = por %p105, %p106
      %s108 = ssub.s32 %s11, %s18
      %p109 = scmp.eq.s32.totalorder %s108, 0
      %s111 = sadd.s32 %s110, 1
      %s112 = scalar_select %p109, %s110, %s111
      %p115 = pneg %p109
      %p116 = scmp.eq.s32.totalorder %s11, 1
      %p117 = por %p115, %p116
      %p118 = scmp.ne.s32.totalorder %s110, %s113
      %p119 = scmp.eq.s32.totalorder %s11, 0
      %p120 = por %p118, %p119
      %p121 = scmp.ne.s32.totalorder %s110, %s113
      %p122 = scmp.eq.s32.totalorder %s16, 1
      %p123 = por %p121, %p122
      %p124 = scmp.ne.s32.totalorder %s113, %s114
      %p125 = scmp.eq.s32.totalorder %s16, 0
      %p126 = por %p124, %p125
      %p127 = scmp.ne.s32.totalorder %s113, %s114
      %p128 = scmp.eq.s32.totalorder %s17, 1
      %p129 = por %p127, %p128
      %p131 = scmp.ne.s32.totalorder %s114, %s130
      %p132 = scmp.eq.s32.totalorder %s17, 0
      %p133 = por %p131, %p132
      %s134 = ssub.s32 %s11, %s18
      %p135 = scmp.eq.s32.totalorder %s134, 0
      %s137 = sadd.s32 %s136, 1
      %s138 = scalar_select %p135, %s136, %s137
      %p141 = pneg %p135
      %p142 = scmp.eq.s32.totalorder %s11, 1
      %p143 = por %p141, %p142
      %p144 = scmp.ne.s32.totalorder %s136, %s139
      %p145 = scmp.eq.s32.totalorder %s11, 0
      %p146 = por %p144, %p145
      %p147 = scmp.ne.s32.totalorder %s136, %s139
      %p148 = scmp.eq.s32.totalorder %s16, 1
      %p149 = por %p147, %p148
      %p150 = scmp.ne.s32.totalorder %s139, %s140
      %p151 = scmp.eq.s32.totalorder %s16, 0
      %p152 = por %p150, %p151
      %p153 = scmp.ne.s32.totalorder %s139, %s140
      %p154 = scmp.eq.s32.totalorder %s17, 1
      %p155 = por %p153, %p154
      %p157 = scmp.ne.s32.totalorder %s140, %s156
      %p158 = scmp.eq.s32.totalorder %s17, 0
      %p159 = por %p157, %p158
      %p160 = scmp.le.s32.totalorder 1, %s11
      %p161 = scmp.lt.s32.totalorder %s11, 3
      %p162 = pnand %p160, %p161
      %p163 = pneg %p162
      // Predicated region
      $region9: #{conv2d_tanh.1} parent=5 // pred_check
        _
      $region10: #{conv2d_tanh.1} parent=5 // pred_check_branch
        %165 = sbr.rel (%p162) target = $region12
      $region11: #{conv2d_tanh.1} parent=5 // pred_region
        %s166 = ssub.s32 %s11, 1
        // Predicated region
        $region13: #{conv2d_tanh.1} parent=11 // pred_check
          %p167 = pneg %p32
        $region14: #{conv2d_tanh.1} parent=11 // pred_check_branch
          %169 = sbr.rel (%p167) target = $region16
        $region15: #{conv2d_tanh.1} parent=11 // pred_region
          _
        $region16: #{conv2d_tanh.1} parent=11 // pred_fallthru
          _
        // Predicated region
        $region17: #{conv2d_tanh.1} parent=11 // pred_check
          %p170 = pneg %p53
        $region18: #{conv2d_tanh.1} parent=11 // pred_check_branch
          %172 = sbr.rel (%p170) target = $region20
        $region19: #{conv2d_tanh.1} parent=11 // pred_region
          _
        $region20: #{conv2d_tanh.1} parent=11 // pred_fallthru
          _
        // Predicated region
        $region21: #{conv2d_tanh.1} parent=11 // pred_check
          %p173 = pneg %p74
        $region22: #{conv2d_tanh.1} parent=11 // pred_check_branch
          %175 = sbr.rel (%p173) target = $region24
        $region23: #{conv2d_tanh.1} parent=11 // pred_region
          _
        $region24: #{conv2d_tanh.1} parent=11 // pred_fallthru
          _
      $region12: #{conv2d_tanh.1} parent=5 // pred_fallthru
        _
      %p176 = scmp.lt.s32.totalorder %s11, 2
      // Predicated region
      $region25: #{conv2d_tanh.1} parent=5 // pred_check
        %p177 = pneg %p176
      $region26: #{conv2d_tanh.1} parent=5 // pred_check_branch
        %179 = sbr.rel (%p177) target = $region28
      $region27: #{conv2d_tanh.1} parent=5 // pred_region
        // Predicated region
        $region29: #{conv2d_tanh.1} parent=27 // pred_check
          %p180 = pneg %p94
        $region30: #{conv2d_tanh.1} parent=27 // pred_check_branch
          %182 = sbr.rel (%p180) target = $region32
        $region31: #{conv2d_tanh.1} parent=27 // pred_region
          %s183 = sand.u32 %s84, 1
          %s184 = sand.u32 %s84, 1
          %s185 = smul.addr %s184, 192
          %s186 = scalar_lea.vmem [#allocation2], %s185
          %s187 = smul.u32 16, %s11
          %s188 = smul.addr %s187, 4
          %s189 = scalar_lea.vmem %s3, %s188
          // Predicated region
          $region33: #{conv2d_tanh.1} parent=31 // pred_check
            _
          $region34: #{conv2d_tanh.1} parent=31 // pred_check_branch
            %191 = sbr.rel (0) target = $region36
          $region35: #{conv2d_tanh.1} parent=31 // pred_region
            // Predicated region
            $region37: #{conv2d_tanh.1} parent=35 // pred_check
              _
            $region38: #{conv2d_tanh.1} parent=35 // pred_check_branch
              %193 = sbr.rel (0) target = $region40
            $region39: #{conv2d_tanh.1} parent=35 // pred_region
              loop: start=0, step=1, limit=1
              $region41: #{conv2d_tanh.1} parent=39 // loop_pre_header
                _
              $region42: #{conv2d_tanh.1} parent=39 // loop_header
                %s195 = sphi 0, %s199
                %p196 = scmp.ge.s32.totalorder %s195, 1
                %s200 = sphi %s189, %s189
                %s201 = sphi %s186, %s186
              $region43: #{conv2d_tanh.1} parent=39 // loop_header_branch
                %198 = sbr.rel (%p196) target = $region47
              $region44: #{conv2d_tanh.1} parent=39 // loop_body
                %v202 = vld [vmem:[%s200] sm:$0xff]
                %203 = vst [vmem:[%s201] sm:$0xff] %v202
                %v204 = vld [vmem:[%s200 + $0x8] sm:$0xff]
                %205 = vst [vmem:[%s201 + $0x8] sm:$0xff] %v204
                %v206 = vld [vmem:[%s200 + $0x10] sm:$0xff]
                %207 = vst [vmem:[%s201 + $0x10] sm:$0xff] %v206
                %v208 = vld [vmem:[%s200 + $0x18] sm:$0xff]
                %209 = vst [vmem:[%s201 + $0x18] sm:$0xff] %v208
                %v210 = vld [vmem:[%s200 + $0x20] sm:$0xff]
                %211 = vst [vmem:[%s201 + $0x20] sm:$0xff] %v210
                %v212 = vld [vmem:[%s200 + $0x28] sm:$0xff]
                %213 = vst [vmem:[%s201 + $0x28] sm:$0xff] %v212
                %v214 = vld [vmem:[%s200 + $0x30] sm:$0xff]
                %215 = vst [vmem:[%s201 + $0x30] sm:$0xff] %v214
                %v216 = vld [vmem:[%s200 + $0x38] sm:$0xff]
                %217 = vst [vmem:[%s201 + $0x38] sm:$0xff] %v216
                %v218 = vld [vmem:[%s200 + $0x80] sm:$0xff]
                %219 = vst [vmem:[%s201 + $0x40] sm:$0xff] %v218
                %v220 = vld [vmem:[%s200 + $0x88] sm:$0xff]
                %221 = vst [vmem:[%s201 + $0x48] sm:$0xff] %v220
                %v222 = vld [vmem:[%s200 + $0x90] sm:$0xff]
                %223 = vst [vmem:[%s201 + $0x50] sm:$0xff] %v222
                %v224 = vld [vmem:[%s200 + $0x98] sm:$0xff]
                %225 = vst [vmem:[%s201 + $0x58] sm:$0xff] %v224
                %v226 = vld [vmem:[%s200 + $0xa0] sm:$0xff]
                %227 = vst [vmem:[%s201 + $0x60] sm:$0xff] %v226
                %v228 = vld [vmem:[%s200 + $0xa8] sm:$0xff]
                %229 = vst [vmem:[%s201 + $0x68] sm:$0xff] %v228
                %v230 = vld [vmem:[%s200 + $0xb0] sm:$0xff]
                %231 = vst [vmem:[%s201 + $0x70] sm:$0xff] %v230
                %v232 = vld [vmem:[%s200 + $0xb8] sm:$0xff]
                %233 = vst [vmem:[%s201 + $0x78] sm:$0xff] %v232
                %v234 = vld [vmem:[%s200 + $0x100] sm:$0xff]
                %235 = vst [vmem:[%s201 + $0x80] sm:$0xff] %v234
                %v236 = vld [vmem:[%s200 + $0x108] sm:$0xff]
                %237 = vst [vmem:[%s201 + $0x88] sm:$0xff] %v236
                %v238 = vld [vmem:[%s200 + $0x110] sm:$0xff]
                %239 = vst [vmem:[%s201 + $0x90] sm:$0xff] %v238
                %v240 = vld [vmem:[%s200 + $0x118] sm:$0xff]
                %241 = vst [vmem:[%s201 + $0x98] sm:$0xff] %v240
                %v242 = vld [vmem:[%s200 + $0x120] sm:$0xff]
                %243 = vst [vmem:[%s201 + $0xa0] sm:$0xff] %v242
                %v244 = vld [vmem:[%s200 + $0x128] sm:$0xff]
                %245 = vst [vmem:[%s201 + $0xa8] sm:$0xff] %v244
                %v246 = vld [vmem:[%s200 + $0x130] sm:$0xff]
                %247 = vst [vmem:[%s201 + $0xb0] sm:$0xff] %v246
                %v248 = vld [vmem:[%s200 + $0x138] sm:$0xff]
                %249 = vst [vmem:[%s201 + $0xb8] sm:$0xff] %v248
              $region45: #{conv2d_tanh.1} parent=39 // loop_footer
                %s199 = sadd.s32 1, %s195
              $region46: #{conv2d_tanh.1} parent=39 // loop_footer_branch
                %194 = sbr.rel target = $region42
              $region47: #{conv2d_tanh.1} parent=39 // loop_exit
                _
            $region40: #{conv2d_tanh.1} parent=35 // pred_fallthru
              _
            // Predicated region
            $region48: #{conv2d_tanh.1} parent=35 // pred_check
              _
            $region49: #{conv2d_tanh.1} parent=35 // pred_check_branch
              %251 = sbr.rel target = $region51
            $region50: #{conv2d_tanh.1} parent=35 // pred_region
              _
            $region51: #{conv2d_tanh.1} parent=35 // pred_fallthru
              _
          $region36: #{conv2d_tanh.1} parent=31 // pred_fallthru
            _
          %252 = vnop
        $region32: #{conv2d_tanh.1} parent=27 // pred_fallthru
          _
        // Predicated region
        $region52: #{conv2d_tanh.1} parent=27 // pred_check
          %p253 = pneg %p120
        $region53: #{conv2d_tanh.1} parent=27 // pred_check_branch
          %255 = sbr.rel (%p253) target = $region55
        $region54: #{conv2d_tanh.1} parent=27 // pred_region
          %s256 = sand.u32 %s110, 1
          %s257 = sand.u32 %s110, 1
          %s258 = smul.addr %s257, 128
          %s259 = scalar_lea.vmem [#allocation3], %s258
          %s260 = smul.u32 16, %s11
          %s261 = smul.addr %s260, 4
          %s262 = scalar_lea.vmem %s4, %s261
          // Predicated region
          $region56: #{conv2d_tanh.1} parent=54 // pred_check
            _
          $region57: #{conv2d_tanh.1} parent=54 // pred_check_branch
            %264 = sbr.rel (0) target = $region59
          $region58: #{conv2d_tanh.1} parent=54 // pred_region
            // Predicated region
            $region60: #{conv2d_tanh.1} parent=58 // pred_check
              _
            $region61: #{conv2d_tanh.1} parent=58 // pred_check_branch
              %266 = sbr.rel (0) target = $region63
            $region62: #{conv2d_tanh.1} parent=58 // pred_region
              loop: start=0, step=1, limit=1
              $region64: #{conv2d_tanh.1} parent=62 // loop_pre_header
                _
              $region65: #{conv2d_tanh.1} parent=62 // loop_header
                %s268 = sphi 0, %s272
                %p269 = scmp.ge.s32.totalorder %s268, 1
                %s273 = sphi %s262, %s262
                %s274 = sphi %s259, %s259
              $region66: #{conv2d_tanh.1} parent=62 // loop_header_branch
                %271 = sbr.rel (%p269) target = $region70
              $region67: #{conv2d_tanh.1} parent=62 // loop_body
                %v275 = vld [vmem:[%s273] sm:$0xff]
                %276 = vst [vmem:[%s274] sm:$0xff] %v275
                %v277 = vld [vmem:[%s273 + $0x8] sm:$0xff]
                %278 = vst [vmem:[%s274 + $0x8] sm:$0xff] %v277
                %v279 = vld [vmem:[%s273 + $0x10] sm:$0xff]
                %280 = vst [vmem:[%s274 + $0x10] sm:$0xff] %v279
                %v281 = vld [vmem:[%s273 + $0x18] sm:$0xff]
                %282 = vst [vmem:[%s274 + $0x18] sm:$0xff] %v281
                %v283 = vld [vmem:[%s273 + $0x20] sm:$0xff]
                %284 = vst [vmem:[%s274 + $0x20] sm:$0xff] %v283
                %v285 = vld [vmem:[%s273 + $0x28] sm:$0xff]
                %286 = vst [vmem:[%s274 + $0x28] sm:$0xff] %v285
                %v287 = vld [vmem:[%s273 + $0x30] sm:$0xff]
                %288 = vst [vmem:[%s274 + $0x30] sm:$0xff] %v287
                %v289 = vld [vmem:[%s273 + $0x38] sm:$0xff]
                %290 = vst [vmem:[%s274 + $0x38] sm:$0xff] %v289
                %v291 = vld [vmem:[%s273 + $0x80] sm:$0xff]
                %292 = vst [vmem:[%s274 + $0x40] sm:$0xff] %v291
                %v293 = vld [vmem:[%s273 + $0x88] sm:$0xff]
                %294 = vst [vmem:[%s274 + $0x48] sm:$0xff] %v293
                %v295 = vld [vmem:[%s273 + $0x90] sm:$0xff]
                %296 = vst [vmem:[%s274 + $0x50] sm:$0xff] %v295
                %v297 = vld [vmem:[%s273 + $0x98] sm:$0xff]
                %298 = vst [vmem:[%s274 + $0x58] sm:$0xff] %v297
                %v299 = vld [vmem:[%s273 + $0xa0] sm:$0xff]
                %300 = vst [vmem:[%s274 + $0x60] sm:$0xff] %v299
                %v301 = vld [vmem:[%s273 + $0xa8] sm:$0xff]
                %302 = vst [vmem:[%s274 + $0x68] sm:$0xff] %v301
                %v303 = vld [vmem:[%s273 + $0xb0] sm:$0xff]
                %304 = vst [vmem:[%s274 + $0x70] sm:$0xff] %v303
                %v305 = vld [vmem:[%s273 + $0xb8] sm:$0xff]
                %306 = vst [vmem:[%s274 + $0x78] sm:$0xff] %v305
              $region68: #{conv2d_tanh.1} parent=62 // loop_footer
                %s272 = sadd.s32 1, %s268
              $region69: #{conv2d_tanh.1} parent=62 // loop_footer_branch
                %267 = sbr.rel target = $region65
              $region70: #{conv2d_tanh.1} parent=62 // loop_exit
                _
            $region63: #{conv2d_tanh.1} parent=58 // pred_fallthru
              _
            // Predicated region
            $region71: #{conv2d_tanh.1} parent=58 // pred_check
              _
            $region72: #{conv2d_tanh.1} parent=58 // pred_check_branch
              %308 = sbr.rel target = $region74
            $region73: #{conv2d_tanh.1} parent=58 // pred_region
              _
            $region74: #{conv2d_tanh.1} parent=58 // pred_fallthru
              _
          $region59: #{conv2d_tanh.1} parent=54 // pred_fallthru
            _
          %309 = vnop
        $region55: #{conv2d_tanh.1} parent=27 // pred_fallthru
          _
      $region28: #{conv2d_tanh.1} parent=5 // pred_fallthru
        _
      %p310 = scmp.le.s32.totalorder 1, %s11
      %p311 = scmp.lt.s32.totalorder %s11, 3
      %p312 = pnand %p310, %p311
      %p313 = pneg %p312
      // Predicated region
      $region75: #{conv2d_tanh.1} parent=5 // pred_check
        _
      $region76: #{conv2d_tanh.1} parent=5 // pred_check_branch
        %315 = sbr.rel (%p312) target = $region78
      $region77: #{conv2d_tanh.1} parent=5 // pred_region
        %s316 = ssub.s32 %s11, 1
        %s317 = sand.u32 %s87, 1
        %s318 = sand.u32 %s87, 1
        %s319 = smul.addr %s318, 192
        %s320 = scalar_lea.vmem [#allocation2], %s319
        // Predicated region
        $region79: #{conv2d_tanh.1} parent=77 // pred_check
          %p321 = pneg %p100
        $region80: #{conv2d_tanh.1} parent=77 // pred_check_branch
          %323 = sbr.rel (%p321) target = $region82
        $region81: #{conv2d_tanh.1} parent=77 // pred_region
          _
        $region82: #{conv2d_tanh.1} parent=77 // pred_fallthru
          _
        %s324 = sand.u32 %s113, 1
        %s325 = sand.u32 %s113, 1
        %s326 = smul.addr %s325, 128
        %s327 = scalar_lea.vmem [#allocation3], %s326
        // Predicated region
        $region83: #{conv2d_tanh.1} parent=77 // pred_check
          %p328 = pneg %p126
        $region84: #{conv2d_tanh.1} parent=77 // pred_check_branch
          %330 = sbr.rel (%p328) target = $region86
        $region85: #{conv2d_tanh.1} parent=77 // pred_region
          _
        $region86: #{conv2d_tanh.1} parent=77 // pred_fallthru
          _
        %p331 = pneg %p32
        %p332 = pneg %p29
        %p333 = pneg %p53
        %p334 = pneg %p50
        %p335 = pneg %p74
        %p336 = pneg %p71
        %s337 = sand.u32 %s87, 1
        %s338 = sand.u32 %s87, 1
        %s339 = smul.addr %s338, 192
        %s340 = scalar_lea.vmem [#allocation2], %s339
        %p341 = pneg %p100
        %p342 = pneg %p97
        %s343 = sand.u32 %s113, 1
        %s344 = sand.u32 %s113, 1
        %s345 = smul.addr %s344, 128
        %s346 = scalar_lea.vmem [#allocation3], %s345
        %p347 = pneg %p126
        %p348 = pneg %p123
        %p349 = pneg %p152
        %p350 = pneg %p149
        %s351 = sand.u32 %s139, 1
        %s352 = sand.u32 %s139, 1
        %s353 = smul.addr %s352, 512
        %s354 = scalar_lea.vmem [#allocation4], %s353
        %s355 = smul.u32 16, %s16
        %s356 = smul.u32 16, %s16
        %s357 = smul.u32 16, %s16
        %v359 = vld [vmem:[%s0] sm:$0xf]
        %v360 = vld [vmem:[%s0 + $0x4] sm:$0xf]
        %v361 = vld [vmem:[%s0 + $0x8] sm:$0xf]
        %v362 = vld [vmem:[%s0 + $0xc] sm:$0xf]
        %v363 = vld [vmem:[%s320] sm:$0xff]
        %v364 = vld [vmem:[%s320 + $0x8] sm:$0xff]
        %v365 = vld [vmem:[%s320 + $0x10] sm:$0xff]
        %v366 = vld [vmem:[%s320 + $0x18] sm:$0xff]
        %v367 = vld [vmem:[%s320 + $0x20] sm:$0xff]
        %v368 = vld [vmem:[%s320 + $0x28] sm:$0xff]
        %v369 = vld [vmem:[%s320 + $0x30] sm:$0xff]
        %v370 = vld [vmem:[%s320 + $0x38] sm:$0xff]
        %v371 = vld [vmem:[%s320 + $0x40] sm:$0xff]
        %v372 = vld [vmem:[%s320 + $0x48] sm:$0xff]
        %v373 = vld [vmem:[%s320 + $0x50] sm:$0xff]
        %v374 = vld [vmem:[%s320 + $0x58] sm:$0xff]
        %v375 = vld [vmem:[%s320 + $0x60] sm:$0xff]
        %v376 = vld [vmem:[%s320 + $0x68] sm:$0xff]
        %v377 = vld [vmem:[%s320 + $0x70] sm:$0xff]
        %v378 = vld [vmem:[%s320 + $0x78] sm:$0xff]
        %v379 = vld [vmem:[%s320 + $0x80] sm:$0x11]
        %v380 = vld [vmem:[%s320 + $0x88] sm:$0x11]
        %v381 = vld [vmem:[%s320 + $0x90] sm:$0x11]
        %v382 = vld [vmem:[%s320 + $0x98] sm:$0x11]
        %v383 = vld [vmem:[%s320 + $0xa0] sm:$0x11]
        %v384 = vld [vmem:[%s320 + $0xa8] sm:$0x11]
        %v385 = vld [vmem:[%s320 + $0xb0] sm:$0x11]
        %v386 = vld [vmem:[%s320 + $0xb8] sm:$0x11]
        %v387 = vld [vmem:[%s1] sm:$0xf]
        %v388 = vld [vmem:[%s1 + $0x4] sm:$0xf]
        %v389 = vld [vmem:[%s1 + $0x8] sm:$0xf]
        %v390 = vld [vmem:[%s1 + $0xc] sm:$0xf]
        %v391 = vld [vmem:[%s327] sm:$0xff]
        %v392 = vld [vmem:[%s327 + $0x8] sm:$0xff]
        %v393 = vld [vmem:[%s327 + $0x10] sm:$0xff]
        %v394 = vld [vmem:[%s327 + $0x18] sm:$0xff]
        %v395 = vld [vmem:[%s327 + $0x20] sm:$0xff]
        %v396 = vld [vmem:[%s327 + $0x28] sm:$0xff]
        %v397 = vld [vmem:[%s327 + $0x30] sm:$0xff]
        %v398 = vld [vmem:[%s327 + $0x38] sm:$0xff]
        %v399 = vld [vmem:[%s327 + $0x40] sm:$0x11]
        %v400 = vld [vmem:[%s327 + $0x48] sm:$0x11]
        %v401 = vld [vmem:[%s327 + $0x50] sm:$0x11]
        %v402 = vld [vmem:[%s327 + $0x58] sm:$0x11]
        %v403 = vld [vmem:[%s327 + $0x60] sm:$0x11]
        %v404 = vld [vmem:[%s327 + $0x68] sm:$0x11]
        %v405 = vld [vmem:[%s327 + $0x70] sm:$0x11]
        %v406 = vld [vmem:[%s327 + $0x78] sm:$0x11]
        %v411 = vunpack.c.l.b16 %v387
        %v412 = vunpack.c.l.b16 %v388
        %v413 = vunpack.c.l.b16 %v389
        %v414 = vunpack.c.l.b16 %v390
        %v415 = vpack.c.b16 %v412, %v411
        %v416 = vpack.c.b16 %v414, %v413
        %v433 = vunpack.c.l.b16 %v391
        %v434 = vunpack.c.h.b16 %v391
        %v435 = vunpack.c.l.b16 %v392
        %v436 = vunpack.c.h.b16 %v392
        %v437 = vunpack.c.l.b16 %v393
        %v438 = vunpack.c.h.b16 %v393
        %v439 = vunpack.c.l.b16 %v394
        %v440 = vunpack.c.h.b16 %v394
        %v441 = vunpack.c.l.b16 %v395
        %v442 = vunpack.c.h.b16 %v395
        %v443 = vunpack.c.l.b16 %v396
        %v444 = vunpack.c.h.b16 %v396
        %v445 = vunpack.c.l.b16 %v397
        %v446 = vunpack.c.h.b16 %v397
        %v447 = vunpack.c.l.b16 %v398
        %v448 = vunpack.c.h.b16 %v398
        %v449 = vunpack.c.l.b16 %v399
        %v450 = vunpack.c.h.b16 %v399
        %v451 = vunpack.c.l.b16 %v400
        %v452 = vunpack.c.h.b16 %v400
        %v453 = vunpack.c.l.b16 %v401
        %v454 = vunpack.c.h.b16 %v401
        %v455 = vunpack.c.l.b16 %v402
        %v456 = vunpack.c.h.b16 %v402
        %v457 = vunpack.c.l.b16 %v403
        %v458 = vunpack.c.h.b16 %v403
        %v459 = vunpack.c.l.b16 %v404
        %v460 = vunpack.c.h.b16 %v404
        %v461 = vunpack.c.l.b16 %v405
        %v462 = vunpack.c.h.b16 %v405
        %v463 = vunpack.c.l.b16 %v406
        %v464 = vunpack.c.h.b16 %v406
        %v465 = vpack.c.b16 %v449, %v433
        %v466 = vpack.c.b16 %v450, %v434
        %v467 = vpack.c.b16 %v451, %v435
        %v468 = vpack.c.b16 %v452, %v436
        %v469 = vpack.c.b16 %v453, %v437
        %v470 = vpack.c.b16 %v454, %v438
        %v471 = vpack.c.b16 %v455, %v439
        %v472 = vpack.c.b16 %v456, %v440
        %v473 = vpack.c.b16 %v457, %v441
        %v474 = vpack.c.b16 %v458, %v442
        %v475 = vpack.c.b16 %v459, %v443
        %v476 = vpack.c.b16 %v460, %v444
        %v477 = vpack.c.b16 %v461, %v445
        %v478 = vpack.c.b16 %v462, %v446
        %v479 = vpack.c.b16 %v463, %v447
        %v480 = vpack.c.b16 %v464, %v448
        %vm481 = vcmask 72704
        %v483 = vsel %vm481, %v415, 0
        %v486 = vsel %vm481, %v416, 0
        %vm488 = vcmask 1043456
        %vm489 = vcmask 1044480
        %v490 = vsel %vm488, 4294967295, 65535
        %v491 = vsel %vm489, %v490, 0
        %v493 = vand.u32 %v465, %v491
        %v496 = vand.u32 %v466, %v491
        %v499 = vand.u32 %v467, %v491
        %v502 = vand.u32 %v468, %v491
        %v505 = vand.u32 %v469, %v491
        %v508 = vand.u32 %v470, %v491
        %v511 = vand.u32 %v471, %v491
        %v514 = vand.u32 %v472, %v491
        %v517 = vand.u32 %v473, %v491
        %v520 = vand.u32 %v474, %v491
        %v523 = vand.u32 %v475, %v491
        %v526 = vand.u32 %v476, %v491
        %v529 = vand.u32 %v477, %v491
        %v532 = vand.u32 %v478, %v491
        %v535 = vand.u32 %v479, %v491
        %v538 = vand.u32 %v480, %v491
        %540 = vmatpush.bf16.msra.mxu0 0
        %541 = vmatpush.bf16.msra.mxu0 0
        %542 = vmatpush.bf16.msra.mxu0 0
        %543 = vmatpush.bf16.msra.mxu0 0
        %544 = vmatpush.bf16.msra.mxu0 0
        %545 = vmatpush.bf16.msra.mxu0 0
        %546 = vmatpush.bf16.msra.mxu0 0
        %547 = vmatpush.bf16.msra.mxu0 %v493
        %548 = vmatmul.bf16.gmra.mxu0 %v483
        %v549 = vpop.f32.mrf.mxu0
        %v550 = vadd.f32 0.0, %v549
        %v551 = vpop.f32.mrf.mxu0
        %v552 = vadd.f32 0.0, %v551
        %553 = vmatmul.bf16.gmra.mxu0 %v486
        %v554 = vpop.f32.mrf.mxu0
        %v555 = vadd.f32 0.0, %v554
        %v556 = vpop.f32.mrf.mxu0
        %v557 = vadd.f32 0.0, %v556
        %558 = vdwg.mxu0
        %559 = vmatpush.bf16.msra.mxu0 0
        %560 = vmatpush.bf16.msra.mxu0 0
        %561 = vmatpush.bf16.msra.mxu0 0
        %562 = vmatpush.bf16.msra.mxu0 0
        %563 = vmatpush.bf16.msra.mxu0 0
        %564 = vmatpush.bf16.msra.mxu0 0
        %565 = vmatpush.bf16.msra.mxu0 0
        %566 = vmatpush.bf16.msra.mxu0 %v496
        %567 = vmatmul.bf16.gmra.mxu0 %v483
        %v568 = vpop.f32.mrf.mxu0
        %v569 = vadd.f32 0.0, %v568
        %v570 = vpop.f32.mrf.mxu0
        %v571 = vadd.f32 0.0, %v570
        %572 = vmatmul.bf16.gmra.mxu0 %v486
        %v573 = vpop.f32.mrf.mxu0
        %v574 = vadd.f32 0.0, %v573
        %v575 = vpop.f32.mrf.mxu0
        %v576 = vadd.f32 0.0, %v575
        %577 = vdwg.mxu0
        %578 = vmatpush.bf16.msra.mxu0 0
        %579 = vmatpush.bf16.msra.mxu0 0
        %580 = vmatpush.bf16.msra.mxu0 0
        %581 = vmatpush.bf16.msra.mxu0 0
        %582 = vmatpush.bf16.msra.mxu0 0
        %583 = vmatpush.bf16.msra.mxu0 0
        %584 = vmatpush.bf16.msra.mxu0 0
        %585 = vmatpush.bf16.msra.mxu0 %v499
        %586 = vmatmul.bf16.gmra.mxu0 %v483
        %v587 = vpop.f32.mrf.mxu0
        %v588 = vadd.f32 0.0, %v587
        %v589 = vpop.f32.mrf.mxu0
        %v590 = vadd.f32 0.0, %v589
        %591 = vmatmul.bf16.gmra.mxu0 %v486
        %v592 = vpop.f32.mrf.mxu0
        %v593 = vadd.f32 0.0, %v592
        %v594 = vpop.f32.mrf.mxu0
        %v595 = vadd.f32 0.0, %v594
        %596 = vdwg.mxu0
        %597 = vmatpush.bf16.msra.mxu0 0
        %598 = vmatpush.bf16.msra.mxu0 0
        %599 = vmatpush.bf16.msra.mxu0 0
        %600 = vmatpush.bf16.msra.mxu0 0
        %601 = vmatpush.bf16.msra.mxu0 0
        %602 = vmatpush.bf16.msra.mxu0 0
        %603 = vmatpush.bf16.msra.mxu0 0
        %604 = vmatpush.bf16.msra.mxu0 %v502
        %605 = vmatmul.bf16.gmra.mxu0 %v483
        %v606 = vpop.f32.mrf.mxu0
        %v607 = vadd.f32 0.0, %v606
        %v608 = vpop.f32.mrf.mxu0
        %v609 = vadd.f32 0.0, %v608
        %610 = vmatmul.bf16.gmra.mxu0 %v486
        %v611 = vpop.f32.mrf.mxu0
        %v612 = vadd.f32 0.0, %v611
        %v613 = vpop.f32.mrf.mxu0
        %v614 = vadd.f32 0.0, %v613
        %615 = vdwg.mxu0
        %616 = vmatpush.bf16.msra.mxu0 0
        %617 = vmatpush.bf16.msra.mxu0 0
        %618 = vmatpush.bf16.msra.mxu0 0
        %619 = vmatpush.bf16.msra.mxu0 0
        %620 = vmatpush.bf16.msra.mxu0 0
        %621 = vmatpush.bf16.msra.mxu0 0
        %622 = vmatpush.bf16.msra.mxu0 0
        %623 = vmatpush.bf16.msra.mxu0 %v505
        %624 = vmatmul.bf16.gmra.mxu0 %v483
        %v625 = vpop.f32.mrf.mxu0
        %v626 = vadd.f32 0.0, %v625
        %v627 = vpop.f32.mrf.mxu0
        %v628 = vadd.f32 0.0, %v627
        %629 = vmatmul.bf16.gmra.mxu0 %v486
        %v630 = vpop.f32.mrf.mxu0
        %v631 = vadd.f32 0.0, %v630
        %v632 = vpop.f32.mrf.mxu0
        %v633 = vadd.f32 0.0, %v632
        %634 = vdwg.mxu0
        %635 = vmatpush.bf16.msra.mxu0 0
        %636 = vmatpush.bf16.msra.mxu0 0
        %637 = vmatpush.bf16.msra.mxu0 0
        %638 = vmatpush.bf16.msra.mxu0 0
        %639 = vmatpush.bf16.msra.mxu0 0
        %640 = vmatpush.bf16.msra.mxu0 0
        %641 = vmatpush.bf16.msra.mxu0 0
        %642 = vmatpush.bf16.msra.mxu0 %v508
        %643 = vmatmul.bf16.gmra.mxu0 %v483
        %v644 = vpop.f32.mrf.mxu0
        %v645 = vadd.f32 0.0, %v644
        %v646 = vpop.f32.mrf.mxu0
        %v647 = vadd.f32 0.0, %v646
        %648 = vmatmul.bf16.gmra.mxu0 %v486
        %v649 = vpop.f32.mrf.mxu0
        %v650 = vadd.f32 0.0, %v649
        %v651 = vpop.f32.mrf.mxu0
        %v652 = vadd.f32 0.0, %v651
        %653 = vdwg.mxu0
        %654 = vmatpush.bf16.msra.mxu0 0
        %655 = vmatpush.bf16.msra.mxu0 0
        %656 = vmatpush.bf16.msra.mxu0 0
        %657 = vmatpush.bf16.msra.mxu0 0
        %658 = vmatpush.bf16.msra.mxu0 0
        %659 = vmatpush.bf16.msra.mxu0 0
        %660 = vmatpush.bf16.msra.mxu0 0
        %661 = vmatpush.bf16.msra.mxu0 %v511
        %662 = vmatmul.bf16.gmra.mxu0 %v483
        %v663 = vpop.f32.mrf.mxu0
        %v664 = vadd.f32 0.0, %v663
        %v665 = vpop.f32.mrf.mxu0
        %v666 = vadd.f32 0.0, %v665
        %667 = vmatmul.bf16.gmra.mxu0 %v486
        %v668 = vpop.f32.mrf.mxu0
        %v669 = vadd.f32 0.0, %v668
        %v670 = vpop.f32.mrf.mxu0
        %v671 = vadd.f32 0.0, %v670
        %672 = vdwg.mxu0
        %673 = vmatpush.bf16.msra.mxu0 0
        %674 = vmatpush.bf16.msra.mxu0 0
        %675 = vmatpush.bf16.msra.mxu0 0
        %676 = vmatpush.bf16.msra.mxu0 0
        %677 = vmatpush.bf16.msra.mxu0 0
        %678 = vmatpush.bf16.msra.mxu0 0
        %679 = vmatpush.bf16.msra.mxu0 0
        %680 = vmatpush.bf16.msra.mxu0 %v514
        %681 = vmatmul.bf16.gmra.mxu0 %v483
        %v682 = vpop.f32.mrf.mxu0
        %v683 = vadd.f32 0.0, %v682
        %v684 = vpop.f32.mrf.mxu0
        %v685 = vadd.f32 0.0, %v684
        %686 = vmatmul.bf16.gmra.mxu0 %v486
        %v687 = vpop.f32.mrf.mxu0
        %v688 = vadd.f32 0.0, %v687
        %v689 = vpop.f32.mrf.mxu0
        %v690 = vadd.f32 0.0, %v689
        %691 = vdwg.mxu0
        %692 = vmatpush.bf16.msra.mxu0 0
        %693 = vmatpush.bf16.msra.mxu0 0
        %694 = vmatpush.bf16.msra.mxu0 0
        %695 = vmatpush.bf16.msra.mxu0 0
        %696 = vmatpush.bf16.msra.mxu0 0
        %697 = vmatpush.bf16.msra.mxu0 0
        %698 = vmatpush.bf16.msra.mxu0 0
        %699 = vmatpush.bf16.msra.mxu0 %v517
        %700 = vmatmul.bf16.gmra.mxu0 %v483
        %v701 = vpop.f32.mrf.mxu0
        %v702 = vadd.f32 0.0, %v701
        %v703 = vpop.f32.mrf.mxu0
        %v704 = vadd.f32 0.0, %v703
        %705 = vmatmul.bf16.gmra.mxu0 %v486
        %v706 = vpop.f32.mrf.mxu0
        %v707 = vadd.f32 0.0, %v706
        %v708 = vpop.f32.mrf.mxu0
        %v709 = vadd.f32 0.0, %v708
        %710 = vdwg.mxu0
        %711 = vmatpush.bf16.msra.mxu0 0
        %712 = vmatpush.bf16.msra.mxu0 0
        %713 = vmatpush.bf16.msra.mxu0 0
        %714 = vmatpush.bf16.msra.mxu0 0
        %715 = vmatpush.bf16.msra.mxu0 0
        %716 = vmatpush.bf16.msra.mxu0 0
        %717 = vmatpush.bf16.msra.mxu0 0
        %718 = vmatpush.bf16.msra.mxu0 %v520
        %719 = vmatmul.bf16.gmra.mxu0 %v483
        %v720 = vpop.f32.mrf.mxu0
        %v721 = vadd.f32 0.0, %v720
        %v722 = vpop.f32.mrf.mxu0
        %v723 = vadd.f32 0.0, %v722
        %724 = vmatmul.bf16.gmra.mxu0 %v486
        %v725 = vpop.f32.mrf.mxu0
        %v726 = vadd.f32 0.0, %v725
        %v727 = vpop.f32.mrf.mxu0
        %v728 = vadd.f32 0.0, %v727
        %729 = vdwg.mxu0
        %730 = vmatpush.bf16.msra.mxu0 0
        %731 = vmatpush.bf16.msra.mxu0 0
        %732 = vmatpush.bf16.msra.mxu0 0
        %733 = vmatpush.bf16.msra.mxu0 0
        %734 = vmatpush.bf16.msra.mxu0 0
        %735 = vmatpush.bf16.msra.mxu0 0
        %736 = vmatpush.bf16.msra.mxu0 0
        %737 = vmatpush.bf16.msra.mxu0 %v523
        %738 = vmatmul.bf16.gmra.mxu0 %v483
        %v739 = vpop.f32.mrf.mxu0
        %v740 = vadd.f32 0.0, %v739
        %v741 = vpop.f32.mrf.mxu0
        %v742 = vadd.f32 0.0, %v741
        %743 = vmatmul.bf16.gmra.mxu0 %v486
        %v744 = vpop.f32.mrf.mxu0
        %v745 = vadd.f32 0.0, %v744
        %v746 = vpop.f32.mrf.mxu0
        %v747 = vadd.f32 0.0, %v746
        %748 = vdwg.mxu0
        %749 = vmatpush.bf16.msra.mxu0 0
        %750 = vmatpush.bf16.msra.mxu0 0
        %751 = vmatpush.bf16.msra.mxu0 0
        %752 = vmatpush.bf16.msra.mxu0 0
        %753 = vmatpush.bf16.msra.mxu0 0
        %754 = vmatpush.bf16.msra.mxu0 0
        %755 = vmatpush.bf16.msra.mxu0 0
        %756 = vmatpush.bf16.msra.mxu0 %v526
        %757 = vmatmul.bf16.gmra.mxu0 %v483
        %v758 = vpop.f32.mrf.mxu0
        %v759 = vadd.f32 0.0, %v758
        %v760 = vpop.f32.mrf.mxu0
        %v761 = vadd.f32 0.0, %v760
        %762 = vmatmul.bf16.gmra.mxu0 %v486
        %v763 = vpop.f32.mrf.mxu0
        %v764 = vadd.f32 0.0, %v763
        %v765 = vpop.f32.mrf.mxu0
        %v766 = vadd.f32 0.0, %v765
        %767 = vdwg.mxu0
        %768 = vmatpush.bf16.msra.mxu0 0
        %769 = vmatpush.bf16.msra.mxu0 0
        %770 = vmatpush.bf16.msra.mxu0 0
        %771 = vmatpush.bf16.msra.mxu0 0
        %772 = vmatpush.bf16.msra.mxu0 0
        %773 = vmatpush.bf16.msra.mxu0 0
        %774 = vmatpush.bf16.msra.mxu0 0
        %775 = vmatpush.bf16.msra.mxu0 %v529
        %776 = vmatmul.bf16.gmra.mxu0 %v483
        %v777 = vpop.f32.mrf.mxu0
        %v778 = vadd.f32 0.0, %v777
        %v779 = vpop.f32.mrf.mxu0
        %v780 = vadd.f32 0.0, %v779
        %781 = vmatmul.bf16.gmra.mxu0 %v486
        %v782 = vpop.f32.mrf.mxu0
        %v783 = vadd.f32 0.0, %v782
        %v784 = vpop.f32.mrf.mxu0
        %v785 = vadd.f32 0.0, %v784
        %786 = vdwg.mxu0
        %787 = vmatpush.bf16.msra.mxu0 0
        %788 = vmatpush.bf16.msra.mxu0 0
        %789 = vmatpush.bf16.msra.mxu0 0
        %790 = vmatpush.bf16.msra.mxu0 0
        %791 = vmatpush.bf16.msra.mxu0 0
        %792 = vmatpush.bf16.msra.mxu0 0
        %793 = vmatpush.bf16.msra.mxu0 0
        %794 = vmatpush.bf16.msra.mxu0 %v532
        %795 = vmatmul.bf16.gmra.mxu0 %v483
        %v796 = vpop.f32.mrf.mxu0
        %v797 = vadd.f32 0.0, %v796
        %v798 = vpop.f32.mrf.mxu0
        %v799 = vadd.f32 0.0, %v798
        %800 = vmatmul.bf16.gmra.mxu0 %v486
        %v801 = vpop.f32.mrf.mxu0
        %v802 = vadd.f32 0.0, %v801
        %v803 = vpop.f32.mrf.mxu0
        %v804 = vadd.f32 0.0, %v803
        %805 = vdwg.mxu0
        %806 = vmatpush.bf16.msra.mxu0 0
        %807 = vmatpush.bf16.msra.mxu0 0
        %808 = vmatpush.bf16.msra.mxu0 0
        %809 = vmatpush.bf16.msra.mxu0 0
        %810 = vmatpush.bf16.msra.mxu0 0
        %811 = vmatpush.bf16.msra.mxu0 0
        %812 = vmatpush.bf16.msra.mxu0 0
        %813 = vmatpush.bf16.msra.mxu0 %v535
        %814 = vmatmul.bf16.gmra.mxu0 %v483
        %v815 = vpop.f32.mrf.mxu0
        %v816 = vadd.f32 0.0, %v815
        %v817 = vpop.f32.mrf.mxu0
        %v818 = vadd.f32 0.0, %v817
        %819 = vmatmul.bf16.gmra.mxu0 %v486
        %v820 = vpop.f32.mrf.mxu0
        %v821 = vadd.f32 0.0, %v820
        %v822 = vpop.f32.mrf.mxu0
        %v823 = vadd.f32 0.0, %v822
        %824 = vdwg.mxu0
        %825 = vmatpush.bf16.msra.mxu0 0
        %826 = vmatpush.bf16.msra.mxu0 0
        %827 = vmatpush.bf16.msra.mxu0 0
        %828 = vmatpush.bf16.msra.mxu0 0
        %829 = vmatpush.bf16.msra.mxu0 0
        %830 = vmatpush.bf16.msra.mxu0 0
        %831 = vmatpush.bf16.msra.mxu0 0
        %832 = vmatpush.bf16.msra.mxu0 %v538
        %833 = vmatmul.bf16.gmra.mxu0 %v483
        %v834 = vpop.f32.mrf.mxu0
        %v835 = vadd.f32 0.0, %v834
        %v836 = vpop.f32.mrf.mxu0
        %v837 = vadd.f32 0.0, %v836
        %838 = vmatmul.bf16.gmra.mxu0 %v486
        %v839 = vpop.f32.mrf.mxu0
        %v840 = vadd.f32 0.0, %v839
        %v841 = vpop.f32.mrf.mxu0
        %v842 = vadd.f32 0.0, %v841
        %843 = vdwg.mxu0
        %v848 = vunpack.c.l.b16 %v359
        %v849 = vunpack.c.l.b16 %v360
        %v850 = vunpack.c.l.b16 %v361
        %v851 = vunpack.c.l.b16 %v362
        %v852 = vpack.c.b16 %v849, %v848
        %v853 = vpack.c.b16 %v851, %v850
        %v878 = vunpack.c.l.b16 %v363
        %v879 = vunpack.c.h.b16 %v363
        %v880 = vunpack.c.l.b16 %v364
        %v881 = vunpack.c.h.b16 %v364
        %v882 = vunpack.c.l.b16 %v365
        %v883 = vunpack.c.h.b16 %v365
        %v884 = vunpack.c.l.b16 %v366
        %v885 = vunpack.c.h.b16 %v366
        %v886 = vunpack.c.l.b16 %v367
        %v887 = vunpack.c.h.b16 %v367
        %v888 = vunpack.c.l.b16 %v368
        %v889 = vunpack.c.h.b16 %v368
        %v890 = vunpack.c.l.b16 %v369
        %v891 = vunpack.c.h.b16 %v369
        %v892 = vunpack.c.l.b16 %v370
        %v893 = vunpack.c.h.b16 %v370
        %v894 = vunpack.c.l.b16 %v371
        %v895 = vunpack.c.h.b16 %v371
        %v896 = vunpack.c.l.b16 %v372
        %v897 = vunpack.c.h.b16 %v372
        %v898 = vunpack.c.l.b16 %v373
        %v899 = vunpack.c.h.b16 %v373
        %v900 = vunpack.c.l.b16 %v374
        %v901 = vunpack.c.h.b16 %v374
        %v902 = vunpack.c.l.b16 %v375
        %v903 = vunpack.c.h.b16 %v375
        %v904 = vunpack.c.l.b16 %v376
        %v905 = vunpack.c.h.b16 %v376
        %v906 = vunpack.c.l.b16 %v377
        %v907 = vunpack.c.h.b16 %v377
        %v908 = vunpack.c.l.b16 %v378
        %v909 = vunpack.c.h.b16 %v378
        %v910 = vunpack.c.l.b16 %v379
        %v911 = vunpack.c.h.b16 %v379
        %v912 = vunpack.c.l.b16 %v380
        %v913 = vunpack.c.h.b16 %v380
        %v914 = vunpack.c.l.b16 %v381
        %v915 = vunpack.c.h.b16 %v381
        %v916 = vunpack.c.l.b16 %v382
        %v917 = vunpack.c.h.b16 %v382
        %v918 = vunpack.c.l.b16 %v383
        %v919 = vunpack.c.h.b16 %v383
        %v920 = vunpack.c.l.b16 %v384
        %v921 = vunpack.c.h.b16 %v384
        %v922 = vunpack.c.l.b16 %v385
        %v923 = vunpack.c.h.b16 %v385
        %v924 = vunpack.c.l.b16 %v386
        %v925 = vunpack.c.h.b16 %v386
        %v926 = vpack.c.b16 %v894, %v878
        %v927 = vpack.c.b16 %v895, %v879
        %v928 = vpack.c.b16 %v896, %v880
        %v929 = vpack.c.b16 %v897, %v881
        %v930 = vpack.c.b16 %v898, %v882
        %v931 = vpack.c.b16 %v899, %v883
        %v932 = vpack.c.b16 %v900, %v884
        %v933 = vpack.c.b16 %v901, %v885
        %v934 = vpack.c.b16 %v902, %v886
        %v935 = vpack.c.b16 %v903, %v887
        %v936 = vpack.c.b16 %v904, %v888
        %v937 = vpack.c.b16 %v905, %v889
        %v938 = vpack.c.b16 %v906, %v890
        %v939 = vpack.c.b16 %v907, %v891
        %v940 = vpack.c.b16 %v908, %v892
        %v941 = vpack.c.b16 %v909, %v893
        %v942 = vpack.c.b16 %v910, %v910
        %v943 = vpack.c.b16 %v911, %v911
        %v944 = vpack.c.b16 %v912, %v912
        %v945 = vpack.c.b16 %v913, %v913
        %v946 = vpack.c.b16 %v914, %v914
        %v947 = vpack.c.b16 %v915, %v915
        %v948 = vpack.c.b16 %v916, %v916
        %v949 = vpack.c.b16 %v917, %v917
        %v950 = vpack.c.b16 %v918, %v918
        %v951 = vpack.c.b16 %v919, %v919
        %v952 = vpack.c.b16 %v920, %v920
        %v953 = vpack.c.b16 %v921, %v921
        %v954 = vpack.c.b16 %v922, %v922
        %v955 = vpack.c.b16 %v923, %v923
        %v956 = vpack.c.b16 %v924, %v924
        %v957 = vpack.c.b16 %v925, %v925
        %vm974 = vcmask 146432
        %v976 = vsel %vm974, %v852, 0
        %v979 = vsel %vm974, %v853, 0
        %vm981 = vcmask 1040384
        %v983 = vsel %vm981, %v942, 0
        %v986 = vsel %vm981, %v943, 0
        %v989 = vsel %vm981, %v944, 0
        %v992 = vsel %vm981, %v945, 0
        %v995 = vsel %vm981, %v946, 0
        %v998 = vsel %vm981, %v947, 0
        %v1001 = vsel %vm981, %v948, 0
        %v1004 = vsel %vm981, %v949, 0
        %v1007 = vsel %vm981, %v950, 0
        %v1010 = vsel %vm981, %v951, 0
        %v1013 = vsel %vm981, %v952, 0
        %v1016 = vsel %vm981, %v953, 0
        %v1019 = vsel %vm981, %v954, 0
        %v1022 = vsel %vm981, %v955, 0
        %v1025 = vsel %vm981, %v956, 0
        %v1028 = vsel %vm981, %v957, 0
        %1030 = vmatpush.bf16.msra.mxu0 0
        %1031 = vmatpush.bf16.msra.mxu0 0
        %1032 = vmatpush.bf16.msra.mxu0 0
        %1033 = vmatpush.bf16.msra.mxu0 0
        %1034 = vmatpush.bf16.msra.mxu0 0
        %1035 = vmatpush.bf16.msra.mxu0 0
        %1036 = vmatpush.bf16.msra.mxu0 %v983
        %1037 = vmatpush.bf16.msra.mxu0 %v926
        %1038 = vmatmul.bf16.gmra.mxu0 %v976
        %v1039 = vpop.f32.mrf.mxu0
        %v1040 = vadd.f32 %v550, %v1039
        %v1041 = vpop.f32.mrf.mxu0
        %v1042 = vadd.f32 %v552, %v1041
        %1043 = vmatmul.bf16.gmra.mxu0 %v979
        %v1044 = vpop.f32.mrf.mxu0
        %v1045 = vadd.f32 %v555, %v1044
        %v1046 = vpop.f32.mrf.mxu0
        %v1047 = vadd.f32 %v557, %v1046
        %1048 = vdwg.mxu0
        %1049 = vmatpush.bf16.msra.mxu0 0
        %1050 = vmatpush.bf16.msra.mxu0 0
        %1051 = vmatpush.bf16.msra.mxu0 0
        %1052 = vmatpush.bf16.msra.mxu0 0
        %1053 = vmatpush.bf16.msra.mxu0 0
        %1054 = vmatpush.bf16.msra.mxu0 0
        %1055 = vmatpush.bf16.msra.mxu0 %v986
        %1056 = vmatpush.bf16.msra.mxu0 %v927
        %1057 = vmatmul.bf16.gmra.mxu0 %v976
        %v1058 = vpop.f32.mrf.mxu0
        %v1059 = vadd.f32 %v569, %v1058
        %v1060 = vpop.f32.mrf.mxu0
        %v1061 = vadd.f32 %v571, %v1060
        %1062 = vmatmul.bf16.gmra.mxu0 %v979
        %v1063 = vpop.f32.mrf.mxu0
        %v1064 = vadd.f32 %v574, %v1063
        %v1065 = vpop.f32.mrf.mxu0
        %v1066 = vadd.f32 %v576, %v1065
        %1067 = vdwg.mxu0
        %1068 = vmatpush.bf16.msra.mxu0 0
        %1069 = vmatpush.bf16.msra.mxu0 0
        %1070 = vmatpush.bf16.msra.mxu0 0
        %1071 = vmatpush.bf16.msra.mxu0 0
        %1072 = vmatpush.bf16.msra.mxu0 0
        %1073 = vmatpush.bf16.msra.mxu0 0
        %1074 = vmatpush.bf16.msra.mxu0 %v989
        %1075 = vmatpush.bf16.msra.mxu0 %v928
        %1076 = vmatmul.bf16.gmra.mxu0 %v976
        %v1077 = vpop.f32.mrf.mxu0
        %v1078 = vadd.f32 %v588, %v1077
        %v1079 = vpop.f32.mrf.mxu0
        %v1080 = vadd.f32 %v590, %v1079
        %1081 = vmatmul.bf16.gmra.mxu0 %v979
        %v1082 = vpop.f32.mrf.mxu0
        %v1083 = vadd.f32 %v593, %v1082
        %v1084 = vpop.f32.mrf.mxu0
        %v1085 = vadd.f32 %v595, %v1084
        %1086 = vdwg.mxu0
        %1087 = vmatpush.bf16.msra.mxu0 0
        %1088 = vmatpush.bf16.msra.mxu0 0
        %1089 = vmatpush.bf16.msra.mxu0 0
        %1090 = vmatpush.bf16.msra.mxu0 0
        %1091 = vmatpush.bf16.msra.mxu0 0
        %1092 = vmatpush.bf16.msra.mxu0 0
        %1093 = vmatpush.bf16.msra.mxu0 %v992
        %1094 = vmatpush.bf16.msra.mxu0 %v929
        %1095 = vmatmul.bf16.gmra.mxu0 %v976
        %v1096 = vpop.f32.mrf.mxu0
        %v1097 = vadd.f32 %v607, %v1096
        %v1098 = vpop.f32.mrf.mxu0
        %v1099 = vadd.f32 %v609, %v1098
        %1100 = vmatmul.bf16.gmra.mxu0 %v979
        %v1101 = vpop.f32.mrf.mxu0
        %v1102 = vadd.f32 %v612, %v1101
        %v1103 = vpop.f32.mrf.mxu0
        %v1104 = vadd.f32 %v614, %v1103
        %1105 = vdwg.mxu0
        %1106 = vmatpush.bf16.msra.mxu0 0
        %1107 = vmatpush.bf16.msra.mxu0 0
        %1108 = vmatpush.bf16.msra.mxu0 0
        %1109 = vmatpush.bf16.msra.mxu0 0
        %1110 = vmatpush.bf16.msra.mxu0 0
        %1111 = vmatpush.bf16.msra.mxu0 0
        %1112 = vmatpush.bf16.msra.mxu0 %v995
        %1113 = vmatpush.bf16.msra.mxu0 %v930
        %1114 = vmatmul.bf16.gmra.mxu0 %v976
        %v1115 = vpop.f32.mrf.mxu0
        %v1116 = vadd.f32 %v626, %v1115
        %v1117 = vpop.f32.mrf.mxu0
        %v1118 = vadd.f32 %v628, %v1117
        %1119 = vmatmul.bf16.gmra.mxu0 %v979
        %v1120 = vpop.f32.mrf.mxu0
        %v1121 = vadd.f32 %v631, %v1120
        %v1122 = vpop.f32.mrf.mxu0
        %v1123 = vadd.f32 %v633, %v1122
        %1124 = vdwg.mxu0
        %1125 = vmatpush.bf16.msra.mxu0 0
        %1126 = vmatpush.bf16.msra.mxu0 0
        %1127 = vmatpush.bf16.msra.mxu0 0
        %1128 = vmatpush.bf16.msra.mxu0 0
        %1129 = vmatpush.bf16.msra.mxu0 0
        %1130 = vmatpush.bf16.msra.mxu0 0
        %1131 = vmatpush.bf16.msra.mxu0 %v998
        %1132 = vmatpush.bf16.msra.mxu0 %v931
        %1133 = vmatmul.bf16.gmra.mxu0 %v976
        %v1134 = vpop.f32.mrf.mxu0
        %v1135 = vadd.f32 %v645, %v1134
        %v1136 = vpop.f32.mrf.mxu0
        %v1137 = vadd.f32 %v647, %v1136
        %1138 = vmatmul.bf16.gmra.mxu0 %v979
        %v1139 = vpop.f32.mrf.mxu0
        %v1140 = vadd.f32 %v650, %v1139
        %v1141 = vpop.f32.mrf.mxu0
        %v1142 = vadd.f32 %v652, %v1141
        %1143 = vdwg.mxu0
        %1144 = vmatpush.bf16.msra.mxu0 0
        %1145 = vmatpush.bf16.msra.mxu0 0
        %1146 = vmatpush.bf16.msra.mxu0 0
        %1147 = vmatpush.bf16.msra.mxu0 0
        %1148 = vmatpush.bf16.msra.mxu0 0
        %1149 = vmatpush.bf16.msra.mxu0 0
        %1150 = vmatpush.bf16.msra.mxu0 %v1001
        %1151 = vmatpush.bf16.msra.mxu0 %v932
        %1152 = vmatmul.bf16.gmra.mxu0 %v976
        %v1153 = vpop.f32.mrf.mxu0
        %v1154 = vadd.f32 %v664, %v1153
        %v1155 = vpop.f32.mrf.mxu0
        %v1156 = vadd.f32 %v666, %v1155
        %1157 = vmatmul.bf16.gmra.mxu0 %v979
        %v1158 = vpop.f32.mrf.mxu0
        %v1159 = vadd.f32 %v669, %v1158
        %v1160 = vpop.f32.mrf.mxu0
        %v1161 = vadd.f32 %v671, %v1160
        %1162 = vdwg.mxu0
        %1163 = vmatpush.bf16.msra.mxu0 0
        %1164 = vmatpush.bf16.msra.mxu0 0
        %1165 = vmatpush.bf16.msra.mxu0 0
        %1166 = vmatpush.bf16.msra.mxu0 0
        %1167 = vmatpush.bf16.msra.mxu0 0
        %1168 = vmatpush.bf16.msra.mxu0 0
        %1169 = vmatpush.bf16.msra.mxu0 %v1004
        %1170 = vmatpush.bf16.msra.mxu0 %v933
        %1171 = vmatmul.bf16.gmra.mxu0 %v976
        %v1172 = vpop.f32.mrf.mxu0
        %v1173 = vadd.f32 %v683, %v1172
        %v1174 = vpop.f32.mrf.mxu0
        %v1175 = vadd.f32 %v685, %v1174
        %1176 = vmatmul.bf16.gmra.mxu0 %v979
        %v1177 = vpop.f32.mrf.mxu0
        %v1178 = vadd.f32 %v688, %v1177
        %v1179 = vpop.f32.mrf.mxu0
        %v1180 = vadd.f32 %v690, %v1179
        %1181 = vdwg.mxu0
        %1182 = vmatpush.bf16.msra.mxu0 0
        %1183 = vmatpush.bf16.msra.mxu0 0
        %1184 = vmatpush.bf16.msra.mxu0 0
        %1185 = vmatpush.bf16.msra.mxu0 0
        %1186 = vmatpush.bf16.msra.mxu0 0
        %1187 = vmatpush.bf16.msra.mxu0 0
        %1188 = vmatpush.bf16.msra.mxu0 %v1007
        %1189 = vmatpush.bf16.msra.mxu0 %v934
        %1190 = vmatmul.bf16.gmra.mxu0 %v976
        %v1191 = vpop.f32.mrf.mxu0
        %v1192 = vadd.f32 %v702, %v1191
        %v1193 = vpop.f32.mrf.mxu0
        %v1194 = vadd.f32 %v704, %v1193
        %1195 = vmatmul.bf16.gmra.mxu0 %v979
        %v1196 = vpop.f32.mrf.mxu0
        %v1197 = vadd.f32 %v707, %v1196
        %v1198 = vpop.f32.mrf.mxu0
        %v1199 = vadd.f32 %v709, %v1198
        %1200 = vdwg.mxu0
        %1201 = vmatpush.bf16.msra.mxu0 0
        %1202 = vmatpush.bf16.msra.mxu0 0
        %1203 = vmatpush.bf16.msra.mxu0 0
        %1204 = vmatpush.bf16.msra.mxu0 0
        %1205 = vmatpush.bf16.msra.mxu0 0
        %1206 = vmatpush.bf16.msra.mxu0 0
        %1207 = vmatpush.bf16.msra.mxu0 %v1010
        %1208 = vmatpush.bf16.msra.mxu0 %v935
        %1209 = vmatmul.bf16.gmra.mxu0 %v976
        %v1210 = vpop.f32.mrf.mxu0
        %v1211 = vadd.f32 %v721, %v1210
        %v1212 = vpop.f32.mrf.mxu0
        %v1213 = vadd.f32 %v723, %v1212
        %1214 = vmatmul.bf16.gmra.mxu0 %v979
        %v1215 = vpop.f32.mrf.mxu0
        %v1216 = vadd.f32 %v726, %v1215
        %v1217 = vpop.f32.mrf.mxu0
        %v1218 = vadd.f32 %v728, %v1217
        %1219 = vdwg.mxu0
        %1220 = vmatpush.bf16.msra.mxu0 0
        %1221 = vmatpush.bf16.msra.mxu0 0
        %1222 = vmatpush.bf16.msra.mxu0 0
        %1223 = vmatpush.bf16.msra.mxu0 0
        %1224 = vmatpush.bf16.msra.mxu0 0
        %1225 = vmatpush.bf16.msra.mxu0 0
        %1226 = vmatpush.bf16.msra.mxu0 %v1013
        %1227 = vmatpush.bf16.msra.mxu0 %v936
        %1228 = vmatmul.bf16.gmra.mxu0 %v976
        %v1229 = vpop.f32.mrf.mxu0
        %v1230 = vadd.f32 %v740, %v1229
        %v1231 = vpop.f32.mrf.mxu0
        %v1232 = vadd.f32 %v742, %v1231
        %1233 = vmatmul.bf16.gmra.mxu0 %v979
        %v1234 = vpop.f32.mrf.mxu0
        %v1235 = vadd.f32 %v745, %v1234
        %v1236 = vpop.f32.mrf.mxu0
        %v1237 = vadd.f32 %v747, %v1236
        %1238 = vdwg.mxu0
        %1239 = vmatpush.bf16.msra.mxu0 0
        %1240 = vmatpush.bf16.msra.mxu0 0
        %1241 = vmatpush.bf16.msra.mxu0 0
        %1242 = vmatpush.bf16.msra.mxu0 0
        %1243 = vmatpush.bf16.msra.mxu0 0
        %1244 = vmatpush.bf16.msra.mxu0 0
        %1245 = vmatpush.bf16.msra.mxu0 %v1016
        %1246 = vmatpush.bf16.msra.mxu0 %v937
        %1247 = vmatmul.bf16.gmra.mxu0 %v976
        %v1248 = vpop.f32.mrf.mxu0
        %v1249 = vadd.f32 %v759, %v1248
        %v1250 = vpop.f32.mrf.mxu0
        %v1251 = vadd.f32 %v761, %v1250
        %1252 = vmatmul.bf16.gmra.mxu0 %v979
        %v1253 = vpop.f32.mrf.mxu0
        %v1254 = vadd.f32 %v764, %v1253
        %v1255 = vpop.f32.mrf.mxu0
        %v1256 = vadd.f32 %v766, %v1255
        %1257 = vdwg.mxu0
        %1258 = vmatpush.bf16.msra.mxu0 0
        %1259 = vmatpush.bf16.msra.mxu0 0
        %1260 = vmatpush.bf16.msra.mxu0 0
        %1261 = vmatpush.bf16.msra.mxu0 0
        %1262 = vmatpush.bf16.msra.mxu0 0
        %1263 = vmatpush.bf16.msra.mxu0 0
        %1264 = vmatpush.bf16.msra.mxu0 %v1019
        %1265 = vmatpush.bf16.msra.mxu0 %v938
        %1266 = vmatmul.bf16.gmra.mxu0 %v976
        %v1267 = vpop.f32.mrf.mxu0
        %v1268 = vadd.f32 %v778, %v1267
        %v1269 = vpop.f32.mrf.mxu0
        %v1270 = vadd.f32 %v780, %v1269
        %1271 = vmatmul.bf16.gmra.mxu0 %v979
        %v1272 = vpop.f32.mrf.mxu0
        %v1273 = vadd.f32 %v783, %v1272
        %v1274 = vpop.f32.mrf.mxu0
        %v1275 = vadd.f32 %v785, %v1274
        %1276 = vdwg.mxu0
        %1277 = vmatpush.bf16.msra.mxu0 0
        %1278 = vmatpush.bf16.msra.mxu0 0
        %1279 = vmatpush.bf16.msra.mxu0 0
        %1280 = vmatpush.bf16.msra.mxu0 0
        %1281 = vmatpush.bf16.msra.mxu0 0
        %1282 = vmatpush.bf16.msra.mxu0 0
        %1283 = vmatpush.bf16.msra.mxu0 %v1022
        %1284 = vmatpush.bf16.msra.mxu0 %v939
        %1285 = vmatmul.bf16.gmra.mxu0 %v976
        %v1286 = vpop.f32.mrf.mxu0
        %v1287 = vadd.f32 %v797, %v1286
        %v1288 = vpop.f32.mrf.mxu0
        %v1289 = vadd.f32 %v799, %v1288
        %1290 = vmatmul.bf16.gmra.mxu0 %v979
        %v1291 = vpop.f32.mrf.mxu0
        %v1292 = vadd.f32 %v802, %v1291
        %v1293 = vpop.f32.mrf.mxu0
        %v1294 = vadd.f32 %v804, %v1293
        %1295 = vdwg.mxu0
        %1296 = vmatpush.bf16.msra.mxu0 0
        %1297 = vmatpush.bf16.msra.mxu0 0
        %1298 = vmatpush.bf16.msra.mxu0 0
        %1299 = vmatpush.bf16.msra.mxu0 0
        %1300 = vmatpush.bf16.msra.mxu0 0
        %1301 = vmatpush.bf16.msra.mxu0 0
        %1302 = vmatpush.bf16.msra.mxu0 %v1025
        %1303 = vmatpush.bf16.msra.mxu0 %v940
        %1304 = vmatmul.bf16.gmra.mxu0 %v976
        %v1305 = vpop.f32.mrf.mxu0
        %v1306 = vadd.f32 %v816, %v1305
        %v1307 = vpop.f32.mrf.mxu0
        %v1308 = vadd.f32 %v818, %v1307
        %1309 = vmatmul.bf16.gmra.mxu0 %v979
        %v1310 = vpop.f32.mrf.mxu0
        %v1311 = vadd.f32 %v821, %v1310
        %v1312 = vpop.f32.mrf.mxu0
        %v1313 = vadd.f32 %v823, %v1312
        %1314 = vdwg.mxu0
        %1315 = vmatpush.bf16.msra.mxu0 0
        %1316 = vmatpush.bf16.msra.mxu0 0
        %1317 = vmatpush.bf16.msra.mxu0 0
        %1318 = vmatpush.bf16.msra.mxu0 0
        %1319 = vmatpush.bf16.msra.mxu0 0
        %1320 = vmatpush.bf16.msra.mxu0 0
        %1321 = vmatpush.bf16.msra.mxu0 %v1028
        %1322 = vmatpush.bf16.msra.mxu0 %v941
        %1323 = vmatmul.bf16.gmra.mxu0 %v976
        %v1324 = vpop.f32.mrf.mxu0
        %v1325 = vadd.f32 %v835, %v1324
        %v1326 = vpop.f32.mrf.mxu0
        %v1327 = vadd.f32 %v837, %v1326
        %1328 = vmatmul.bf16.gmra.mxu0 %v979
        %v1329 = vpop.f32.mrf.mxu0
        %v1330 = vadd.f32 %v840, %v1329
        %v1331 = vpop.f32.mrf.mxu0
        %v1332 = vadd.f32 %v842, %v1331
        %1333 = vdwg.mxu0
        %v1334 = vld [vmem:[%s2] sm:$0xff]
        %v1335 = vld [vmem:[%s2 + $0x8] sm:$0xff]
        %v1336 = vld [vmem:[%s2 + $0x10] sm:$0xff]
        %v1337 = vld [vmem:[%s2 + $0x18] sm:$0xff]
        %1339 = vset.pattern.permute.xlu0 0
        %1340 = vperm.xlu0 %1339, %v1334
        %v1341 = vpop.permute.xlu0 %1340
        %1344 = vset.pattern.permute.xlu0 0
        %1345 = vperm.xlu0 %1344, %v1335
        %v1346 = vpop.permute.xlu0 %1345
        %1349 = vset.pattern.permute.xlu0 0
        %1350 = vperm.xlu0 %1349, %v1336
        %v1351 = vpop.permute.xlu0 %1350
        %1354 = vset.pattern.permute.xlu0 0
        %1355 = vperm.xlu0 %1354, %v1337
        %v1356 = vpop.permute.xlu0 %1355
        %v1358 = vadd.f32 %v1040, %v1341
        %v1359 = vadd.f32 %v1059, %v1341
        %v1360 = vadd.f32 %v1078, %v1341
        %v1361 = vadd.f32 %v1097, %v1341
        %v1362 = vadd.f32 %v1116, %v1341
        %v1363 = vadd.f32 %v1135, %v1341
        %v1364 = vadd.f32 %v1154, %v1341
        %v1365 = vadd.f32 %v1173, %v1341
        %v1366 = vadd.f32 %v1192, %v1341
        %v1367 = vadd.f32 %v1211, %v1341
        %v1368 = vadd.f32 %v1230, %v1341
        %v1369 = vadd.f32 %v1249, %v1341
        %v1370 = vadd.f32 %v1268, %v1341
        %v1371 = vadd.f32 %v1287, %v1341
        %v1372 = vadd.f32 %v1306, %v1341
        %v1373 = vadd.f32 %v1325, %v1341
        %v1374 = vadd.f32 %v1042, %v1346
        %v1375 = vadd.f32 %v1061, %v1346
        %v1376 = vadd.f32 %v1080, %v1346
        %v1377 = vadd.f32 %v1099, %v1346
        %v1378 = vadd.f32 %v1118, %v1346
        %v1379 = vadd.f32 %v1137, %v1346
        %v1380 = vadd.f32 %v1156, %v1346
        %v1381 = vadd.f32 %v1175, %v1346
        %v1382 = vadd.f32 %v1194, %v1346
        %v1383 = vadd.f32 %v1213, %v1346
        %v1384 = vadd.f32 %v1232, %v1346
        %v1385 = vadd.f32 %v1251, %v1346
        %v1386 = vadd.f32 %v1270, %v1346
        %v1387 = vadd.f32 %v1289, %v1346
        %v1388 = vadd.f32 %v1308, %v1346
        %v1389 = vadd.f32 %v1327, %v1346
        %v1390 = vadd.f32 %v1045, %v1351
        %v1391 = vadd.f32 %v1064, %v1351
        %v1392 = vadd.f32 %v1083, %v1351
        %v1393 = vadd.f32 %v1102, %v1351
        %v1394 = vadd.f32 %v1121, %v1351
        %v1395 = vadd.f32 %v1140, %v1351
        %v1396 = vadd.f32 %v1159, %v1351
        %v1397 = vadd.f32 %v1178, %v1351
        %v1398 = vadd.f32 %v1197, %v1351
        %v1399 = vadd.f32 %v1216, %v1351
        %v1400 = vadd.f32 %v1235, %v1351
        %v1401 = vadd.f32 %v1254, %v1351
        %v1402 = vadd.f32 %v1273, %v1351
        %v1403 = vadd.f32 %v1292, %v1351
        %v1404 = vadd.f32 %v1311, %v1351
        %v1405 = vadd.f32 %v1330, %v1351
        %v1406 = vadd.f32 %v1047, %v1356
        %v1407 = vadd.f32 %v1066, %v1356
        %v1408 = vadd.f32 %v1085, %v1356
        %v1409 = vadd.f32 %v1104, %v1356
        %v1410 = vadd.f32 %v1123, %v1356
        %v1411 = vadd.f32 %v1142, %v1356
        %v1412 = vadd.f32 %v1161, %v1356
        %v1413 = vadd.f32 %v1180, %v1356
        %v1414 = vadd.f32 %v1199, %v1356
        %v1415 = vadd.f32 %v1218, %v1356
        %v1416 = vadd.f32 %v1237, %v1356
        %v1417 = vadd.f32 %v1256, %v1356
        %v1418 = vadd.f32 %v1275, %v1356
        %v1419 = vadd.f32 %v1294, %v1356
        %v1420 = vadd.f32 %v1313, %v1356
        %v1421 = vadd.f32 %v1332, %v1356
        %v1422 = vtanh.pop %v1358
        %v1423 = vtanh.pop %v1359
        %v1424 = vtanh.pop %v1360
        %v1425 = vtanh.pop %v1361
        %v1426 = vtanh.pop %v1362
        %v1427 = vtanh.pop %v1363
        %v1428 = vtanh.pop %v1364
        %v1429 = vtanh.pop %v1365
        %v1430 = vtanh.pop %v1366
        %v1431 = vtanh.pop %v1367
        %v1432 = vtanh.pop %v1368
        %v1433 = vtanh.pop %v1369
        %v1434 = vtanh.pop %v1370
        %v1435 = vtanh.pop %v1371
        %v1436 = vtanh.pop %v1372
        %v1437 = vtanh.pop %v1373
        %v1438 = vtanh.pop %v1374
        %v1439 = vtanh.pop %v1375
        %v1440 = vtanh.pop %v1376
        %v1441 = vtanh.pop %v1377
        %v1442 = vtanh.pop %v1378
        %v1443 = vtanh.pop %v1379
        %v1444 = vtanh.pop %v1380
        %v1445 = vtanh.pop %v1381
        %v1446 = vtanh.pop %v1382
        %v1447 = vtanh.pop %v1383
        %v1448 = vtanh.pop %v1384
        %v1449 = vtanh.pop %v1385
        %v1450 = vtanh.pop %v1386
        %v1451 = vtanh.pop %v1387
        %v1452 = vtanh.pop %v1388
        %v1453 = vtanh.pop %v1389
        %v1454 = vtanh.pop %v1390
        %v1455 = vtanh.pop %v1391
        %v1456 = vtanh.pop %v1392
        %v1457 = vtanh.pop %v1393
        %v1458 = vtanh.pop %v1394
        %v1459 = vtanh.pop %v1395
        %v1460 = vtanh.pop %v1396
        %v1461 = vtanh.pop %v1397
        %v1462 = vtanh.pop %v1398
        %v1463 = vtanh.pop %v1399
        %v1464 = vtanh.pop %v1400
        %v1465 = vtanh.pop %v1401
        %v1466 = vtanh.pop %v1402
        %v1467 = vtanh.pop %v1403
        %v1468 = vtanh.pop %v1404
        %v1469 = vtanh.pop %v1405
        %v1470 = vtanh.pop %v1406
        %v1471 = vtanh.pop %v1407
        %v1472 = vtanh.pop %v1408
        %v1473 = vtanh.pop %v1409
        %v1474 = vtanh.pop %v1410
        %v1475 = vtanh.pop %v1411
        %v1476 = vtanh.pop %v1412
        %v1477 = vtanh.pop %v1413
        %v1478 = vtanh.pop %v1414
        %v1479 = vtanh.pop %v1415
        %v1480 = vtanh.pop %v1416
        %v1481 = vtanh.pop %v1417
        %v1482 = vtanh.pop %v1418
        %v1483 = vtanh.pop %v1419
        %v1484 = vtanh.pop %v1420
        %v1485 = vtanh.pop %v1421
        %1486 = vst [vmem:[%s354] sm:$0xff] %v1422
        %1487 = vst [vmem:[%s354 + $0x8] sm:$0xff] %v1423
        %1488 = vst [vmem:[%s354 + $0x10] sm:$0xff] %v1424
        %1489 = vst [vmem:[%s354 + $0x18] sm:$0xff] %v1425
        %1490 = vst [vmem:[%s354 + $0x20] sm:$0xff] %v1426
        %1491 = vst [vmem:[%s354 + $0x28] sm:$0xff] %v1427
        %1492 = vst [vmem:[%s354 + $0x30] sm:$0xff] %v1428
        %1493 = vst [vmem:[%s354 + $0x38] sm:$0xff] %v1429
        %1494 = vst [vmem:[%s354 + $0x40] sm:$0xff] %v1430
        %1495 = vst [vmem:[%s354 + $0x48] sm:$0xff] %v1431
        %1496 = vst [vmem:[%s354 + $0x50] sm:$0xff] %v1432
        %1497 = vst [vmem:[%s354 + $0x58] sm:$0xff] %v1433
        %1498 = vst [vmem:[%s354 + $0x60] sm:$0xff] %v1434
        %1499 = vst [vmem:[%s354 + $0x68] sm:$0xff] %v1435
        %1500 = vst [vmem:[%s354 + $0x70] sm:$0xff] %v1436
        %1501 = vst [vmem:[%s354 + $0x78] sm:$0xff] %v1437
        %1502 = vst [vmem:[%s354 + $0x80] sm:$0xff] %v1438
        %1503 = vst [vmem:[%s354 + $0x88] sm:$0xff] %v1439
        %1504 = vst [vmem:[%s354 + $0x90] sm:$0xff] %v1440
        %1505 = vst [vmem:[%s354 + $0x98] sm:$0xff] %v1441
        %1506 = vst [vmem:[%s354 + $0xa0] sm:$0xff] %v1442
        %1507 = vst [vmem:[%s354 + $0xa8] sm:$0xff] %v1443
        %1508 = vst [vmem:[%s354 + $0xb0] sm:$0xff] %v1444
        %1509 = vst [vmem:[%s354 + $0xb8] sm:$0xff] %v1445
        %1510 = vst [vmem:[%s354 + $0xc0] sm:$0xff] %v1446
        %1511 = vst [vmem:[%s354 + $0xc8] sm:$0xff] %v1447
        %1512 = vst [vmem:[%s354 + $0xd0] sm:$0xff] %v1448
        %1513 = vst [vmem:[%s354 + $0xd8] sm:$0xff] %v1449
        %1514 = vst [vmem:[%s354 + $0xe0] sm:$0xff] %v1450
        %1515 = vst [vmem:[%s354 + $0xe8] sm:$0xff] %v1451
        %1516 = vst [vmem:[%s354 + $0xf0] sm:$0xff] %v1452
        %1517 = vst [vmem:[%s354 + $0xf8] sm:$0xff] %v1453
        %1518 = vst [vmem:[%s354 + $0x100] sm:$0xff] %v1454
        %1519 = vst [vmem:[%s354 + $0x108] sm:$0xff] %v1455
        %1520 = vst [vmem:[%s354 + $0x110] sm:$0xff] %v1456
        %1521 = vst [vmem:[%s354 + $0x118] sm:$0xff] %v1457
        %1522 = vst [vmem:[%s354 + $0x120] sm:$0xff] %v1458
        %1523 = vst [vmem:[%s354 + $0x128] sm:$0xff] %v1459
        %1524 = vst [vmem:[%s354 + $0x130] sm:$0xff] %v1460
        %1525 = vst [vmem:[%s354 + $0x138] sm:$0xff] %v1461
        %1526 = vst [vmem:[%s354 + $0x140] sm:$0xff] %v1462
        %1527 = vst [vmem:[%s354 + $0x148] sm:$0xff] %v1463
        %1528 = vst [vmem:[%s354 + $0x150] sm:$0xff] %v1464
        %1529 = vst [vmem:[%s354 + $0x158] sm:$0xff] %v1465
        %1530 = vst [vmem:[%s354 + $0x160] sm:$0xff] %v1466
        %1531 = vst [vmem:[%s354 + $0x168] sm:$0xff] %v1467
        %1532 = vst [vmem:[%s354 + $0x170] sm:$0xff] %v1468
        %1533 = vst [vmem:[%s354 + $0x178] sm:$0xff] %v1469
        %1534 = vst [vmem:[%s354 + $0x180] sm:$0xff] %v1470
        %1535 = vst [vmem:[%s354 + $0x188] sm:$0xff] %v1471
        %1536 = vst [vmem:[%s354 + $0x190] sm:$0xff] %v1472
        %1537 = vst [vmem:[%s354 + $0x198] sm:$0xff] %v1473
        %1538 = vst [vmem:[%s354 + $0x1a0] sm:$0xff] %v1474
        %1539 = vst [vmem:[%s354 + $0x1a8] sm:$0xff] %v1475
        %1540 = vst [vmem:[%s354 + $0x1b0] sm:$0xff] %v1476
        %1541 = vst [vmem:[%s354 + $0x1b8] sm:$0xff] %v1477
        %1542 = vst [vmem:[%s354 + $0x1c0] sm:$0xff] %v1478
        %1543 = vst [vmem:[%s354 + $0x1c8] sm:$0xff] %v1479
        %1544 = vst [vmem:[%s354 + $0x1d0] sm:$0xff] %v1480
        %1545 = vst [vmem:[%s354 + $0x1d8] sm:$0xff] %v1481
        %1546 = vst [vmem:[%s354 + $0x1e0] sm:$0xff] %v1482
        %1547 = vst [vmem:[%s354 + $0x1e8] sm:$0xff] %v1483
        %1548 = vst [vmem:[%s354 + $0x1f0] sm:$0xff] %v1484
        %1549 = vst [vmem:[%s354 + $0x1f8] sm:$0xff] %v1485
        %s1550 = sand.u32 %s139, 1
        %s1551 = sand.u32 %s139, 1
        %s1552 = smul.addr %s1551, 512
        %s1553 = scalar_lea.vmem [#allocation4], %s1552
        // Predicated region
        $region87: #{conv2d_tanh.1} parent=77 // pred_check
          %p1554 = pneg %p149
        $region88: #{conv2d_tanh.1} parent=77 // pred_check_branch
          %1556 = sbr.rel (%p1554) target = $region90
        $region89: #{conv2d_tanh.1} parent=77 // pred_region
          %s1557 = smul.u32 16, %s16
          %s1558 = smul.addr %s1557, 8
          %s1559 = scalar_lea.vmem %s5, %s1558
          // Predicated region
          $region91: #{conv2d_tanh.1} parent=89 // pred_check
            _
          $region92: #{conv2d_tanh.1} parent=89 // pred_check_branch
            %1561 = sbr.rel (0) target = $region94
          $region93: #{conv2d_tanh.1} parent=89 // pred_region
            // Predicated region
            $region95: #{conv2d_tanh.1} parent=93 // pred_check
              _
            $region96: #{conv2d_tanh.1} parent=93 // pred_check_branch
              %1563 = sbr.rel (0) target = $region98
            $region97: #{conv2d_tanh.1} parent=93 // pred_region
              loop: start=0, step=1, limit=1
              $region99: #{conv2d_tanh.1} parent=97 // loop_pre_header
                _
              $region100: #{conv2d_tanh.1} parent=97 // loop_header
                %s1565 = sphi 0, %s1569
                %p1566 = scmp.ge.s32.totalorder %s1565, 1
                %s1570 = sphi %s1553, %s1553
                %s1571 = sphi %s1559, %s1559
              $region101: #{conv2d_tanh.1} parent=97 // loop_header_branch
                %1568 = sbr.rel (%p1566) target = $region105
              $region102: #{conv2d_tanh.1} parent=97 // loop_body
                %v1572 = vld [vmem:[%s1570] sm:$0xff]
                %1573 = vst [vmem:[%s1571] sm:$0xff] %v1572
                %v1574 = vld [vmem:[%s1570 + $0x8] sm:$0xff]
                %1575 = vst [vmem:[%s1571 + $0x8] sm:$0xff] %v1574
                %v1576 = vld [vmem:[%s1570 + $0x10] sm:$0xff]
                %1577 = vst [vmem:[%s1571 + $0x10] sm:$0xff] %v1576
                %v1578 = vld [vmem:[%s1570 + $0x18] sm:$0xff]
                %1579 = vst [vmem:[%s1571 + $0x18] sm:$0xff] %v1578
                %v1580 = vld [vmem:[%s1570 + $0x20] sm:$0xff]
                %1581 = vst [vmem:[%s1571 + $0x20] sm:$0xff] %v1580
                %v1582 = vld [vmem:[%s1570 + $0x28] sm:$0xff]
                %1583 = vst [vmem:[%s1571 + $0x28] sm:$0xff] %v1582
                %v1584 = vld [vmem:[%s1570 + $0x30] sm:$0xff]
                %1585 = vst [vmem:[%s1571 + $0x30] sm:$0xff] %v1584
                %v1586 = vld [vmem:[%s1570 + $0x38] sm:$0xff]
                %1587 = vst [vmem:[%s1571 + $0x38] sm:$0xff] %v1586
                %v1588 = vld [vmem:[%s1570 + $0x40] sm:$0xff]
                %1589 = vst [vmem:[%s1571 + $0x40] sm:$0xff] %v1588
                %v1590 = vld [vmem:[%s1570 + $0x48] sm:$0xff]
                %1591 = vst [vmem:[%s1571 + $0x48] sm:$0xff] %v1590
                %v1592 = vld [vmem:[%s1570 + $0x50] sm:$0xff]
                %1593 = vst [vmem:[%s1571 + $0x50] sm:$0xff] %v1592
                %v1594 = vld [vmem:[%s1570 + $0x58] sm:$0xff]
                %1595 = vst [vmem:[%s1571 + $0x58] sm:$0xff] %v1594
                %v1596 = vld [vmem:[%s1570 + $0x60] sm:$0xff]
                %1597 = vst [vmem:[%s1571 + $0x60] sm:$0xff] %v1596
                %v1598 = vld [vmem:[%s1570 + $0x68] sm:$0xff]
                %1599 = vst [vmem:[%s1571 + $0x68] sm:$0xff] %v1598
                %v1600 = vld [vmem:[%s1570 + $0x70] sm:$0xff]
                %1601 = vst [vmem:[%s1571 + $0x70] sm:$0xff] %v1600
                %v1602 = vld [vmem:[%s1570 + $0x78] sm:$0xff]
                %1603 = vst [vmem:[%s1571 + $0x78] sm:$0xff] %v1602
                %v1604 = vld [vmem:[%s1570 + $0x80] sm:$0xff]
                %1605 = vst [vmem:[%s1571 + $0x100] sm:$0xff] %v1604
                %v1606 = vld [vmem:[%s1570 + $0x88] sm:$0xff]
                %1607 = vst [vmem:[%s1571 + $0x108] sm:$0xff] %v1606
                %v1608 = vld [vmem:[%s1570 + $0x90] sm:$0xff]
                %1609 = vst [vmem:[%s1571 + $0x110] sm:$0xff] %v1608
                %v1610 = vld [vmem:[%s1570 + $0x98] sm:$0xff]
                %1611 = vst [vmem:[%s1571 + $0x118] sm:$0xff] %v1610
                %v1612 = vld [vmem:[%s1570 + $0xa0] sm:$0xff]
                %1613 = vst [vmem:[%s1571 + $0x120] sm:$0xff] %v1612
                %v1614 = vld [vmem:[%s1570 + $0xa8] sm:$0xff]
                %1615 = vst [vmem:[%s1571 + $0x128] sm:$0xff] %v1614
                %v1616 = vld [vmem:[%s1570 + $0xb0] sm:$0xff]
                %1617 = vst [vmem:[%s1571 + $0x130] sm:$0xff] %v1616
                %v1618 = vld [vmem:[%s1570 + $0xb8] sm:$0xff]
                %1619 = vst [vmem:[%s1571 + $0x138] sm:$0xff] %v1618
                %v1620 = vld [vmem:[%s1570 + $0xc0] sm:$0xff]
                %1621 = vst [vmem:[%s1571 + $0x140] sm:$0xff] %v1620
                %v1622 = vld [vmem:[%s1570 + $0xc8] sm:$0xff]
                %1623 = vst [vmem:[%s1571 + $0x148] sm:$0xff] %v1622
                %v1624 = vld [vmem:[%s1570 + $0xd0] sm:$0xff]
                %1625 = vst [vmem:[%s1571 + $0x150] sm:$0xff] %v1624
                %v1626 = vld [vmem:[%s1570 + $0xd8] sm:$0xff]
                %1627 = vst [vmem:[%s1571 + $0x158] sm:$0xff] %v1626
                %v1628 = vld [vmem:[%s1570 + $0xe0] sm:$0xff]
                %1629 = vst [vmem:[%s1571 + $0x160] sm:$0xff] %v1628
                %v1630 = vld [vmem:[%s1570 + $0xe8] sm:$0xff]
                %1631 = vst [vmem:[%s1571 + $0x168] sm:$0xff] %v1630
                %v1632 = vld [vmem:[%s1570 + $0xf0] sm:$0xff]
                %1633 = vst [vmem:[%s1571 + $0x170] sm:$0xff] %v1632
                %v1634 = vld [vmem:[%s1570 + $0xf8] sm:$0xff]
                %1635 = vst [vmem:[%s1571 + $0x178] sm:$0xff] %v1634
                %v1636 = vld [vmem:[%s1570 + $0x100] sm:$0xff]
                %1637 = vst [vmem:[%s1571 + $0x200] sm:$0xff] %v1636
                %v1638 = vld [vmem:[%s1570 + $0x108] sm:$0xff]
                %1639 = vst [vmem:[%s1571 + $0x208] sm:$0xff] %v1638
                %v1640 = vld [vmem:[%s1570 + $0x110] sm:$0xff]
                %1641 = vst [vmem:[%s1571 + $0x210] sm:$0xff] %v1640
                %v1642 = vld [vmem:[%s1570 + $0x118] sm:$0xff]
                %1643 = vst [vmem:[%s1571 + $0x218] sm:$0xff] %v1642
                %v1644 = vld [vmem:[%s1570 + $0x120] sm:$0xff]
                %1645 = vst [vmem:[%s1571 + $0x220] sm:$0xff] %v1644
                %v1646 = vld [vmem:[%s1570 + $0x128] sm:$0xff]
                %1647 = vst [vmem:[%s1571 + $0x228] sm:$0xff] %v1646
                %v1648 = vld [vmem:[%s1570 + $0x130] sm:$0xff]
                %1649 = vst [vmem:[%s1571 + $0x230] sm:$0xff] %v1648
                %v1650 = vld [vmem:[%s1570 + $0x138] sm:$0xff]
                %1651 = vst [vmem:[%s1571 + $0x238] sm:$0xff] %v1650
                %v1652 = vld [vmem:[%s1570 + $0x140] sm:$0xff]
                %1653 = vst [vmem:[%s1571 + $0x240] sm:$0xff] %v1652
                %v1654 = vld [vmem:[%s1570 + $0x148] sm:$0xff]
                %1655 = vst [vmem:[%s1571 + $0x248] sm:$0xff] %v1654
                %v1656 = vld [vmem:[%s1570 + $0x150] sm:$0xff]
                %1657 = vst [vmem:[%s1571 + $0x250] sm:$0xff] %v1656
                %v1658 = vld [vmem:[%s1570 + $0x158] sm:$0xff]
                %1659 = vst [vmem:[%s1571 + $0x258] sm:$0xff] %v1658
                %v1660 = vld [vmem:[%s1570 + $0x160] sm:$0xff]
                %1661 = vst [vmem:[%s1571 + $0x260] sm:$0xff] %v1660
                %v1662 = vld [vmem:[%s1570 + $0x168] sm:$0xff]
                %1663 = vst [vmem:[%s1571 + $0x268] sm:$0xff] %v1662
                %v1664 = vld [vmem:[%s1570 + $0x170] sm:$0xff]
                %1665 = vst [vmem:[%s1571 + $0x270] sm:$0xff] %v1664
                %v1666 = vld [vmem:[%s1570 + $0x178] sm:$0xff]
                %1667 = vst [vmem:[%s1571 + $0x278] sm:$0xff] %v1666
                %v1668 = vld [vmem:[%s1570 + $0x180] sm:$0xff]
                %1669 = vst [vmem:[%s1571 + $0x300] sm:$0xff] %v1668
                %v1670 = vld [vmem:[%s1570 + $0x188] sm:$0xff]
                %1671 = vst [vmem:[%s1571 + $0x308] sm:$0xff] %v1670
                %v1672 = vld [vmem:[%s1570 + $0x190] sm:$0xff]
                %1673 = vst [vmem:[%s1571 + $0x310] sm:$0xff] %v1672
                %v1674 = vld [vmem:[%s1570 + $0x198] sm:$0xff]
                %1675 = vst [vmem:[%s1571 + $0x318] sm:$0xff] %v1674
                %v1676 = vld [vmem:[%s1570 + $0x1a0] sm:$0xff]
                %1677 = vst [vmem:[%s1571 + $0x320] sm:$0xff] %v1676
                %v1678 = vld [vmem:[%s1570 + $0x1a8] sm:$0xff]
                %1679 = vst [vmem:[%s1571 + $0x328] sm:$0xff] %v1678
                %v1680 = vld [vmem:[%s1570 + $0x1b0] sm:$0xff]
                %1681 = vst [vmem:[%s1571 + $0x330] sm:$0xff] %v1680
                %v1682 = vld [vmem:[%s1570 + $0x1b8] sm:$0xff]
                %1683 = vst [vmem:[%s1571 + $0x338] sm:$0xff] %v1682
                %v1684 = vld [vmem:[%s1570 + $0x1c0] sm:$0xff]
                %1685 = vst [vmem:[%s1571 + $0x340] sm:$0xff] %v1684
                %v1686 = vld [vmem:[%s1570 + $0x1c8] sm:$0xff]
                %1687 = vst [vmem:[%s1571 + $0x348] sm:$0xff] %v1686
                %v1688 = vld [vmem:[%s1570 + $0x1d0] sm:$0xff]
                %1689 = vst [vmem:[%s1571 + $0x350] sm:$0xff] %v1688
                %v1690 = vld [vmem:[%s1570 + $0x1d8] sm:$0xff]
                %1691 = vst [vmem:[%s1571 + $0x358] sm:$0xff] %v1690
                %v1692 = vld [vmem:[%s1570 + $0x1e0] sm:$0xff]
                %1693 = vst [vmem:[%s1571 + $0x360] sm:$0xff] %v1692
                %v1694 = vld [vmem:[%s1570 + $0x1e8] sm:$0xff]
                %1695 = vst [vmem:[%s1571 + $0x368] sm:$0xff] %v1694
                %v1696 = vld [vmem:[%s1570 + $0x1f0] sm:$0xff]
                %1697 = vst [vmem:[%s1571 + $0x370] sm:$0xff] %v1696
                %v1698 = vld [vmem:[%s1570 + $0x1f8] sm:$0xff]
                %1699 = vst [vmem:[%s1571 + $0x378] sm:$0xff] %v1698
              $region103: #{conv2d_tanh.1} parent=97 // loop_footer
                %s1569 = sadd.s32 1, %s1565
              $region104: #{conv2d_tanh.1} parent=97 // loop_footer_branch
                %1564 = sbr.rel target = $region100
              $region105: #{conv2d_tanh.1} parent=97 // loop_exit
                _
            $region98: #{conv2d_tanh.1} parent=93 // pred_fallthru
              _
            // Predicated region
            $region106: #{conv2d_tanh.1} parent=93 // pred_check
              _
            $region107: #{conv2d_tanh.1} parent=93 // pred_check_branch
              %1701 = sbr.rel target = $region109
            $region108: #{conv2d_tanh.1} parent=93 // pred_region
              _
            $region109: #{conv2d_tanh.1} parent=93 // pred_fallthru
              _
          $region94: #{conv2d_tanh.1} parent=89 // pred_fallthru
            _
          %1702 = vnop
        $region90: #{conv2d_tanh.1} parent=77 // pred_fallthru
          _
      $region78: #{conv2d_tanh.1} parent=5 // pred_fallthru
        _
      %p1703 = scmp.le.s32.totalorder 2, %s11
      // Predicated region
      $region110: #{conv2d_tanh.1} parent=5 // pred_check
        %p1704 = pneg %p1703
      $region111: #{conv2d_tanh.1} parent=5 // pred_check_branch
        %1706 = sbr.rel (%p1704) target = $region113
      $region112: #{conv2d_tanh.1} parent=5 // pred_region
        %s1707 = ssub.s32 %s11, 2
        // Predicated region
        $region114: #{conv2d_tanh.1} parent=112 // pred_check
          %p1708 = pneg %p155
        $region115: #{conv2d_tanh.1} parent=112 // pred_check_branch
          %1710 = sbr.rel (%p1708) target = $region117
        $region116: #{conv2d_tanh.1} parent=112 // pred_region
          %s1711 = sand.u32 %s140, 1
          %s1712 = sand.u32 %s140, 1
          %s1713 = smul.addr %s1712, 512
          %s1714 = scalar_lea.vmem [#allocation4], %s1713
        $region117: #{conv2d_tanh.1} parent=112 // pred_fallthru
          _
      $region113: #{conv2d_tanh.1} parent=5 // pred_fallthru
        _
    $region6: #{conv2d_tanh.1} parent=1 // loop_footer
      %s15 = sadd.s32 1, %s11
    $region7: #{conv2d_tanh.1} parent=1 // loop_footer_branch
      %10 = sbr.rel target = $region3
    $region8: #{conv2d_tanh.1} parent=1 // loop_exit
      _

</llo_original>
